<compile_context>
chip_gen: v7x
topology: tpu7x:2x2x1
jax: 0.10.0
libtpu: 0.0.40
codegen_flags: <defaults>
</compile_context>

<pallas_src>
import functools

import jax
import jax.numpy as jnp
import numpy as np
from jax import lax
from jax.experimental import pallas as pl
from jax.experimental.pallas import tpu as pltpu

_PAD_L = 8   # sublane-aligned column offset of the interior inside the halo scratch


# ---------------------------------------------------------------------------
# Fused residual-trunk kernel: one grid step = one ResidualBlockNoBN on one image
# ---------------------------------------------------------------------------
def _make_blocks_kernel(H, W, C, mm_dtype):

    def conv3x3(xpad_ref, patch_ref, w_ref, b_ref):
        # 3 accumulating MXU matmuls over ky; per-ky im2col patch is (H*W, 3C).
        w_all = w_ref[0]                                   # (9C, C), mm_dtype
        acc = None
        for ky in range(3):                                # statically unrolled
            for kx in range(3):
                c0 = _PAD_L - 1 + kx
                tap = xpad_ref[ky:ky + H, c0:c0 + W, :].reshape(H * W, C)
                # TODO(synk): kx*C column offsets are not 128-aligned for C=32/64;
                # channel-major patch layout would make these stores lane-dense.
                patch_ref[:, kx * C:(kx + 1) * C] = tap
            part = jnp.dot(patch_ref[...],
                           w_all[ky * 3 * C:(ky + 1) * 3 * C, :],
                           preferred_element_type=jnp.float32)
            acc = part if acc is None else acc + part
        return acc + b_ref[0].astype(jnp.float32)          # (H*W, C) f32

    def kernel(f_ref, w1_ref, b1_ref, w2_ref, b2_ref, o_ref,
               xpad_ref, patch_ref, fea_ref):
        j = pl.program_id(1)                               # residual-block index

        @pl.when(j == 0)
        def _init():
            # Zero the SAME-padding halo once per batch element and pull the
            # features into the resident f32 accumulator.  Only the interior
            # [1:H+1, _PAD_L:_PAD_L+W, :] is written below, so the halo stays
            # zero for all subsequent blocks of this (and every) batch element.
            xpad_ref[...] = jnp.zeros(xpad_ref.shape, xpad_ref.dtype)
            fea_ref[...] = f_ref[0].reshape(H * W, C).astype(jnp.float32)

        # ---- conv1 + bias + ReLU -------------------------------------------
        xpad_ref[1:H + 1, _PAD_L:_PAD_L + W, :] = (
            fea_ref[...].reshape(H, W, C).astype(mm_dtype))
        h = jnp.maximum(conv3x3(xpad_ref, patch_ref, w1_ref, b1_ref), 0.0)

        # ---- conv2 + bias + residual add (h never leaves VMEM) --------------
        xpad_ref[1:H + 1, _PAD_L:_PAD_L + W, :] = (
            h.reshape(H, W, C).astype(mm_dtype))
        y = conv3x3(xpad_ref, patch_ref, w2_ref, b2_ref) + fea_ref[...]
        fea_ref[...] = y

        @pl.when(j == pl.num_programs(1) - 1)
        def _store():
            o_ref[0] = y.reshape(H, W, C).astype(o_ref.dtype)

    return kernel


# ---------------------------------------------------------------------------
# Wrappers (weight layout, BlockSpecs, grid, VMEM budget)
# ---------------------------------------------------------------------------
def _w9(w_oihw, mm_dtype):
    """OIHW (Cout, Cin, 3, 3) -> (9*Cin, Cout), tap-major (k = 3*ky + kx)."""
    cout, cin = w_oihw.shape[0], w_oihw.shape[1]
    return (jnp.transpose(w_oihw, (2, 3, 1, 0))            # -> HWIO
            .reshape(9 * cin, cout).astype(mm_dtype))


def _vmem_limit_bytes(scratch_bytes, io_block_bytes):
    # Scratch is single-buffered; pipelined in/out blocks are double-buffered.
    est = int(scratch_bytes) + 2 * int(io_block_bytes) + (8 << 20)   # + margin
    # 48 MiB cap keeps headroom under v7x's 64 MiB physical VMEM; v5e/v6e could
    # go higher once the row-tiled variant needs larger tiles.
    return int(min(max(est, 16 << 20), 48 << 20))


def residual_blocks_fused(fea, w1s, b1s, w2s, b2s, *, mm_dtype=jnp.bfloat16):
    """num_block x ResidualBlockNoBN fully fused; fea stays in VMEM across blocks."""
    N, H, W, C = fea.shape
    num_block = w1s.shape[0]
    mm_item = jnp.dtype(mm_dtype).itemsize

    scratch_bytes = (((H + 2) * (W + _PAD_L + 1) * C      # halo buffer
                      + H * W * 3 * C) * mm_item          # per-ky im2col patch
                     + H * W * C * 4)                      # resident f32 features
    io_block_bytes = (2 * H * W * C * 4                    # fea in + out blocks
                      + 2 * 9 * C * C * mm_item            # per-block conv weights
                      + 2 * C * 4)                         # biases

    return pl.pallas_call(
        _make_blocks_kernel(H, W, C, mm_dtype),
        out_shape=jax.ShapeDtypeStruct((N, H, W, C), fea.dtype),
        grid_spec=pltpu.PrefetchScalarGridSpec(
            num_scalar_prefetch=0,
            grid=(N, num_block),
            in_specs=[
                pl.BlockSpec((1, H, W, C), lambda n, j: (n, 0, 0, 0)),
                pl.BlockSpec((1, 9 * C, C), lambda n, j: (j, 0, 0)),
                pl.BlockSpec((1, 1, C), lambda n, j: (j, 0, 0)),
                pl.BlockSpec((1, 9 * C, C), lambda n, j: (j, 0, 0)),
                pl.BlockSpec((1, 1, C), lambda n, j: (j, 0, 0)),
            ],
            out_specs=pl.BlockSpec((1, H, W, C), lambda n, j: (n, 0, 0, 0)),
            scratch_shapes=[
                pltpu.VMEM((H + 2, W + _PAD_L + 1, C), mm_dtype),  # zero-halo buf
                pltpu.VMEM((H * W, 3 * C), mm_dtype),              # im2col patch
                pltpu.VMEM((H * W, C), jnp.float32),               # resident fea
            ],
        ),
        # The trunk semantically updates fea in place -> alias input 0 with output.
        input_output_aliases={0: 0},
        compiler_params=pltpu.CompilerParams(
            dimension_semantics=("parallel", "arbitrary"),
            vmem_limit_bytes=_vmem_limit_bytes(scratch_bytes, io_block_bytes)),
    )(fea, w1s, b1s, w2s, b2s)


# ---------------------------------------------------------------------------
# Parameters (deterministic synthetic init; shapes match the PyTorch module)
# ---------------------------------------------------------------------------
def init_params(key, num_in_ch, num_out_ch, num_block):
    def conv_init(k, cout, cin, scale):
        kw, kb = jax.random.split(k)
        w = scale * jax.random.normal(kw, (cout, cin, 3, 3), jnp.float32)  # OIHW
        b = 0.01 * jax.random.normal(kb, (cout,), jnp.float32)
        return w, b

    keys = jax.random.split(key, 1 + 2 * num_block)
    params = {"conv_first": conv_init(keys[0], num_out_ch, num_in_ch, 0.1)}
    blocks = []
    for i in range(num_block):
        # default_init_weights(..., scale=0.1) in basicsr -> small residual convs
        w1b1 = conv_init(keys[1 + 2 * i], num_out_ch, num_out_ch, 0.05)
        w2b2 = conv_init(keys[2 + 2 * i], num_out_ch, num_out_ch, 0.05)
        blocks.append((w1b1, w2b2))
    params["blocks"] = blocks
    return params


# ---------------------------------------------------------------------------
# Forward (Pallas trunk) and pure-JAX reference
# ---------------------------------------------------------------------------
@functools.partial(jax.jit, static_argnames=("mm_dtype",))
def conv_residual_blocks_forward(params, x_nchw, mm_dtype=jnp.bfloat16):
    x = jnp.transpose(x_nchw, (0, 2, 3, 1))                # NCHW -> NHWC (glue)
    w0, b0 = params["conv_first"]

    # conv_first through XLA (per review: Cin=4 wastes >95% of MXU depth and is a
    # negligible FLOP fraction of the module).
    # TODO(synk): fold it into the Pallas trunk as a j==0 prologue with Cin padded.
    fea = lax.conv_general_dilated(
        x, jnp.transpose(w0, (2, 3, 1, 0)), window_strides=(1, 1),
        padding=((1, 1), (1, 1)), dimension_numbers=("NHWC", "HWIO", "NHWC"))
    fea = fea + b0.reshape(1, 1, 1, -1)
    fea = jnp.where(fea >= 0, fea, 0.1 * fea)              # LeakyReLU(0.1)

    blocks = params["blocks"]
    C = w0.shape[0]
    w1s = jnp.stack([_w9(w1, mm_dtype) for (w1, _), _ in blocks])
    b1s = jnp.stack([b1.reshape(1, C) for (_, b1), _ in blocks])
    w2s = jnp.stack([_w9(w2, mm_dtype) for _, (w2, _) in blocks])
    b2s = jnp.stack([b2.reshape(1, C) for _, (_, b2) in blocks])

    fea = residual_blocks_fused(fea, w1s, b1s, w2s, b2s, mm_dtype=mm_dtype)
    return jnp.transpose(fea, (0, 3, 1, 2))                # NHWC -> NCHW


def _conv_ref(x, w_oihw, b):
    y = lax.conv_general_dilated(
        x, w_oihw, window_strides=(1, 1), padding=((1, 1), (1, 1)),
        dimension_numbers=("NCHW", "OIHW", "NCHW"))
    return y + b.reshape(1, -1, 1, 1)


def reference_forward(params, x_nchw):
    w0, b0 = params["conv_first"]
    fea = _conv_ref(x_nchw, w0, b0)
    fea = jnp.where(fea >= 0, fea, 0.1 * fea)              # LeakyReLU(0.1)
    for (w1, b1), (w2, b2) in params["blocks"]:
        h = jnp.maximum(_conv_ref(fea, w1, b1), 0.0)       # ReLU
        fea = fea + _conv_ref(h, w2, b2)                   # residual, res_scale=1
    return fea


# ---------------------------------------------------------------------------
if __name__ == "__main__":
    key = jax.random.PRNGKey(0)
    kp, kx = jax.random.split(key)

    N, num_in_ch, H, W = 2, 4, 16, 16
    num_out_ch, num_block = 32, 3                          # small synthetic config

    params = init_params(kp, num_in_ch, num_out_ch, num_block)
    x = jax.random.normal(kx, (N, num_in_ch, H, W), jnp.float32)

    ref = reference_forward(params, x)

    # f32 matmul path: tight numerics check against the pure-XLA reference.
    out_f32 = jax.block_until_ready(
        conv_residual_blocks_forward(params, x, mm_dtype=jnp.float32))
    np.testing.assert_allclose(np.asarray(out_f32), np.asarray(ref),
                               rtol=5e-4, atol=5e-4)

    # bf16-operand path (performance default on v5e/v6e/v7x): looser tolerance.
    out = jax.block_until_ready(conv_residual_blocks_forward(params, x))
    np.testing.assert_allclose(np.asarray(out), np.asarray(ref),
                               rtol=5e-2, atol=5e-2)

    assert out.shape == (N, num_out_ch, H, W)
    print("KERNEL_OK")
</pallas_src>

<mosaic_0001>
module attributes {stable_mosaic.version = 11 : i64} {
  func.func @kernel(%arg0: i32, %arg1: i32, %arg2: memref<1x16x16x32xf32, #tpu.memory_space<vmem>>, %arg3: memref<1x288x32xf32, #tpu.memory_space<vmem>>, %arg4: memref<1x1x32xf32, #tpu.memory_space<vmem>>, %arg5: memref<1x288x32xf32, #tpu.memory_space<vmem>>, %arg6: memref<1x1x32xf32, #tpu.memory_space<vmem>>, %arg7: memref<1x16x16x32xf32, #tpu.memory_space<vmem>>, %arg8: memref<18x25x32xf32, #tpu.memory_space<vmem>>, %arg9: memref<256x96xf32, #tpu.memory_space<vmem>>, %arg10: memref<256x32xf32, #tpu.memory_space<vmem>>) attributes {dimension_semantics = [#tpu.dimension_semantics<parallel>, #tpu.dimension_semantics<arbitrary>], iteration_bounds = array<i64: 2, 3>, scalar_prefetch = 0 : i64, scratch_operands = 3 : i64, tpu.core_type = #tpu.core_type<tc>, window_params = [{transform_indices = @transform_0, window_bounds = array<i64: 1, 16, 16, 32>}, {transform_indices = @transform_1, window_bounds = array<i64: 1, 288, 32>}, {transform_indices = @transform_2, window_bounds = array<i64: 1, 1, 32>}, {transform_indices = @transform_3, window_bounds = array<i64: 1, 288, 32>}, {transform_indices = @transform_4, window_bounds = array<i64: 1, 1, 32>}, {transform_indices = @transform_5, window_bounds = array<i64: 1, 16, 16, 32>}]} {
    %c0_i32 = arith.constant 0 : i32
    %0 = arith.cmpi eq, %arg1, %c0_i32 : i32
    %1 = arith.extui %0 : i1 to i32
    %c0_i32_0 = arith.constant 0 : i32
    %2 = arith.cmpi ne, %1, %c0_i32_0 : i32
    scf.if %2 {
      %cst_126 = arith.constant 0.000000e+00 : f32
      %104 = vector.broadcast %cst_126 : f32 to vector<18x25x32xf32>
      %c0_127 = arith.constant 0 : index
      %c0_128 = arith.constant 0 : index
      %c0_129 = arith.constant 0 : index
      %105 = vector.load %arg8[%c0_127, %c0_128, %c0_129] : memref<18x25x32xf32, #tpu.memory_space<vmem>>, vector<18x25x32xf32>
      tpu.vector_store %arg8[%c0_127, %c0_128, %c0_129], %104 {strides = array<i32>} : memref<18x25x32xf32, #tpu.memory_space<vmem>>, vector<18x25x32xf32>,
      %c0_130 = arith.constant 0 : index
      %c0_131 = arith.constant 0 : index
      %c0_132 = arith.constant 0 : index
      %c0_133 = arith.constant 0 : index
      %106 = vector.load %arg2[%c0_130, %c0_131, %c0_132, %c0_133] : memref<1x16x16x32xf32, #tpu.memory_space<vmem>>, vector<1x16x16x32xf32>
      %107 = vector.shape_cast %106 : vector<1x16x16x32xf32> to vector<16x16x32xf32>
      %108 = vector.shape_cast %107 : vector<16x16x32xf32> to vector<256x32xf32>
      %c0_134 = arith.constant 0 : index
      %c0_135 = arith.constant 0 : index
      %109 = vector.load %arg10[%c0_134, %c0_135] : memref<256x32xf32, #tpu.memory_space<vmem>>, vector<256x32xf32>
      tpu.vector_store %arg10[%c0_134, %c0_135], %108 {strides = array<i32>} : memref<256x32xf32, #tpu.memory_space<vmem>>, vector<256x32xf32>,
    } else {
    }
    %c0 = arith.constant 0 : index
    %c0_1 = arith.constant 0 : index
    %3 = vector.load %arg10[%c0, %c0_1] : memref<256x32xf32, #tpu.memory_space<vmem>>, vector<256x32xf32>
    %4 = vector.shape_cast %3 : vector<256x32xf32> to vector<16x16x32xf32>
    %c1 = arith.constant 1 : index
    %c8 = arith.constant 8 : index
    %c0_2 = arith.constant 0 : index
    %5 = vector.load %arg8[%c1, %c8, %c0_2] : memref<18x25x32xf32, #tpu.memory_space<vmem>>, vector<16x16x32xf32>
    tpu.vector_store %arg8[%c1, %c8, %c0_2], %4 {strides = array<i32>} : memref<18x25x32xf32, #tpu.memory_space<vmem>>, vector<16x16x32xf32>,
    %c0_3 = arith.constant 0 : index
    %c0_4 = arith.constant 0 : index
    %c0_5 = arith.constant 0 : index
    %6 = vector.load %arg3[%c0_3, %c0_4, %c0_5] : memref<1x288x32xf32, #tpu.memory_space<vmem>>, vector<1x288x32xf32>
    %7 = vector.shape_cast %6 : vector<1x288x32xf32> to vector<288x32xf32>
    %c0_6 = arith.constant 0 : index
    %c7 = arith.constant 7 : index
    %c0_7 = arith.constant 0 : index
    %8 = vector.load %arg8[%c0_6, %c7, %c0_7] : memref<18x25x32xf32, #tpu.memory_space<vmem>>, vector<16x16x32xf32>
    %9 = vector.shape_cast %8 : vector<16x16x32xf32> to vector<256x32xf32>
    %c0_8 = arith.constant 0 : index
    %c0_9 = arith.constant 0 : index
    %10 = vector.load %arg9[%c0_8, %c0_9] : memref<256x96xf32, #tpu.memory_space<vmem>>, vector<256x32xf32>
    tpu.vector_store %arg9[%c0_8, %c0_9], %9 {strides = array<i32>} : memref<256x96xf32, #tpu.memory_space<vmem>>, vector<256x32xf32>,
    %c0_10 = arith.constant 0 : index
    %c8_11 = arith.constant 8 : index
    %c0_12 = arith.constant 0 : index
    %11 = vector.load %arg8[%c0_10, %c8_11, %c0_12] : memref<18x25x32xf32, #tpu.memory_space<vmem>>, vector<16x16x32xf32>
    %12 = vector.shape_cast %11 : vector<16x16x32xf32> to vector<256x32xf32>
    %c0_13 = arith.constant 0 : index
    %c32 = arith.constant 32 : index
    %13 = vector.load %arg9[%c0_13, %c32] : memref<256x96xf32, #tpu.memory_space<vmem>>, vector<256x32xf32>
    tpu.vector_store %arg9[%c0_13, %c32], %12 {strides = array<i32>} : memref<256x96xf32, #tpu.memory_space<vmem>>, vector<256x32xf32>,
    %c0_14 = arith.constant 0 : index
    %c9 = arith.constant 9 : index
    %c0_15 = arith.constant 0 : index
    %14 = vector.load %arg8[%c0_14, %c9, %c0_15] : memref<18x25x32xf32, #tpu.memory_space<vmem>>, vector<16x16x32xf32>
    %15 = vector.shape_cast %14 : vector<16x16x32xf32> to vector<256x32xf32>
    %c0_16 = arith.constant 0 : index
    %c64 = arith.constant 64 : index
    %16 = vector.load %arg9[%c0_16, %c64] : memref<256x96xf32, #tpu.memory_space<vmem>>, vector<256x32xf32>
    tpu.vector_store %arg9[%c0_16, %c64], %15 {strides = array<i32>} : memref<256x96xf32, #tpu.memory_space<vmem>>, vector<256x32xf32>,
    %c0_17 = arith.constant 0 : index
    %c0_18 = arith.constant 0 : index
    %17 = vector.load %arg9[%c0_17, %c0_18] : memref<256x96xf32, #tpu.memory_space<vmem>>, vector<256x96xf32>
    %18 = vector.extract_strided_slice %7 {offsets = [0, 0], sizes = [96, 32], strides = [1, 1]} : vector<288x32xf32> to vector<96x32xf32>
    %cst = arith.constant dense<0.000000e+00> : vector<256x32xf32>
    %19 = tpu.matmul %17, %18, %cst {dimension_numbers = #tpu.dot_dimension_numbers<[1], [0], [0], [1], [0, 0, 1, 1], [], []>} : vector<256x96xf32>, vector<96x32xf32>, vector<256x32xf32> -> vector<256x32xf32>
    %c1_19 = arith.constant 1 : index
    %c7_20 = arith.constant 7 : index
    %c0_21 = arith.constant 0 : index
    %20 = vector.load %arg8[%c1_19, %c7_20, %c0_21] : memref<18x25x32xf32, #tpu.memory_space<vmem>>, vector<16x16x32xf32>
    %21 = vector.shape_cast %20 : vector<16x16x32xf32> to vector<256x32xf32>
    %c0_22 = arith.constant 0 : index
    %c0_23 = arith.constant 0 : index
    %22 = vector.load %arg9[%c0_22, %c0_23] : memref<256x96xf32, #tpu.memory_space<vmem>>, vector<256x32xf32>
    tpu.vector_store %arg9[%c0_22, %c0_23], %21 {strides = array<i32>} : memref<256x96xf32, #tpu.memory_space<vmem>>, vector<256x32xf32>,
    %c1_24 = arith.constant 1 : index
    %c8_25 = arith.constant 8 : index
    %c0_26 = arith.constant 0 : index
    %23 = vector.load %arg8[%c1_24, %c8_25, %c0_26] : memref<18x25x32xf32, #tpu.memory_space<vmem>>, vector<16x16x32xf32>
    %24 = vector.shape_cast %23 : vector<16x16x32xf32> to vector<256x32xf32>
    %c0_27 = arith.constant 0 : index
    %c32_28 = arith.constant 32 : index
    %25 = vector.load %arg9[%c0_27, %c32_28] : memref<256x96xf32, #tpu.memory_space<vmem>>, vector<256x32xf32>
    tpu.vector_store %arg9[%c0_27, %c32_28], %24 {strides = array<i32>} : memref<256x96xf32, #tpu.memory_space<vmem>>, vector<256x32xf32>,
    %c1_29 = arith.constant 1 : index
    %c9_30 = arith.constant 9 : index
    %c0_31 = arith.constant 0 : index
    %26 = vector.load %arg8[%c1_29, %c9_30, %c0_31] : memref<18x25x32xf32, #tpu.memory_space<vmem>>, vector<16x16x32xf32>
    %27 = vector.shape_cast %26 : vector<16x16x32xf32> to vector<256x32xf32>
    %c0_32 = arith.constant 0 : index
    %c64_33 = arith.constant 64 : index
    %28 = vector.load %arg9[%c0_32, %c64_33] : memref<256x96xf32, #tpu.memory_space<vmem>>, vector<256x32xf32>
    tpu.vector_store %arg9[%c0_32, %c64_33], %27 {strides = array<i32>} : memref<256x96xf32, #tpu.memory_space<vmem>>, vector<256x32xf32>,
    %c0_34 = arith.constant 0 : index
    %c0_35 = arith.constant 0 : index
    %29 = vector.load %arg9[%c0_34, %c0_35] : memref<256x96xf32, #tpu.memory_space<vmem>>, vector<256x96xf32>
    %30 = vector.extract_strided_slice %7 {offsets = [96, 0], sizes = [96, 32], strides = [1, 1]} : vector<288x32xf32> to vector<96x32xf32>
    %cst_36 = arith.constant dense<0.000000e+00> : vector<256x32xf32>
    %31 = tpu.matmul %29, %30, %cst_36 {dimension_numbers = #tpu.dot_dimension_numbers<[1], [0], [0], [1], [0, 0, 1, 1], [], []>} : vector<256x96xf32>, vector<96x32xf32>, vector<256x32xf32> -> vector<256x32xf32>
    %32 = arith.addf %19, %31 : vector<256x32xf32>
    %c2 = arith.constant 2 : index
    %c7_37 = arith.constant 7 : index
    %c0_38 = arith.constant 0 : index
    %33 = vector.load %arg8[%c2, %c7_37, %c0_38] : memref<18x25x32xf32, #tpu.memory_space<vmem>>, vector<16x16x32xf32>
    %34 = vector.shape_cast %33 : vector<16x16x32xf32> to vector<256x32xf32>
    %c0_39 = arith.constant 0 : index
    %c0_40 = arith.constant 0 : index
    %35 = vector.load %arg9[%c0_39, %c0_40] : memref<256x96xf32, #tpu.memory_space<vmem>>, vector<256x32xf32>
    tpu.vector_store %arg9[%c0_39, %c0_40], %34 {strides = array<i32>} : memref<256x96xf32, #tpu.memory_space<vmem>>, vector<256x32xf32>,
    %c2_41 = arith.constant 2 : index
    %c8_42 = arith.constant 8 : index
    %c0_43 = arith.constant 0 : index
    %36 = vector.load %arg8[%c2_41, %c8_42, %c0_43] : memref<18x25x32xf32, #tpu.memory_space<vmem>>, vector<16x16x32xf32>
    %37 = vector.shape_cast %36 : vector<16x16x32xf32> to vector<256x32xf32>
    %c0_44 = arith.constant 0 : index
    %c32_45 = arith.constant 32 : index
    %38 = vector.load %arg9[%c0_44, %c32_45] : memref<256x96xf32, #tpu.memory_space<vmem>>, vector<256x32xf32>
    tpu.vector_store %arg9[%c0_44, %c32_45], %37 {strides = array<i32>} : memref<256x96xf32, #tpu.memory_space<vmem>>, vector<256x32xf32>,
    %c2_46 = arith.constant 2 : index
    %c9_47 = arith.constant 9 : index
    %c0_48 = arith.constant 0 : index
    %39 = vector.load %arg8[%c2_46, %c9_47, %c0_48] : memref<18x25x32xf32, #tpu.memory_space<vmem>>, vector<16x16x32xf32>
    %40 = vector.shape_cast %39 : vector<16x16x32xf32> to vector<256x32xf32>
    %c0_49 = arith.constant 0 : index
    %c64_50 = arith.constant 64 : index
    %41 = vector.load %arg9[%c0_49, %c64_50] : memref<256x96xf32, #tpu.memory_space<vmem>>, vector<256x32xf32>
    tpu.vector_store %arg9[%c0_49, %c64_50], %40 {strides = array<i32>} : memref<256x96xf32, #tpu.memory_space<vmem>>, vector<256x32xf32>,
    %c0_51 = arith.constant 0 : index
    %c0_52 = arith.constant 0 : index
    %42 = vector.load %arg9[%c0_51, %c0_52] : memref<256x96xf32, #tpu.memory_space<vmem>>, vector<256x96xf32>
    %43 = vector.extract_strided_slice %7 {offsets = [192, 0], sizes = [96, 32], strides = [1, 1]} : vector<288x32xf32> to vector<96x32xf32>
    %cst_53 = arith.constant dense<0.000000e+00> : vector<256x32xf32>
    %44 = tpu.matmul %42, %43, %cst_53 {dimension_numbers = #tpu.dot_dimension_numbers<[1], [0], [0], [1], [0, 0, 1, 1], [], []>} : vector<256x96xf32>, vector<96x32xf32>, vector<256x32xf32> -> vector<256x32xf32>
    %45 = arith.addf %32, %44 : vector<256x32xf32>
    %c0_54 = arith.constant 0 : index
    %c0_55 = arith.constant 0 : index
    %c0_56 = arith.constant 0 : index
    %46 = vector.load %arg4[%c0_54, %c0_55, %c0_56] : memref<1x1x32xf32, #tpu.memory_space<vmem>>, vector<1x1x32xf32>
    %47 = vector.shape_cast %46 : vector<1x1x32xf32> to vector<1x32xf32>
    %48 = vector.broadcast %47 : vector<1x32xf32> to vector<256x32xf32>
    %49 = arith.addf %45, %48 : vector<256x32xf32>
    %cst_57 = arith.constant 0.000000e+00 : f32
    %50 = vector.broadcast %cst_57 : f32 to vector<256x32xf32>
    %51 = arith.maximumf %49, %50 : vector<256x32xf32>
    %52 = vector.shape_cast %51 : vector<256x32xf32> to vector<16x16x32xf32>
    %c1_58 = arith.constant 1 : index
    %c8_59 = arith.constant 8 : index
    %c0_60 = arith.constant 0 : index
    %53 = vector.load %arg8[%c1_58, %c8_59, %c0_60] : memref<18x25x32xf32, #tpu.memory_space<vmem>>, vector<16x16x32xf32>
    tpu.vector_store %arg8[%c1_58, %c8_59, %c0_60], %52 {strides = array<i32>} : memref<18x25x32xf32, #tpu.memory_space<vmem>>, vector<16x16x32xf32>,
    %c0_61 = arith.constant 0 : index
    %c0_62 = arith.constant 0 : index
    %c0_63 = arith.constant 0 : index
    %54 = vector.load %arg5[%c0_61, %c0_62, %c0_63] : memref<1x288x32xf32, #tpu.memory_space<vmem>>, vector<1x288x32xf32>
    %55 = vector.shape_cast %54 : vector<1x288x32xf32> to vector<288x32xf32>
    %c0_64 = arith.constant 0 : index
    %c7_65 = arith.constant 7 : index
    %c0_66 = arith.constant 0 : index
    %56 = vector.load %arg8[%c0_64, %c7_65, %c0_66] : memref<18x25x32xf32, #tpu.memory_space<vmem>>, vector<16x16x32xf32>
    %57 = vector.shape_cast %56 : vector<16x16x32xf32> to vector<256x32xf32>
    %c0_67 = arith.constant 0 : index
    %c0_68 = arith.constant 0 : index
    %58 = vector.load %arg9[%c0_67, %c0_68] : memref<256x96xf32, #tpu.memory_space<vmem>>, vector<256x32xf32>
    tpu.vector_store %arg9[%c0_67, %c0_68], %57 {strides = array<i32>} : memref<256x96xf32, #tpu.memory_space<vmem>>, vector<256x32xf32>,
    %c0_69 = arith.constant 0 : index
    %c8_70 = arith.constant 8 : index
    %c0_71 = arith.constant 0 : index
    %59 = vector.load %arg8[%c0_69, %c8_70, %c0_71] : memref<18x25x32xf32, #tpu.memory_space<vmem>>, vector<16x16x32xf32>
    %60 = vector.shape_cast %59 : vector<16x16x32xf32> to vector<256x32xf32>
    %c0_72 = arith.constant 0 : index
    %c32_73 = arith.constant 32 : index
    %61 = vector.load %arg9[%c0_72, %c32_73] : memref<256x96xf32, #tpu.memory_space<vmem>>, vector<256x32xf32>
    tpu.vector_store %arg9[%c0_72, %c32_73], %60 {strides = array<i32>} : memref<256x96xf32, #tpu.memory_space<vmem>>, vector<256x32xf32>,
    %c0_74 = arith.constant 0 : index
    %c9_75 = arith.constant 9 : index
    %c0_76 = arith.constant 0 : index
    %62 = vector.load %arg8[%c0_74, %c9_75, %c0_76] : memref<18x25x32xf32, #tpu.memory_space<vmem>>, vector<16x16x32xf32>
    %63 = vector.shape_cast %62 : vector<16x16x32xf32> to vector<256x32xf32>
    %c0_77 = arith.constant 0 : index
    %c64_78 = arith.constant 64 : index
    %64 = vector.load %arg9[%c0_77, %c64_78] : memref<256x96xf32, #tpu.memory_space<vmem>>, vector<256x32xf32>
    tpu.vector_store %arg9[%c0_77, %c64_78], %63 {strides = array<i32>} : memref<256x96xf32, #tpu.memory_space<vmem>>, vector<256x32xf32>,
    %c0_79 = arith.constant 0 : index
    %c0_80 = arith.constant 0 : index
    %65 = vector.load %arg9[%c0_79, %c0_80] : memref<256x96xf32, #tpu.memory_space<vmem>>, vector<256x96xf32>
    %66 = vector.extract_strided_slice %55 {offsets = [0, 0], sizes = [96, 32], strides = [1, 1]} : vector<288x32xf32> to vector<96x32xf32>
    %cst_81 = arith.constant dense<0.000000e+00> : vector<256x32xf32>
    %67 = tpu.matmul %65, %66, %cst_81 {dimension_numbers = #tpu.dot_dimension_numbers<[1], [0], [0], [1], [0, 0, 1, 1], [], []>} : vector<256x96xf32>, vector<96x32xf32>, vector<256x32xf32> -> vector<256x32xf32>
    %c1_82 = arith.constant 1 : index
    %c7_83 = arith.constant 7 : index
    %c0_84 = arith.constant 0 : index
    %68 = vector.load %arg8[%c1_82, %c7_83, %c0_84] : memref<18x25x32xf32, #tpu.memory_space<vmem>>, vector<16x16x32xf32>
    %69 = vector.shape_cast %68 : vector<16x16x32xf32> to vector<256x32xf32>
    %c0_85 = arith.constant 0 : index
    %c0_86 = arith.constant 0 : index
    %70 = vector.load %arg9[%c0_85, %c0_86] : memref<256x96xf32, #tpu.memory_space<vmem>>, vector<256x32xf32>
    tpu.vector_store %arg9[%c0_85, %c0_86], %69 {strides = array<i32>} : memref<256x96xf32, #tpu.memory_space<vmem>>, vector<256x32xf32>,
    %c1_87 = arith.constant 1 : index
    %c8_88 = arith.constant 8 : index
    %c0_89 = arith.constant 0 : index
    %71 = vector.load %arg8[%c1_87, %c8_88, %c0_89] : memref<18x25x32xf32, #tpu.memory_space<vmem>>, vector<16x16x32xf32>
    %72 = vector.shape_cast %71 : vector<16x16x32xf32> to vector<256x32xf32>
    %c0_90 = arith.constant 0 : index
    %c32_91 = arith.constant 32 : index
    %73 = vector.load %arg9[%c0_90, %c32_91] : memref<256x96xf32, #tpu.memory_space<vmem>>, vector<256x32xf32>
    tpu.vector_store %arg9[%c0_90, %c32_91], %72 {strides = array<i32>} : memref<256x96xf32, #tpu.memory_space<vmem>>, vector<256x32xf32>,
    %c1_92 = arith.constant 1 : index
    %c9_93 = arith.constant 9 : index
    %c0_94 = arith.constant 0 : index
    %74 = vector.load %arg8[%c1_92, %c9_93, %c0_94] : memref<18x25x32xf32, #tpu.memory_space<vmem>>, vector<16x16x32xf32>
    %75 = vector.shape_cast %74 : vector<16x16x32xf32> to vector<256x32xf32>
    %c0_95 = arith.constant 0 : index
    %c64_96 = arith.constant 64 : index
    %76 = vector.load %arg9[%c0_95, %c64_96] : memref<256x96xf32, #tpu.memory_space<vmem>>, vector<256x32xf32>
    tpu.vector_store %arg9[%c0_95, %c64_96], %75 {strides = array<i32>} : memref<256x96xf32, #tpu.memory_space<vmem>>, vector<256x32xf32>,
    %c0_97 = arith.constant 0 : index
    %c0_98 = arith.constant 0 : index
    %77 = vector.load %arg9[%c0_97, %c0_98] : memref<256x96xf32, #tpu.memory_space<vmem>>, vector<256x96xf32>
    %78 = vector.extract_strided_slice %55 {offsets = [96, 0], sizes = [96, 32], strides = [1, 1]} : vector<288x32xf32> to vector<96x32xf32>
    %cst_99 = arith.constant dense<0.000000e+00> : vector<256x32xf32>
    %79 = tpu.matmul %77, %78, %cst_99 {dimension_numbers = #tpu.dot_dimension_numbers<[1], [0], [0], [1], [0, 0, 1, 1], [], []>} : vector<256x96xf32>, vector<96x32xf32>, vector<256x32xf32> -> vector<256x32xf32>
    %80 = arith.addf %67, %79 : vector<256x32xf32>
    %c2_100 = arith.constant 2 : index
    %c7_101 = arith.constant 7 : index
    %c0_102 = arith.constant 0 : index
    %81 = vector.load %arg8[%c2_100, %c7_101, %c0_102] : memref<18x25x32xf32, #tpu.memory_space<vmem>>, vector<16x16x32xf32>
    %82 = vector.shape_cast %81 : vector<16x16x32xf32> to vector<256x32xf32>
    %c0_103 = arith.constant 0 : index
    %c0_104 = arith.constant 0 : index
    %83 = vector.load %arg9[%c0_103, %c0_104] : memref<256x96xf32, #tpu.memory_space<vmem>>, vector<256x32xf32>
    tpu.vector_store %arg9[%c0_103, %c0_104], %82 {strides = array<i32>} : memref<256x96xf32, #tpu.memory_space<vmem>>, vector<256x32xf32>,
    %c2_105 = arith.constant 2 : index
    %c8_106 = arith.constant 8 : index
    %c0_107 = arith.constant 0 : index
    %84 = vector.load %arg8[%c2_105, %c8_106, %c0_107] : memref<18x25x32xf32, #tpu.memory_space<vmem>>, vector<16x16x32xf32>
    %85 = vector.shape_cast %84 : vector<16x16x32xf32> to vector<256x32xf32>
    %c0_108 = arith.constant 0 : index
    %c32_109 = arith.constant 32 : index
    %86 = vector.load %arg9[%c0_108, %c32_109] : memref<256x96xf32, #tpu.memory_space<vmem>>, vector<256x32xf32>
    tpu.vector_store %arg9[%c0_108, %c32_109], %85 {strides = array<i32>} : memref<256x96xf32, #tpu.memory_space<vmem>>, vector<256x32xf32>,
    %c2_110 = arith.constant 2 : index
    %c9_111 = arith.constant 9 : index
    %c0_112 = arith.constant 0 : index
    %87 = vector.load %arg8[%c2_110, %c9_111, %c0_112] : memref<18x25x32xf32, #tpu.memory_space<vmem>>, vector<16x16x32xf32>
    %88 = vector.shape_cast %87 : vector<16x16x32xf32> to vector<256x32xf32>
    %c0_113 = arith.constant 0 : index
    %c64_114 = arith.constant 64 : index
    %89 = vector.load %arg9[%c0_113, %c64_114] : memref<256x96xf32, #tpu.memory_space<vmem>>, vector<256x32xf32>
    tpu.vector_store %arg9[%c0_113, %c64_114], %88 {strides = array<i32>} : memref<256x96xf32, #tpu.memory_space<vmem>>, vector<256x32xf32>,
    %c0_115 = arith.constant 0 : index
    %c0_116 = arith.constant 0 : index
    %90 = vector.load %arg9[%c0_115, %c0_116] : memref<256x96xf32, #tpu.memory_space<vmem>>, vector<256x96xf32>
    %91 = vector.extract_strided_slice %55 {offsets = [192, 0], sizes = [96, 32], strides = [1, 1]} : vector<288x32xf32> to vector<96x32xf32>
    %cst_117 = arith.constant dense<0.000000e+00> : vector<256x32xf32>
    %92 = tpu.matmul %90, %91, %cst_117 {dimension_numbers = #tpu.dot_dimension_numbers<[1], [0], [0], [1], [0, 0, 1, 1], [], []>} : vector<256x96xf32>, vector<96x32xf32>, vector<256x32xf32> -> vector<256x32xf32>
    %93 = arith.addf %80, %92 : vector<256x32xf32>
    %c0_118 = arith.constant 0 : index
    %c0_119 = arith.constant 0 : index
    %c0_120 = arith.constant 0 : index
    %94 = vector.load %arg6[%c0_118, %c0_119, %c0_120] : memref<1x1x32xf32, #tpu.memory_space<vmem>>, vector<1x1x32xf32>
    %95 = vector.shape_cast %94 : vector<1x1x32xf32> to vector<1x32xf32>
    %96 = vector.broadcast %95 : vector<1x32xf32> to vector<256x32xf32>
    %97 = arith.addf %93, %96 : vector<256x32xf32>
    %c0_121 = arith.constant 0 : index
    %c0_122 = arith.constant 0 : index
    %98 = vector.load %arg10[%c0_121, %c0_122] : memref<256x32xf32, #tpu.memory_space<vmem>>, vector<256x32xf32>
    %99 = arith.addf %97, %98 : vector<256x32xf32>
    %c0_123 = arith.constant 0 : index
    %c0_124 = arith.constant 0 : index
    %100 = vector.load %arg10[%c0_123, %c0_124] : memref<256x32xf32, #tpu.memory_space<vmem>>, vector<256x32xf32>
    tpu.vector_store %arg10[%c0_123, %c0_124], %99 {strides = array<i32>} : memref<256x32xf32, #tpu.memory_space<vmem>>, vector<256x32xf32>,
    %c2_i32 = arith.constant 2 : i32
    %101 = arith.cmpi eq, %arg1, %c2_i32 : i32
    %102 = arith.extui %101 : i1 to i32
    %c0_i32_125 = arith.constant 0 : i32
    %103 = arith.cmpi ne, %102, %c0_i32_125 : i32
    scf.if %103 {
      %104 = vector.shape_cast %99 : vector<256x32xf32> to vector<16x16x32xf32>
      %c0_126 = arith.constant 0 : index
      %c0_127 = arith.constant 0 : index
      %c0_128 = arith.constant 0 : index
      %c0_129 = arith.constant 0 : index
      %105 = vector.load %arg7[%c0_126, %c0_127, %c0_128, %c0_129] : memref<1x16x16x32xf32, #tpu.memory_space<vmem>>, vector<1x16x16x32xf32>
      %106 = vector.shape_cast %105 : vector<1x16x16x32xf32> to vector<16x16x32xf32>
      %107 = vector.shape_cast %104 : vector<16x16x32xf32> to vector<1x16x16x32xf32>
      tpu.vector_store %arg7[%c0_126, %c0_127, %c0_128, %c0_129], %107 {strides = array<i32>} : memref<1x16x16x32xf32, #tpu.memory_space<vmem>>, vector<1x16x16x32xf32>,
    } else {
    }
    return
  }
  func.func @transform_0(%arg0: i32, %arg1: i32) -> (i32, i32, i32, i32) {
    %c0_i32 = arith.constant 0 : i32
    %c0_i32_0 = arith.constant 0 : i32
    %c0_i32_1 = arith.constant 0 : i32
    %c0_i32_2 = arith.constant 0 : i32
    return %arg0, %c0_i32, %c0_i32_0, %c0_i32_1 : i32, i32, i32, i32
  }
  func.func @transform_1(%arg0: i32, %arg1: i32) -> (i32, i32, i32) {
    %c0_i32 = arith.constant 0 : i32
    %c0_i32_0 = arith.constant 0 : i32
    %c0_i32_1 = arith.constant 0 : i32
    return %arg1, %c0_i32, %c0_i32_0 : i32, i32, i32
  }
  func.func @transform_2(%arg0: i32, %arg1: i32) -> (i32, i32, i32) {
    %c0_i32 = arith.constant 0 : i32
    %c0_i32_0 = arith.constant 0 : i32
    %c0_i32_1 = arith.constant 0 : i32
    return %arg1, %c0_i32, %c0_i32_0 : i32, i32, i32
  }
  func.func @transform_3(%arg0: i32, %arg1: i32) -> (i32, i32, i32) {
    %c0_i32 = arith.constant 0 : i32
    %c0_i32_0 = arith.constant 0 : i32
    %c0_i32_1 = arith.constant 0 : i32
    return %arg1, %c0_i32, %c0_i32_0 : i32, i32, i32
  }
  func.func @transform_4(%arg0: i32, %arg1: i32) -> (i32, i32, i32) {
    %c0_i32 = arith.constant 0 : i32
    %c0_i32_0 = arith.constant 0 : i32
    %c0_i32_1 = arith.constant 0 : i32
    return %arg1, %c0_i32, %c0_i32_0 : i32, i32, i32
  }
  func.func @transform_5(%arg0: i32, %arg1: i32) -> (i32, i32, i32, i32) {
    %c0_i32 = arith.constant 0 : i32
    %c0_i32_0 = arith.constant 0 : i32
    %c0_i32_1 = arith.constant 0 : i32
    %c0_i32_2 = arith.constant 0 : i32
    return %arg0, %c0_i32, %c0_i32_0, %c0_i32_1 : i32, i32, i32, i32
  }
}

</mosaic_0001>

<llo_original>
// kernel: conv_residual_blocks_forward.1
$region0: #{conv_residual_blocks_forward.1}
  #allocation0 [shape = 'u32[]', space=smem, size = 0x4, offset = 0x4, fixed_abs, tag = 'smem constant byte address 0x4 - core index']
  #allocation1 [shape = 'u32[144,128]{1,0:T(1,128)}', space=vmem, size = 0x12000, scoped, tag = 'internal scratch']
  #allocation2 [shape = 'f32[18,25,32]{2,1,0:T(8,128)}', space=vmem, size = 0x48000, scoped, tag = 'scratch operand']
  #allocation3 [shape = 'f32[256,96]{1,0:T(8,128)}', space=vmem, size = 0x20000, scoped, tag = 'scratch operand']
  #allocation4 [shape = 'f32[256,32]{1,0:T(8,128)}', space=vmem, size = 0x20000, scoped, tag = 'scratch operand']
  %s0 = inlined_call_operand.vmem [shape: f32[2,16,16,32], index: 0, kind: input, shape index: {}, may-alias: {0,5}]
  %s1 = inlined_call_operand.vmem [shape: f32[3,288,32], index: 1, kind: input, shape index: {}]
  %s2 = inlined_call_operand.vmem [shape: f32[3,1,32], index: 2, kind: input, shape index: {}]
  %s3 = inlined_call_operand.vmem [shape: f32[3,288,32], index: 3, kind: input, shape index: {}]
  %s4 = inlined_call_operand.vmem [shape: f32[3,1,32], index: 4, kind: input, shape index: {}]
  %s5 = inlined_call_operand.vmem [shape: f32[2,16,16,32], index: 5, kind: output, shape index: {}, may-alias: {0,5}]
  %s6 = sld [smem:[#allocation0]]
  $region61: #{conv_residual_blocks_forward.1} parent=0
    _
  %s8 = ssub.s32 1, %s6
  %s9 = scalar_select 0, %s8, %s6
  loop: start=0, step=1, limit=8
  $region2: #{conv_residual_blocks_forward.1} parent=0 // loop_pre_header
    _
  $region3: #{conv_residual_blocks_forward.1} parent=0 // loop_header
    %s11 = sphi 0, %s15
    %p12 = scmp.ge.s32.totalorder %s11, 8
    %s18 = sphi 0, %s30
    %s19 = sphi 0, %s26
    %s20 = sphi 0, %s18
    %s21 = sphi 0, %s19
    %s22 = sphi 0, %s20
    %s23 = sphi 0, %s21
    %s33 = sphi 0, %s35
    %s36 = sphi 0, %s33
    %s37 = sphi 0, %s36
    %s53 = sphi 0, %s37
    %s59 = sphi 0, %s61
    %s62 = sphi 0, %s59
    %s63 = sphi 0, %s62
    %s79 = sphi 0, %s63
    %s85 = sphi 0, %s87
    %s88 = sphi 0, %s85
    %s89 = sphi 0, %s88
    %s105 = sphi 0, %s89
    %s111 = sphi 0, %s113
    %s114 = sphi 0, %s111
    %s115 = sphi 0, %s114
    %s131 = sphi 0, %s115
    %s137 = sphi 0, %s139
    %s140 = sphi 0, %s137
    %s141 = sphi 0, %s140
    %s157 = sphi 0, %s141
    %s163 = sphi 0, %s165
    %s166 = sphi 0, %s163
    %s167 = sphi 0, %s166
    %s183 = sphi 0, %s167
  $region4: #{conv_residual_blocks_forward.1} parent=0 // loop_header_branch
    %14 = sbr.rel (%p12) target = $region8
  $region5: #{conv_residual_blocks_forward.1} parent=0 // loop_body
    %s16 = ssub.s32 %s11, 1
    %s17 = ssub.s32 %s11, 2
    %s24 = sadd.s32 1, %s19
    %p25 = scmp.ge.s32.totalorder %s24, 3
    %s26 = scalar_select %p25, 0, %s24
    %s27 = sadd.s32 1, %s18
    %s28 = scalar_select %p25, %s27, %s18
    %p29 = scmp.ge.s32.totalorder %s28, 2
    %s30 = scalar_select %p29, 0, %s28
    %s31 = ssub.s32 %s18, %s30
    %p32 = scmp.eq.s32.totalorder %s31, 0
    %s34 = sadd.s32 %s33, 1
    %s35 = scalar_select %p32, %s33, %s34
    %p38 = pneg %p32
    %p39 = scmp.eq.s32.totalorder %s11, 5
    %p40 = por %p38, %p39
    %p41 = scmp.ne.s32.totalorder %s33, %s36
    %p42 = scmp.eq.s32.totalorder %s11, 0
    %p43 = por %p41, %p42
    %p44 = scmp.ne.s32.totalorder %s33, %s36
    %p45 = scmp.eq.s32.totalorder %s16, 5
    %p46 = por %p44, %p45
    %p47 = scmp.ne.s32.totalorder %s36, %s37
    %p48 = scmp.eq.s32.totalorder %s16, 0
    %p49 = por %p47, %p48
    %p50 = scmp.ne.s32.totalorder %s36, %s37
    %p51 = scmp.eq.s32.totalorder %s17, 5
    %p52 = por %p50, %p51
    %p54 = scmp.ne.s32.totalorder %s37, %s53
    %p55 = scmp.eq.s32.totalorder %s17, 0
    %p56 = por %p54, %p55
    %s57 = ssub.s32 %s19, %s26
    %p58 = scmp.eq.s32.totalorder %s57, 0
    %s60 = sadd.s32 %s59, 1
    %s61 = scalar_select %p58, %s59, %s60
    %p64 = pneg %p58
    %p65 = scmp.eq.s32.totalorder %s11, 5
    %p66 = por %p64, %p65
    %p67 = scmp.ne.s32.totalorder %s59, %s62
    %p68 = scmp.eq.s32.totalorder %s11, 0
    %p69 = por %p67, %p68
    %p70 = scmp.ne.s32.totalorder %s59, %s62
    %p71 = scmp.eq.s32.totalorder %s16, 5
    %p72 = por %p70, %p71
    %p73 = scmp.ne.s32.totalorder %s62, %s63
    %p74 = scmp.eq.s32.totalorder %s16, 0
    %p75 = por %p73, %p74
    %p76 = scmp.ne.s32.totalorder %s62, %s63
    %p77 = scmp.eq.s32.totalorder %s17, 5
    %p78 = por %p76, %p77
    %p80 = scmp.ne.s32.totalorder %s63, %s79
    %p81 = scmp.eq.s32.totalorder %s17, 0
    %p82 = por %p80, %p81
    %s83 = ssub.s32 %s19, %s26
    %p84 = scmp.eq.s32.totalorder %s83, 0
    %s86 = sadd.s32 %s85, 1
    %s87 = scalar_select %p84, %s85, %s86
    %p90 = pneg %p84
    %p91 = scmp.eq.s32.totalorder %s11, 5
    %p92 = por %p90, %p91
    %p93 = scmp.ne.s32.totalorder %s85, %s88
    %p94 = scmp.eq.s32.totalorder %s11, 0
    %p95 = por %p93, %p94
    %p96 = scmp.ne.s32.totalorder %s85, %s88
    %p97 = scmp.eq.s32.totalorder %s16, 5
    %p98 = por %p96, %p97
    %p99 = scmp.ne.s32.totalorder %s88, %s89
    %p100 = scmp.eq.s32.totalorder %s16, 0
    %p101 = por %p99, %p100
    %p102 = scmp.ne.s32.totalorder %s88, %s89
    %p103 = scmp.eq.s32.totalorder %s17, 5
    %p104 = por %p102, %p103
    %p106 = scmp.ne.s32.totalorder %s89, %s105
    %p107 = scmp.eq.s32.totalorder %s17, 0
    %p108 = por %p106, %p107
    %s109 = ssub.s32 %s19, %s26
    %p110 = scmp.eq.s32.totalorder %s109, 0
    %s112 = sadd.s32 %s111, 1
    %s113 = scalar_select %p110, %s111, %s112
    %p116 = pneg %p110
    %p117 = scmp.eq.s32.totalorder %s11, 5
    %p118 = por %p116, %p117
    %p119 = scmp.ne.s32.totalorder %s111, %s114
    %p120 = scmp.eq.s32.totalorder %s11, 0
    %p121 = por %p119, %p120
    %p122 = scmp.ne.s32.totalorder %s111, %s114
    %p123 = scmp.eq.s32.totalorder %s16, 5
    %p124 = por %p122, %p123
    %p125 = scmp.ne.s32.totalorder %s114, %s115
    %p126 = scmp.eq.s32.totalorder %s16, 0
    %p127 = por %p125, %p126
    %p128 = scmp.ne.s32.totalorder %s114, %s115
    %p129 = scmp.eq.s32.totalorder %s17, 5
    %p130 = por %p128, %p129
    %p132 = scmp.ne.s32.totalorder %s115, %s131
    %p133 = scmp.eq.s32.totalorder %s17, 0
    %p134 = por %p132, %p133
    %s135 = ssub.s32 %s19, %s26
    %p136 = scmp.eq.s32.totalorder %s135, 0
    %s138 = sadd.s32 %s137, 1
    %s139 = scalar_select %p136, %s137, %s138
    %p142 = pneg %p136
    %p143 = scmp.eq.s32.totalorder %s11, 5
    %p144 = por %p142, %p143
    %p145 = scmp.ne.s32.totalorder %s137, %s140
    %p146 = scmp.eq.s32.totalorder %s11, 0
    %p147 = por %p145, %p146
    %p148 = scmp.ne.s32.totalorder %s137, %s140
    %p149 = scmp.eq.s32.totalorder %s16, 5
    %p150 = por %p148, %p149
    %p151 = scmp.ne.s32.totalorder %s140, %s141
    %p152 = scmp.eq.s32.totalorder %s16, 0
    %p153 = por %p151, %p152
    %p154 = scmp.ne.s32.totalorder %s140, %s141
    %p155 = scmp.eq.s32.totalorder %s17, 5
    %p156 = por %p154, %p155
    %p158 = scmp.ne.s32.totalorder %s141, %s157
    %p159 = scmp.eq.s32.totalorder %s17, 0
    %p160 = por %p158, %p159
    %s161 = ssub.s32 %s18, %s30
    %p162 = scmp.eq.s32.totalorder %s161, 0
    %s164 = sadd.s32 %s163, 1
    %s165 = scalar_select %p162, %s163, %s164
    %p168 = pneg %p162
    %p169 = scmp.eq.s32.totalorder %s11, 5
    %p170 = por %p168, %p169
    %p171 = scmp.ne.s32.totalorder %s163, %s166
    %p172 = scmp.eq.s32.totalorder %s11, 0
    %p173 = por %p171, %p172
    %p174 = scmp.ne.s32.totalorder %s163, %s166
    %p175 = scmp.eq.s32.totalorder %s16, 5
    %p176 = por %p174, %p175
    %p177 = scmp.ne.s32.totalorder %s166, %s167
    %p178 = scmp.eq.s32.totalorder %s16, 0
    %p179 = por %p177, %p178
    %p180 = scmp.ne.s32.totalorder %s166, %s167
    %p181 = scmp.eq.s32.totalorder %s17, 5
    %p182 = por %p180, %p181
    %p184 = scmp.ne.s32.totalorder %s167, %s183
    %p185 = scmp.eq.s32.totalorder %s17, 0
    %p186 = por %p184, %p185
    %p187 = scmp.le.s32.totalorder 1, %s11
    %p188 = scmp.lt.s32.totalorder %s11, 7
    %p189 = pnand %p187, %p188
    %p190 = pneg %p189
    // Predicated region
    $region9: #{conv_residual_blocks_forward.1} parent=5 // pred_check
      _
    $region10: #{conv_residual_blocks_forward.1} parent=5 // pred_check_branch
      %192 = sbr.rel (%p189) target = $region12
    $region11: #{conv_residual_blocks_forward.1} parent=5 // pred_region
      %s193 = ssub.s32 %s11, 1
    $region12: #{conv_residual_blocks_forward.1} parent=5 // pred_fallthru
      _
    %p194 = scmp.lt.s32.totalorder %s11, 6
    // Predicated region
    $region13: #{conv_residual_blocks_forward.1} parent=5 // pred_check
      %p195 = pneg %p194
    $region14: #{conv_residual_blocks_forward.1} parent=5 // pred_check_branch
      %197 = sbr.rel (%p195) target = $region16
    $region15: #{conv_residual_blocks_forward.1} parent=5 // pred_region
      // Predicated region
      $region17: #{conv_residual_blocks_forward.1} parent=15 // pred_check
        %p198 = pneg %p43
      $region18: #{conv_residual_blocks_forward.1} parent=15 // pred_check_branch
        %200 = sbr.rel (%p198) target = $region20
      $region19: #{conv_residual_blocks_forward.1} parent=15 // pred_region
        %p201 = scmp.lt.s32.totalorder %s18, 1
        %s202 = scalar_select %p201, %s18, 1
        %s203 = smul.addr %s202, 32
        %s204 = smul.addr %s203, 8
        %s205 = scalar_lea.vmem %s0, %s204
      $region20: #{conv_residual_blocks_forward.1} parent=15 // pred_fallthru
        _
      // Predicated region
      $region21: #{conv_residual_blocks_forward.1} parent=15 // pred_check
        %p206 = pneg %p69
      $region22: #{conv_residual_blocks_forward.1} parent=15 // pred_check_branch
        %208 = sbr.rel (%p206) target = $region24
      $region23: #{conv_residual_blocks_forward.1} parent=15 // pred_region
        %p209 = scmp.lt.s32.totalorder %s19, 2
        %s210 = scalar_select %p209, %s19, 2
        %s211 = smul.addr %s210, 36
        %s212 = smul.addr %s211, 8
        %s213 = scalar_lea.vmem %s1, %s212
      $region24: #{conv_residual_blocks_forward.1} parent=15 // pred_fallthru
        _
      // Predicated region
      $region25: #{conv_residual_blocks_forward.1} parent=15 // pred_check
        %p214 = pneg %p95
      $region26: #{conv_residual_blocks_forward.1} parent=15 // pred_check_branch
        %216 = sbr.rel (%p214) target = $region28
      $region27: #{conv_residual_blocks_forward.1} parent=15 // pred_region
        %p217 = scmp.lt.s32.totalorder %s19, 2
        %s218 = scalar_select %p217, %s19, 2
        %s219 = scalar_lea.vmem %s2, %s218
      $region28: #{conv_residual_blocks_forward.1} parent=15 // pred_fallthru
        _
      // Predicated region
      $region29: #{conv_residual_blocks_forward.1} parent=15 // pred_check
        %p220 = pneg %p121
      $region30: #{conv_residual_blocks_forward.1} parent=15 // pred_check_branch
        %222 = sbr.rel (%p220) target = $region32
      $region31: #{conv_residual_blocks_forward.1} parent=15 // pred_region
        %p223 = scmp.lt.s32.totalorder %s19, 2
        %s224 = scalar_select %p223, %s19, 2
        %s225 = smul.addr %s224, 36
        %s226 = smul.addr %s225, 8
        %s227 = scalar_lea.vmem %s3, %s226
      $region32: #{conv_residual_blocks_forward.1} parent=15 // pred_fallthru
        _
      // Predicated region
      $region33: #{conv_residual_blocks_forward.1} parent=15 // pred_check
        %p228 = pneg %p147
      $region34: #{conv_residual_blocks_forward.1} parent=15 // pred_check_branch
        %230 = sbr.rel (%p228) target = $region36
      $region35: #{conv_residual_blocks_forward.1} parent=15 // pred_region
        %p231 = scmp.lt.s32.totalorder %s19, 2
        %s232 = scalar_select %p231, %s19, 2
        %s233 = scalar_lea.vmem %s4, %s232
      $region36: #{conv_residual_blocks_forward.1} parent=15 // pred_fallthru
        _
    $region16: #{conv_residual_blocks_forward.1} parent=5 // pred_fallthru
      _
    %p234 = scmp.le.s32.totalorder 1, %s11
    %p235 = scmp.lt.s32.totalorder %s11, 7
    %p236 = pnand %p234, %p235
    %p237 = pneg %p236
    // Predicated region
    $region37: #{conv_residual_blocks_forward.1} parent=5 // pred_check
      _
    $region38: #{conv_residual_blocks_forward.1} parent=5 // pred_check_branch
      %239 = sbr.rel (%p236) target = $region40
    $region39: #{conv_residual_blocks_forward.1} parent=5 // pred_region
      %s240 = ssub.s32 %s11, 1
      %p241 = scmp.lt.s32.totalorder %s20, 1
      %s242 = scalar_select %p241, %s20, 1
      %s243 = smul.addr %s242, 32
      %s244 = smul.addr %s243, 8
      %s245 = scalar_lea.vmem %s0, %s244
      %p246 = pneg %p49
      %p247 = pneg %p46
      %p248 = scmp.lt.s32.totalorder %s21, 2
      %s249 = scalar_select %p248, %s21, 2
      %s250 = smul.addr %s249, 36
      %s251 = smul.addr %s250, 8
      %s252 = scalar_lea.vmem %s1, %s251
      %p253 = pneg %p75
      %p254 = pneg %p72
      %p255 = scmp.lt.s32.totalorder %s21, 2
      %s256 = scalar_select %p255, %s21, 2
      %s257 = scalar_lea.vmem %s2, %s256
      %p258 = pneg %p101
      %p259 = pneg %p98
      %p260 = scmp.lt.s32.totalorder %s21, 2
      %s261 = scalar_select %p260, %s21, 2
      %s262 = smul.addr %s261, 36
      %s263 = smul.addr %s262, 8
      %s264 = scalar_lea.vmem %s3, %s263
      %p265 = pneg %p127
      %p266 = pneg %p124
      %p267 = scmp.lt.s32.totalorder %s21, 2
      %s268 = scalar_select %p267, %s21, 2
      %s269 = scalar_lea.vmem %s4, %s268
      %p270 = pneg %p153
      %p271 = pneg %p150
      %p272 = pneg %p179
      %p273 = pneg %p176
      %p274 = scmp.lt.s32.totalorder %s20, 1
      %s275 = scalar_select %p274, %s20, 1
      %s276 = smul.addr %s275, 32
      %s277 = smul.addr %s276, 8
      %s278 = scalar_lea.vmem %s5, %s277
      %p279 = scmp.lt.s32.totalorder %s20, 1
      %s280 = scalar_select %p279, %s20, 1
      %s281 = smul.addr %s280, 32
      %s282 = smul.addr %s281, 8
      %s283 = scalar_lea.vmem %s0, %s282
      %p284 = scmp.lt.s32.totalorder %s21, 2
      %s285 = scalar_select %p284, %s21, 2
      %s286 = smul.addr %s285, 36
      %s287 = smul.addr %s286, 8
      %s288 = scalar_lea.vmem %s1, %s287
      %p289 = scmp.lt.s32.totalorder %s21, 2
      %s290 = scalar_select %p289, %s21, 2
      %s291 = scalar_lea.vmem %s2, %s290
      %p292 = scmp.lt.s32.totalorder %s21, 2
      %s293 = scalar_select %p292, %s21, 2
      %s294 = smul.addr %s293, 36
      %s295 = smul.addr %s294, 8
      %s296 = scalar_lea.vmem %s3, %s295
      %p297 = scmp.lt.s32.totalorder %s21, 2
      %s298 = scalar_select %p297, %s21, 2
      %s299 = scalar_lea.vmem %s4, %s298
      %p300 = scmp.lt.s32.totalorder %s20, 1
      %s301 = scalar_select %p300, %s20, 1
      %s302 = smul.addr %s301, 32
      %s303 = smul.addr %s302, 8
      %s304 = scalar_lea.vmem %s5, %s303
      %p305 = scmp.eq.s32.totalorder %s21, 0
      // Predicated region
      $region41: #{conv_residual_blocks_forward.1} parent=39 // pred_check
        %p306 = pneg %p305
      $region42: #{conv_residual_blocks_forward.1} parent=39 // pred_check_branch
        %308 = sbr.rel (%p306) target = $region44
      $region43: #{conv_residual_blocks_forward.1} parent=39 // pred_region
        %vm309 = vcmask 261120
        %310 = vst.msk [vmem:[#allocation2] sm:$0xff] %vm309, 0.0
        %311 = vst.msk [vmem:[#allocation2 + $0x8] sm:$0xff] %vm309, 0.0
        %312 = vst.msk [vmem:[#allocation2 + $0x10] sm:$0xff] %vm309, 0.0
        %vm313 = vcmask 253952
        %314 = vst.msk [vmem:[#allocation2 + $0x18] sm:$0x1] %vm313, 0.0
        %315 = vst.msk [vmem:[#allocation2 + $0x20] sm:$0xff] %vm309, 0.0
        %316 = vst.msk [vmem:[#allocation2 + $0x28] sm:$0xff] %vm309, 0.0
        %317 = vst.msk [vmem:[#allocation2 + $0x30] sm:$0xff] %vm309, 0.0
        %318 = vst.msk [vmem:[#allocation2 + $0x38] sm:$0x1] %vm313, 0.0
        %319 = vst.msk [vmem:[#allocation2 + $0x40] sm:$0xff] %vm309, 0.0
        %320 = vst.msk [vmem:[#allocation2 + $0x48] sm:$0xff] %vm309, 0.0
        %321 = vst.msk [vmem:[#allocation2 + $0x50] sm:$0xff] %vm309, 0.0
        %322 = vst.msk [vmem:[#allocation2 + $0x58] sm:$0x1] %vm313, 0.0
        %323 = vst.msk [vmem:[#allocation2 + $0x60] sm:$0xff] %vm309, 0.0
        %324 = vst.msk [vmem:[#allocation2 + $0x68] sm:$0xff] %vm309, 0.0
        %325 = vst.msk [vmem:[#allocation2 + $0x70] sm:$0xff] %vm309, 0.0
        %326 = vst.msk [vmem:[#allocation2 + $0x78] sm:$0x1] %vm313, 0.0
        %327 = vst.msk [vmem:[#allocation2 + $0x80] sm:$0xff] %vm309, 0.0
        %328 = vst.msk [vmem:[#allocation2 + $0x88] sm:$0xff] %vm309, 0.0
        %329 = vst.msk [vmem:[#allocation2 + $0x90] sm:$0xff] %vm309, 0.0
        %330 = vst.msk [vmem:[#allocation2 + $0x98] sm:$0x1] %vm313, 0.0
        %331 = vst.msk [vmem:[#allocation2 + $0xa0] sm:$0xff] %vm309, 0.0
        %332 = vst.msk [vmem:[#allocation2 + $0xa8] sm:$0xff] %vm309, 0.0
        %333 = vst.msk [vmem:[#allocation2 + $0xb0] sm:$0xff] %vm309, 0.0
        %334 = vst.msk [vmem:[#allocation2 + $0xb8] sm:$0x1] %vm313, 0.0
        %335 = vst.msk [vmem:[#allocation2 + $0xc0] sm:$0xff] %vm309, 0.0
        %336 = vst.msk [vmem:[#allocation2 + $0xc8] sm:$0xff] %vm309, 0.0
        %337 = vst.msk [vmem:[#allocation2 + $0xd0] sm:$0xff] %vm309, 0.0
        %338 = vst.msk [vmem:[#allocation2 + $0xd8] sm:$0x1] %vm313, 0.0
        %339 = vst.msk [vmem:[#allocation2 + $0xe0] sm:$0xff] %vm309, 0.0
        %340 = vst.msk [vmem:[#allocation2 + $0xe8] sm:$0xff] %vm309, 0.0
        %341 = vst.msk [vmem:[#allocation2 + $0xf0] sm:$0xff] %vm309, 0.0
        %342 = vst.msk [vmem:[#allocation2 + $0xf8] sm:$0x1] %vm313, 0.0
        %343 = vst.msk [vmem:[#allocation2 + $0x100] sm:$0xff] %vm309, 0.0
        %344 = vst.msk [vmem:[#allocation2 + $0x108] sm:$0xff] %vm309, 0.0
        %345 = vst.msk [vmem:[#allocation2 + $0x110] sm:$0xff] %vm309, 0.0
        %346 = vst.msk [vmem:[#allocation2 + $0x118] sm:$0x1] %vm313, 0.0
        %347 = vst.msk [vmem:[#allocation2 + $0x120] sm:$0xff] %vm309, 0.0
        %348 = vst.msk [vmem:[#allocation2 + $0x128] sm:$0xff] %vm309, 0.0
        %349 = vst.msk [vmem:[#allocation2 + $0x130] sm:$0xff] %vm309, 0.0
        %350 = vst.msk [vmem:[#allocation2 + $0x138] sm:$0x1] %vm313, 0.0
        %351 = vst.msk [vmem:[#allocation2 + $0x140] sm:$0xff] %vm309, 0.0
        %352 = vst.msk [vmem:[#allocation2 + $0x148] sm:$0xff] %vm309, 0.0
        %353 = vst.msk [vmem:[#allocation2 + $0x150] sm:$0xff] %vm309, 0.0
        %354 = vst.msk [vmem:[#allocation2 + $0x158] sm:$0x1] %vm313, 0.0
        %355 = vst.msk [vmem:[#allocation2 + $0x160] sm:$0xff] %vm309, 0.0
        %356 = vst.msk [vmem:[#allocation2 + $0x168] sm:$0xff] %vm309, 0.0
        %357 = vst.msk [vmem:[#allocation2 + $0x170] sm:$0xff] %vm309, 0.0
        %358 = vst.msk [vmem:[#allocation2 + $0x178] sm:$0x1] %vm313, 0.0
        %359 = vst.msk [vmem:[#allocation2 + $0x180] sm:$0xff] %vm309, 0.0
        %360 = vst.msk [vmem:[#allocation2 + $0x188] sm:$0xff] %vm309, 0.0
        %361 = vst.msk [vmem:[#allocation2 + $0x190] sm:$0xff] %vm309, 0.0
        %362 = vst.msk [vmem:[#allocation2 + $0x198] sm:$0x1] %vm313, 0.0
        %363 = vst.msk [vmem:[#allocation2 + $0x1a0] sm:$0xff] %vm309, 0.0
        %364 = vst.msk [vmem:[#allocation2 + $0x1a8] sm:$0xff] %vm309, 0.0
        %365 = vst.msk [vmem:[#allocation2 + $0x1b0] sm:$0xff] %vm309, 0.0
        %366 = vst.msk [vmem:[#allocation2 + $0x1b8] sm:$0x1] %vm313, 0.0
        %367 = vst.msk [vmem:[#allocation2 + $0x1c0] sm:$0xff] %vm309, 0.0
        %368 = vst.msk [vmem:[#allocation2 + $0x1c8] sm:$0xff] %vm309, 0.0
        %369 = vst.msk [vmem:[#allocation2 + $0x1d0] sm:$0xff] %vm309, 0.0
        %370 = vst.msk [vmem:[#allocation2 + $0x1d8] sm:$0x1] %vm313, 0.0
        %371 = vst.msk [vmem:[#allocation2 + $0x1e0] sm:$0xff] %vm309, 0.0
        %372 = vst.msk [vmem:[#allocation2 + $0x1e8] sm:$0xff] %vm309, 0.0
        %373 = vst.msk [vmem:[#allocation2 + $0x1f0] sm:$0xff] %vm309, 0.0
        %374 = vst.msk [vmem:[#allocation2 + $0x1f8] sm:$0x1] %vm313, 0.0
        %375 = vst.msk [vmem:[#allocation2 + $0x200] sm:$0xff] %vm309, 0.0
        %376 = vst.msk [vmem:[#allocation2 + $0x208] sm:$0xff] %vm309, 0.0
        %377 = vst.msk [vmem:[#allocation2 + $0x210] sm:$0xff] %vm309, 0.0
        %378 = vst.msk [vmem:[#allocation2 + $0x218] sm:$0x1] %vm313, 0.0
        %379 = vst.msk [vmem:[#allocation2 + $0x220] sm:$0xff] %vm309, 0.0
        %380 = vst.msk [vmem:[#allocation2 + $0x228] sm:$0xff] %vm309, 0.0
        %381 = vst.msk [vmem:[#allocation2 + $0x230] sm:$0xff] %vm309, 0.0
        %382 = vst.msk [vmem:[#allocation2 + $0x238] sm:$0x1] %vm313, 0.0
        %v383 = vld [vmem:[%s283] sm:$0xff]
        %v384 = vld [vmem:[%s283 + $0x8] sm:$0xff]
        %v385 = vld [vmem:[%s283 + $0x10] sm:$0xff]
        %v386 = vld [vmem:[%s283 + $0x18] sm:$0xff]
        %v387 = vld [vmem:[%s283 + $0x20] sm:$0xff]
        %v388 = vld [vmem:[%s283 + $0x28] sm:$0xff]
        %v389 = vld [vmem:[%s283 + $0x30] sm:$0xff]
        %v390 = vld [vmem:[%s283 + $0x38] sm:$0xff]
        %v391 = vld [vmem:[%s283 + $0x40] sm:$0xff]
        %v392 = vld [vmem:[%s283 + $0x48] sm:$0xff]
        %v393 = vld [vmem:[%s283 + $0x50] sm:$0xff]
        %v394 = vld [vmem:[%s283 + $0x58] sm:$0xff]
        %v395 = vld [vmem:[%s283 + $0x60] sm:$0xff]
        %v396 = vld [vmem:[%s283 + $0x68] sm:$0xff]
        %v397 = vld [vmem:[%s283 + $0x70] sm:$0xff]
        %v398 = vld [vmem:[%s283 + $0x78] sm:$0xff]
        %v399 = vld [vmem:[%s283 + $0x80] sm:$0xff]
        %v400 = vld [vmem:[%s283 + $0x88] sm:$0xff]
        %v401 = vld [vmem:[%s283 + $0x90] sm:$0xff]
        %v402 = vld [vmem:[%s283 + $0x98] sm:$0xff]
        %v403 = vld [vmem:[%s283 + $0xa0] sm:$0xff]
        %v404 = vld [vmem:[%s283 + $0xa8] sm:$0xff]
        %v405 = vld [vmem:[%s283 + $0xb0] sm:$0xff]
        %v406 = vld [vmem:[%s283 + $0xb8] sm:$0xff]
        %v407 = vld [vmem:[%s283 + $0xc0] sm:$0xff]
        %v408 = vld [vmem:[%s283 + $0xc8] sm:$0xff]
        %v409 = vld [vmem:[%s283 + $0xd0] sm:$0xff]
        %v410 = vld [vmem:[%s283 + $0xd8] sm:$0xff]
        %v411 = vld [vmem:[%s283 + $0xe0] sm:$0xff]
        %v412 = vld [vmem:[%s283 + $0xe8] sm:$0xff]
        %v413 = vld [vmem:[%s283 + $0xf0] sm:$0xff]
        %v414 = vld [vmem:[%s283 + $0xf8] sm:$0xff]
        %415 = vst.msk [vmem:[#allocation4] sm:$0xff] %vm309, %v383
        %416 = vst.msk [vmem:[#allocation4 + $0x8] sm:$0xff] %vm309, %v384
        %417 = vst.msk [vmem:[#allocation4 + $0x10] sm:$0xff] %vm309, %v385
        %418 = vst.msk [vmem:[#allocation4 + $0x18] sm:$0xff] %vm309, %v386
        %419 = vst.msk [vmem:[#allocation4 + $0x20] sm:$0xff] %vm309, %v387
        %420 = vst.msk [vmem:[#allocation4 + $0x28] sm:$0xff] %vm309, %v388
        %421 = vst.msk [vmem:[#allocation4 + $0x30] sm:$0xff] %vm309, %v389
        %422 = vst.msk [vmem:[#allocation4 + $0x38] sm:$0xff] %vm309, %v390
        %423 = vst.msk [vmem:[#allocation4 + $0x40] sm:$0xff] %vm309, %v391
        %424 = vst.msk [vmem:[#allocation4 + $0x48] sm:$0xff] %vm309, %v392
        %425 = vst.msk [vmem:[#allocation4 + $0x50] sm:$0xff] %vm309, %v393
        %426 = vst.msk [vmem:[#allocation4 + $0x58] sm:$0xff] %vm309, %v394
        %427 = vst.msk [vmem:[#allocation4 + $0x60] sm:$0xff] %vm309, %v395
        %428 = vst.msk [vmem:[#allocation4 + $0x68] sm:$0xff] %vm309, %v396
        %429 = vst.msk [vmem:[#allocation4 + $0x70] sm:$0xff] %vm309, %v397
        %430 = vst.msk [vmem:[#allocation4 + $0x78] sm:$0xff] %vm309, %v398
        %431 = vst.msk [vmem:[#allocation4 + $0x80] sm:$0xff] %vm309, %v399
        %432 = vst.msk [vmem:[#allocation4 + $0x88] sm:$0xff] %vm309, %v400
        %433 = vst.msk [vmem:[#allocation4 + $0x90] sm:$0xff] %vm309, %v401
        %434 = vst.msk [vmem:[#allocation4 + $0x98] sm:$0xff] %vm309, %v402
        %435 = vst.msk [vmem:[#allocation4 + $0xa0] sm:$0xff] %vm309, %v403
        %436 = vst.msk [vmem:[#allocation4 + $0xa8] sm:$0xff] %vm309, %v404
        %437 = vst.msk [vmem:[#allocation4 + $0xb0] sm:$0xff] %vm309, %v405
        %438 = vst.msk [vmem:[#allocation4 + $0xb8] sm:$0xff] %vm309, %v406
        %439 = vst.msk [vmem:[#allocation4 + $0xc0] sm:$0xff] %vm309, %v407
        %440 = vst.msk [vmem:[#allocation4 + $0xc8] sm:$0xff] %vm309, %v408
        %441 = vst.msk [vmem:[#allocation4 + $0xd0] sm:$0xff] %vm309, %v409
        %442 = vst.msk [vmem:[#allocation4 + $0xd8] sm:$0xff] %vm309, %v410
        %443 = vst.msk [vmem:[#allocation4 + $0xe0] sm:$0xff] %vm309, %v411
        %444 = vst.msk [vmem:[#allocation4 + $0xe8] sm:$0xff] %vm309, %v412
        %445 = vst.msk [vmem:[#allocation4 + $0xf0] sm:$0xff] %vm309, %v413
        %446 = vst.msk [vmem:[#allocation4 + $0xf8] sm:$0xff] %vm309, %v414
      $region44: #{conv_residual_blocks_forward.1} parent=39 // pred_fallthru
        _
      %v447 = vld [vmem:[#allocation4] sm:$0xff]
      %v448 = vld [vmem:[#allocation4 + $0x8] sm:$0xff]
      %v449 = vld [vmem:[#allocation4 + $0x10] sm:$0xff]
      %v450 = vld [vmem:[#allocation4 + $0x18] sm:$0xff]
      %v451 = vld [vmem:[#allocation4 + $0x20] sm:$0xff]
      %v452 = vld [vmem:[#allocation4 + $0x28] sm:$0xff]
      %v453 = vld [vmem:[#allocation4 + $0x30] sm:$0xff]
      %v454 = vld [vmem:[#allocation4 + $0x38] sm:$0xff]
      %v455 = vld [vmem:[#allocation4 + $0x40] sm:$0xff]
      %v456 = vld [vmem:[#allocation4 + $0x48] sm:$0xff]
      %v457 = vld [vmem:[#allocation4 + $0x50] sm:$0xff]
      %v458 = vld [vmem:[#allocation4 + $0x58] sm:$0xff]
      %v459 = vld [vmem:[#allocation4 + $0x60] sm:$0xff]
      %v460 = vld [vmem:[#allocation4 + $0x68] sm:$0xff]
      %v461 = vld [vmem:[#allocation4 + $0x70] sm:$0xff]
      %v462 = vld [vmem:[#allocation4 + $0x78] sm:$0xff]
      %v463 = vld [vmem:[#allocation4 + $0x80] sm:$0xff]
      %v464 = vld [vmem:[#allocation4 + $0x88] sm:$0xff]
      %v465 = vld [vmem:[#allocation4 + $0x90] sm:$0xff]
      %v466 = vld [vmem:[#allocation4 + $0x98] sm:$0xff]
      %v467 = vld [vmem:[#allocation4 + $0xa0] sm:$0xff]
      %v468 = vld [vmem:[#allocation4 + $0xa8] sm:$0xff]
      %v469 = vld [vmem:[#allocation4 + $0xb0] sm:$0xff]
      %v470 = vld [vmem:[#allocation4 + $0xb8] sm:$0xff]
      %v471 = vld [vmem:[#allocation4 + $0xc0] sm:$0xff]
      %v472 = vld [vmem:[#allocation4 + $0xc8] sm:$0xff]
      %v473 = vld [vmem:[#allocation4 + $0xd0] sm:$0xff]
      %v474 = vld [vmem:[#allocation4 + $0xd8] sm:$0xff]
      %v475 = vld [vmem:[#allocation4 + $0xe0] sm:$0xff]
      %v476 = vld [vmem:[#allocation4 + $0xe8] sm:$0xff]
      %v477 = vld [vmem:[#allocation4 + $0xf0] sm:$0xff]
      %v478 = vld [vmem:[#allocation4 + $0xf8] sm:$0xff]
      %s479 = scalar_lea.vmem [#allocation2], 32
      %vm480 = vcmask 261120
      %481 = vst.msk [vmem:[%s479 + $0x8] sm:$0xff] %vm480, %v447
      %482 = vst.msk [vmem:[%s479 + $0x10] sm:$0xff] %vm480, %v448
      %483 = vst.msk [vmem:[%s479 + $0x28] sm:$0xff] %vm480, %v449
      %484 = vst.msk [vmem:[%s479 + $0x30] sm:$0xff] %vm480, %v450
      %485 = vst.msk [vmem:[%s479 + $0x48] sm:$0xff] %vm480, %v451
      %486 = vst.msk [vmem:[%s479 + $0x50] sm:$0xff] %vm480, %v452
      %487 = vst.msk [vmem:[%s479 + $0x68] sm:$0xff] %vm480, %v453
      %488 = vst.msk [vmem:[%s479 + $0x70] sm:$0xff] %vm480, %v454
      %489 = vst.msk [vmem:[%s479 + $0x88] sm:$0xff] %vm480, %v455
      %490 = vst.msk [vmem:[%s479 + $0x90] sm:$0xff] %vm480, %v456
      %491 = vst.msk [vmem:[%s479 + $0xa8] sm:$0xff] %vm480, %v457
      %492 = vst.msk [vmem:[%s479 + $0xb0] sm:$0xff] %vm480, %v458
      %493 = vst.msk [vmem:[%s479 + $0xc8] sm:$0xff] %vm480, %v459
      %494 = vst.msk [vmem:[%s479 + $0xd0] sm:$0xff] %vm480, %v460
      %495 = vst.msk [vmem:[%s479 + $0xe8] sm:$0xff] %vm480, %v461
      %496 = vst.msk [vmem:[%s479 + $0xf0] sm:$0xff] %vm480, %v462
      %497 = vst.msk [vmem:[%s479 + $0x108] sm:$0xff] %vm480, %v463
      %498 = vst.msk [vmem:[%s479 + $0x110] sm:$0xff] %vm480, %v464
      %499 = vst.msk [vmem:[%s479 + $0x128] sm:$0xff] %vm480, %v465
      %500 = vst.msk [vmem:[%s479 + $0x130] sm:$0xff] %vm480, %v466
      %501 = vst.msk [vmem:[%s479 + $0x148] sm:$0xff] %vm480, %v467
      %502 = vst.msk [vmem:[%s479 + $0x150] sm:$0xff] %vm480, %v468
      %503 = vst.msk [vmem:[%s479 + $0x168] sm:$0xff] %vm480, %v469
      %504 = vst.msk [vmem:[%s479 + $0x170] sm:$0xff] %vm480, %v470
      %505 = vst.msk [vmem:[%s479 + $0x188] sm:$0xff] %vm480, %v471
      %506 = vst.msk [vmem:[%s479 + $0x190] sm:$0xff] %vm480, %v472
      %507 = vst.msk [vmem:[%s479 + $0x1a8] sm:$0xff] %vm480, %v473
      %508 = vst.msk [vmem:[%s479 + $0x1b0] sm:$0xff] %vm480, %v474
      %509 = vst.msk [vmem:[%s479 + $0x1c8] sm:$0xff] %vm480, %v475
      %510 = vst.msk [vmem:[%s479 + $0x1d0] sm:$0xff] %vm480, %v476
      %511 = vst.msk [vmem:[%s479 + $0x1e8] sm:$0xff] %vm480, %v477
      %512 = vst.msk [vmem:[%s479 + $0x1f0] sm:$0xff] %vm480, %v478
      %v513 = vld [vmem:[%s288] sm:$0xff]
      %v514 = vld [vmem:[%s288 + $0x8] sm:$0xff]
      %v515 = vld [vmem:[%s288 + $0x10] sm:$0xff]
      %v516 = vld [vmem:[%s288 + $0x18] sm:$0xff]
      %v517 = vld [vmem:[%s288 + $0x20] sm:$0xff]
      %v518 = vld [vmem:[%s288 + $0x28] sm:$0xff]
      %v519 = vld [vmem:[%s288 + $0x30] sm:$0xff]
      %v520 = vld [vmem:[%s288 + $0x38] sm:$0xff]
      %v521 = vld [vmem:[%s288 + $0x40] sm:$0xff]
      %v522 = vld [vmem:[%s288 + $0x48] sm:$0xff]
      %v523 = vld [vmem:[%s288 + $0x50] sm:$0xff]
      %v524 = vld [vmem:[%s288 + $0x58] sm:$0xff]
      %v525 = vld [vmem:[%s288 + $0x60] sm:$0xff]
      %v526 = vld [vmem:[%s288 + $0x68] sm:$0xff]
      %v527 = vld [vmem:[%s288 + $0x70] sm:$0xff]
      %v528 = vld [vmem:[%s288 + $0x78] sm:$0xff]
      %v529 = vld [vmem:[%s288 + $0x80] sm:$0xff]
      %v530 = vld [vmem:[%s288 + $0x88] sm:$0xff]
      %v531 = vld [vmem:[%s288 + $0x90] sm:$0xff]
      %v532 = vld [vmem:[%s288 + $0x98] sm:$0xff]
      %v533 = vld [vmem:[%s288 + $0xa0] sm:$0xff]
      %v534 = vld [vmem:[%s288 + $0xa8] sm:$0xff]
      %v535 = vld [vmem:[%s288 + $0xb0] sm:$0xff]
      %v536 = vld [vmem:[%s288 + $0xb8] sm:$0xff]
      %v537 = vld [vmem:[%s288 + $0xc0] sm:$0xff]
      %v538 = vld [vmem:[%s288 + $0xc8] sm:$0xff]
      %v539 = vld [vmem:[%s288 + $0xd0] sm:$0xff]
      %v540 = vld [vmem:[%s288 + $0xd8] sm:$0xff]
      %v541 = vld [vmem:[%s288 + $0xe0] sm:$0xff]
      %v542 = vld [vmem:[%s288 + $0xe8] sm:$0xff]
      %v543 = vld [vmem:[%s288 + $0xf0] sm:$0xff]
      %v544 = vld [vmem:[%s288 + $0xf8] sm:$0xff]
      %v545 = vld [vmem:[%s288 + $0x100] sm:$0xff]
      %v546 = vld [vmem:[%s288 + $0x108] sm:$0xff]
      %v547 = vld [vmem:[%s288 + $0x110] sm:$0xff]
      %v548 = vld [vmem:[%s288 + $0x118] sm:$0xff]
      %v549 = vld [vmem:[#allocation2 + $0x7] sm:$0xff]
      %v550 = vld [vmem:[#allocation2 + $0xf] sm:$0xff]
      %v551 = vld [vmem:[#allocation2 + $0x27] sm:$0xff]
      %v552 = vld [vmem:[#allocation2 + $0x2f] sm:$0xff]
      %v553 = vld [vmem:[#allocation2 + $0x47] sm:$0xff]
      %v554 = vld [vmem:[#allocation2 + $0x4f] sm:$0xff]
      %v555 = vld [vmem:[#allocation2 + $0x67] sm:$0xff]
      %v556 = vld [vmem:[#allocation2 + $0x6f] sm:$0xff]
      %v557 = vld [vmem:[#allocation2 + $0x87] sm:$0xff]
      %v558 = vld [vmem:[#allocation2 + $0x8f] sm:$0xff]
      %v559 = vld [vmem:[#allocation2 + $0xa7] sm:$0xff]
      %v560 = vld [vmem:[#allocation2 + $0xaf] sm:$0xff]
      %v561 = vld [vmem:[#allocation2 + $0xc7] sm:$0xff]
      %v562 = vld [vmem:[#allocation2 + $0xcf] sm:$0xff]
      %v563 = vld [vmem:[#allocation2 + $0xe7] sm:$0xff]
      %v564 = vld [vmem:[#allocation2 + $0xef] sm:$0xff]
      %v565 = vld [vmem:[#allocation2 + $0x107] sm:$0xff]
      %v566 = vld [vmem:[#allocation2 + $0x10f] sm:$0xff]
      %v567 = vld [vmem:[#allocation2 + $0x127] sm:$0xff]
      %v568 = vld [vmem:[#allocation2 + $0x12f] sm:$0xff]
      %v569 = vld [vmem:[#allocation2 + $0x147] sm:$0xff]
      %v570 = vld [vmem:[#allocation2 + $0x14f] sm:$0xff]
      %v571 = vld [vmem:[#allocation2 + $0x167] sm:$0xff]
      %v572 = vld [vmem:[#allocation2 + $0x16f] sm:$0xff]
      %v573 = vld [vmem:[#allocation2 + $0x187] sm:$0xff]
      %v574 = vld [vmem:[#allocation2 + $0x18f] sm:$0xff]
      %v575 = vld [vmem:[#allocation2 + $0x1a7] sm:$0xff]
      %v576 = vld [vmem:[#allocation2 + $0x1af] sm:$0xff]
      %v577 = vld [vmem:[#allocation2 + $0x1c7] sm:$0xff]
      %v578 = vld [vmem:[#allocation2 + $0x1cf] sm:$0xff]
      %v579 = vld [vmem:[#allocation2 + $0x1e7] sm:$0xff]
      %v580 = vld [vmem:[#allocation2 + $0x1ef] sm:$0xff]
      %581 = vst.msk [vmem:[#allocation3] sm:$0xff] %vm480, %v549
      %582 = vst.msk [vmem:[#allocation3 + $0x8] sm:$0xff] %vm480, %v550
      %583 = vst.msk [vmem:[#allocation3 + $0x10] sm:$0xff] %vm480, %v551
      %584 = vst.msk [vmem:[#allocation3 + $0x18] sm:$0xff] %vm480, %v552
      %585 = vst.msk [vmem:[#allocation3 + $0x20] sm:$0xff] %vm480, %v553
      %586 = vst.msk [vmem:[#allocation3 + $0x28] sm:$0xff] %vm480, %v554
      %587 = vst.msk [vmem:[#allocation3 + $0x30] sm:$0xff] %vm480, %v555
      %588 = vst.msk [vmem:[#allocation3 + $0x38] sm:$0xff] %vm480, %v556
      %589 = vst.msk [vmem:[#allocation3 + $0x40] sm:$0xff] %vm480, %v557
      %590 = vst.msk [vmem:[#allocation3 + $0x48] sm:$0xff] %vm480, %v558
      %591 = vst.msk [vmem:[#allocation3 + $0x50] sm:$0xff] %vm480, %v559
      %592 = vst.msk [vmem:[#allocation3 + $0x58] sm:$0xff] %vm480, %v560
      %593 = vst.msk [vmem:[#allocation3 + $0x60] sm:$0xff] %vm480, %v561
      %594 = vst.msk [vmem:[#allocation3 + $0x68] sm:$0xff] %vm480, %v562
      %595 = vst.msk [vmem:[#allocation3 + $0x70] sm:$0xff] %vm480, %v563
      %596 = vst.msk [vmem:[#allocation3 + $0x78] sm:$0xff] %vm480, %v564
      %597 = vst.msk [vmem:[#allocation3 + $0x80] sm:$0xff] %vm480, %v565
      %598 = vst.msk [vmem:[#allocation3 + $0x88] sm:$0xff] %vm480, %v566
      %599 = vst.msk [vmem:[#allocation3 + $0x90] sm:$0xff] %vm480, %v567
      %600 = vst.msk [vmem:[#allocation3 + $0x98] sm:$0xff] %vm480, %v568
      %601 = vst.msk [vmem:[#allocation3 + $0xa0] sm:$0xff] %vm480, %v569
      %602 = vst.msk [vmem:[#allocation3 + $0xa8] sm:$0xff] %vm480, %v570
      %603 = vst.msk [vmem:[#allocation3 + $0xb0] sm:$0xff] %vm480, %v571
      %604 = vst.msk [vmem:[#allocation3 + $0xb8] sm:$0xff] %vm480, %v572
      %605 = vst.msk [vmem:[#allocation3 + $0xc0] sm:$0xff] %vm480, %v573
      %606 = vst.msk [vmem:[#allocation3 + $0xc8] sm:$0xff] %vm480, %v574
      %607 = vst.msk [vmem:[#allocation3 + $0xd0] sm:$0xff] %vm480, %v575
      %608 = vst.msk [vmem:[#allocation3 + $0xd8] sm:$0xff] %vm480, %v576
      %609 = vst.msk [vmem:[#allocation3 + $0xe0] sm:$0xff] %vm480, %v577
      %610 = vst.msk [vmem:[#allocation3 + $0xe8] sm:$0xff] %vm480, %v578
      %611 = vst.msk [vmem:[#allocation3 + $0xf0] sm:$0xff] %vm480, %v579
      %612 = vst.msk [vmem:[#allocation3 + $0xf8] sm:$0xff] %vm480, %v580
      %v613 = vld [vmem:[#allocation2 + $0x8] sm:$0xff]
      %v614 = vld [vmem:[#allocation2 + $0x10] sm:$0xff]
      %v615 = vld [vmem:[#allocation2 + $0x28] sm:$0xff]
      %v616 = vld [vmem:[#allocation2 + $0x30] sm:$0xff]
      %v617 = vld [vmem:[#allocation2 + $0x48] sm:$0xff]
      %v618 = vld [vmem:[#allocation2 + $0x50] sm:$0xff]
      %v619 = vld [vmem:[#allocation2 + $0x68] sm:$0xff]
      %v620 = vld [vmem:[#allocation2 + $0x70] sm:$0xff]
      %v621 = vld [vmem:[#allocation2 + $0x88] sm:$0xff]
      %v622 = vld [vmem:[#allocation2 + $0x90] sm:$0xff]
      %v623 = vld [vmem:[#allocation2 + $0xa8] sm:$0xff]
      %v624 = vld [vmem:[#allocation2 + $0xb0] sm:$0xff]
      %v625 = vld [vmem:[#allocation2 + $0xc8] sm:$0xff]
      %v626 = vld [vmem:[#allocation2 + $0xd0] sm:$0xff]
      %v627 = vld [vmem:[#allocation2 + $0xe8] sm:$0xff]
      %v628 = vld [vmem:[#allocation2 + $0xf0] sm:$0xff]
      %v629 = vld [vmem:[#allocation2 + $0x108] sm:$0xff]
      %v630 = vld [vmem:[#allocation2 + $0x110] sm:$0xff]
      %v631 = vld [vmem:[#allocation2 + $0x128] sm:$0xff]
      %v632 = vld [vmem:[#allocation2 + $0x130] sm:$0xff]
      %v633 = vld [vmem:[#allocation2 + $0x148] sm:$0xff]
      %v634 = vld [vmem:[#allocation2 + $0x150] sm:$0xff]
      %v635 = vld [vmem:[#allocation2 + $0x168] sm:$0xff]
      %v636 = vld [vmem:[#allocation2 + $0x170] sm:$0xff]
      %v637 = vld [vmem:[#allocation2 + $0x188] sm:$0xff]
      %v638 = vld [vmem:[#allocation2 + $0x190] sm:$0xff]
      %v639 = vld [vmem:[#allocation2 + $0x1a8] sm:$0xff]
      %v640 = vld [vmem:[#allocation2 + $0x1b0] sm:$0xff]
      %v641 = vld [vmem:[#allocation2 + $0x1c8] sm:$0xff]
      %v642 = vld [vmem:[#allocation2 + $0x1d0] sm:$0xff]
      %v643 = vld [vmem:[#allocation2 + $0x1e8] sm:$0xff]
      %v644 = vld [vmem:[#allocation2 + $0x1f0] sm:$0xff]
      %677 = vrot.lane.b32.xlu0 %v613, 32
      %v678 = vpop.permute.xlu0 %677
      %679 = vrot.lane.b32.xlu0 %v614, 32
      %v680 = vpop.permute.xlu0 %679
      %681 = vrot.lane.b32.xlu0 %v615, 32
      %v682 = vpop.permute.xlu0 %681
      %683 = vrot.lane.b32.xlu0 %v616, 32
      %v684 = vpop.permute.xlu0 %683
      %685 = vrot.lane.b32.xlu0 %v617, 32
      %v686 = vpop.permute.xlu0 %685
      %687 = vrot.lane.b32.xlu0 %v618, 32
      %v688 = vpop.permute.xlu0 %687
      %689 = vrot.lane.b32.xlu0 %v619, 32
      %v690 = vpop.permute.xlu0 %689
      %691 = vrot.lane.b32.xlu0 %v620, 32
      %v692 = vpop.permute.xlu0 %691
      %693 = vrot.lane.b32.xlu0 %v621, 32
      %v694 = vpop.permute.xlu0 %693
      %695 = vrot.lane.b32.xlu0 %v622, 32
      %v696 = vpop.permute.xlu0 %695
      %697 = vrot.lane.b32.xlu0 %v623, 32
      %v698 = vpop.permute.xlu0 %697
      %699 = vrot.lane.b32.xlu0 %v624, 32
      %v700 = vpop.permute.xlu0 %699
      %701 = vrot.lane.b32.xlu0 %v625, 32
      %v702 = vpop.permute.xlu0 %701
      %703 = vrot.lane.b32.xlu0 %v626, 32
      %v704 = vpop.permute.xlu0 %703
      %705 = vrot.lane.b32.xlu0 %v627, 32
      %v706 = vpop.permute.xlu0 %705
      %707 = vrot.lane.b32.xlu0 %v628, 32
      %v708 = vpop.permute.xlu0 %707
      %709 = vrot.lane.b32.xlu0 %v629, 32
      %v710 = vpop.permute.xlu0 %709
      %711 = vrot.lane.b32.xlu0 %v630, 32
      %v712 = vpop.permute.xlu0 %711
      %713 = vrot.lane.b32.xlu0 %v631, 32
      %v714 = vpop.permute.xlu0 %713
      %715 = vrot.lane.b32.xlu0 %v632, 32
      %v716 = vpop.permute.xlu0 %715
      %717 = vrot.lane.b32.xlu0 %v633, 32
      %v718 = vpop.permute.xlu0 %717
      %719 = vrot.lane.b32.xlu0 %v634, 32
      %v720 = vpop.permute.xlu0 %719
      %721 = vrot.lane.b32.xlu0 %v635, 32
      %v722 = vpop.permute.xlu0 %721
      %723 = vrot.lane.b32.xlu0 %v636, 32
      %v724 = vpop.permute.xlu0 %723
      %725 = vrot.lane.b32.xlu0 %v637, 32
      %v726 = vpop.permute.xlu0 %725
      %727 = vrot.lane.b32.xlu0 %v638, 32
      %v728 = vpop.permute.xlu0 %727
      %729 = vrot.lane.b32.xlu0 %v639, 32
      %v730 = vpop.permute.xlu0 %729
      %731 = vrot.lane.b32.xlu0 %v640, 32
      %v732 = vpop.permute.xlu0 %731
      %733 = vrot.lane.b32.xlu0 %v641, 32
      %v734 = vpop.permute.xlu0 %733
      %735 = vrot.lane.b32.xlu0 %v642, 32
      %v736 = vpop.permute.xlu0 %735
      %737 = vrot.lane.b32.xlu0 %v643, 32
      %v738 = vpop.permute.xlu0 %737
      %739 = vrot.lane.b32.xlu0 %v644, 32
      %v740 = vpop.permute.xlu0 %739
      %vm773 = vcmask 523520
      %774 = vst.msk [vmem:[#allocation3] sm:$0xff] %vm773, %v678
      %775 = vst.msk [vmem:[#allocation3 + $0x8] sm:$0xff] %vm773, %v680
      %776 = vst.msk [vmem:[#allocation3 + $0x10] sm:$0xff] %vm773, %v682
      %777 = vst.msk [vmem:[#allocation3 + $0x18] sm:$0xff] %vm773, %v684
      %778 = vst.msk [vmem:[#allocation3 + $0x20] sm:$0xff] %vm773, %v686
      %779 = vst.msk [vmem:[#allocation3 + $0x28] sm:$0xff] %vm773, %v688
      %780 = vst.msk [vmem:[#allocation3 + $0x30] sm:$0xff] %vm773, %v690
      %781 = vst.msk [vmem:[#allocation3 + $0x38] sm:$0xff] %vm773, %v692
      %782 = vst.msk [vmem:[#allocation3 + $0x40] sm:$0xff] %vm773, %v694
      %783 = vst.msk [vmem:[#allocation3 + $0x48] sm:$0xff] %vm773, %v696
      %784 = vst.msk [vmem:[#allocation3 + $0x50] sm:$0xff] %vm773, %v698
      %785 = vst.msk [vmem:[#allocation3 + $0x58] sm:$0xff] %vm773, %v700
      %786 = vst.msk [vmem:[#allocation3 + $0x60] sm:$0xff] %vm773, %v702
      %787 = vst.msk [vmem:[#allocation3 + $0x68] sm:$0xff] %vm773, %v704
      %788 = vst.msk [vmem:[#allocation3 + $0x70] sm:$0xff] %vm773, %v706
      %789 = vst.msk [vmem:[#allocation3 + $0x78] sm:$0xff] %vm773, %v708
      %790 = vst.msk [vmem:[#allocation3 + $0x80] sm:$0xff] %vm773, %v710
      %791 = vst.msk [vmem:[#allocation3 + $0x88] sm:$0xff] %vm773, %v712
      %792 = vst.msk [vmem:[#allocation3 + $0x90] sm:$0xff] %vm773, %v714
      %793 = vst.msk [vmem:[#allocation3 + $0x98] sm:$0xff] %vm773, %v716
      %794 = vst.msk [vmem:[#allocation3 + $0xa0] sm:$0xff] %vm773, %v718
      %795 = vst.msk [vmem:[#allocation3 + $0xa8] sm:$0xff] %vm773, %v720
      %796 = vst.msk [vmem:[#allocation3 + $0xb0] sm:$0xff] %vm773, %v722
      %797 = vst.msk [vmem:[#allocation3 + $0xb8] sm:$0xff] %vm773, %v724
      %798 = vst.msk [vmem:[#allocation3 + $0xc0] sm:$0xff] %vm773, %v726
      %799 = vst.msk [vmem:[#allocation3 + $0xc8] sm:$0xff] %vm773, %v728
      %800 = vst.msk [vmem:[#allocation3 + $0xd0] sm:$0xff] %vm773, %v730
      %801 = vst.msk [vmem:[#allocation3 + $0xd8] sm:$0xff] %vm773, %v732
      %802 = vst.msk [vmem:[#allocation3 + $0xe0] sm:$0xff] %vm773, %v734
      %803 = vst.msk [vmem:[#allocation3 + $0xe8] sm:$0xff] %vm773, %v736
      %804 = vst.msk [vmem:[#allocation3 + $0xf0] sm:$0xff] %vm773, %v738
      %805 = vst.msk [vmem:[#allocation3 + $0xf8] sm:$0xff] %vm773, %v740
      %v806 = vld [vmem:[#allocation2 + $0x9] sm:$0xff]
      %v807 = vld [vmem:[#allocation2 + $0x11] sm:$0xff]
      %v808 = vld [vmem:[#allocation2 + $0x29] sm:$0xff]
      %v809 = vld [vmem:[#allocation2 + $0x31] sm:$0xff]
      %v810 = vld [vmem:[#allocation2 + $0x49] sm:$0xff]
      %v811 = vld [vmem:[#allocation2 + $0x51] sm:$0xff]
      %v812 = vld [vmem:[#allocation2 + $0x69] sm:$0xff]
      %v813 = vld [vmem:[#allocation2 + $0x71] sm:$0xff]
      %v814 = vld [vmem:[#allocation2 + $0x89] sm:$0xff]
      %v815 = vld [vmem:[#allocation2 + $0x91] sm:$0xff]
      %v816 = vld [vmem:[#allocation2 + $0xa9] sm:$0xff]
      %v817 = vld [vmem:[#allocation2 + $0xb1] sm:$0xff]
      %v818 = vld [vmem:[#allocation2 + $0xc9] sm:$0xff]
      %v819 = vld [vmem:[#allocation2 + $0xd1] sm:$0xff]
      %v820 = vld [vmem:[#allocation2 + $0xe9] sm:$0xff]
      %v821 = vld [vmem:[#allocation2 + $0xf1] sm:$0xff]
      %v822 = vld [vmem:[#allocation2 + $0x109] sm:$0xff]
      %v823 = vld [vmem:[#allocation2 + $0x111] sm:$0xff]
      %v824 = vld [vmem:[#allocation2 + $0x129] sm:$0xff]
      %v825 = vld [vmem:[#allocation2 + $0x131] sm:$0xff]
      %v826 = vld [vmem:[#allocation2 + $0x149] sm:$0xff]
      %v827 = vld [vmem:[#allocation2 + $0x151] sm:$0xff]
      %v828 = vld [vmem:[#allocation2 + $0x169] sm:$0xff]
      %v829 = vld [vmem:[#allocation2 + $0x171] sm:$0xff]
      %v830 = vld [vmem:[#allocation2 + $0x189] sm:$0xff]
      %v831 = vld [vmem:[#allocation2 + $0x191] sm:$0xff]
      %v832 = vld [vmem:[#allocation2 + $0x1a9] sm:$0xff]
      %v833 = vld [vmem:[#allocation2 + $0x1b1] sm:$0xff]
      %v834 = vld [vmem:[#allocation2 + $0x1c9] sm:$0xff]
      %v835 = vld [vmem:[#allocation2 + $0x1d1] sm:$0xff]
      %v836 = vld [vmem:[#allocation2 + $0x1e9] sm:$0xff]
      %v837 = vld [vmem:[#allocation2 + $0x1f1] sm:$0xff]
      %870 = vrot.lane.b32.xlu0 %v806, 64
      %v871 = vpop.permute.xlu0 %870
      %872 = vrot.lane.b32.xlu0 %v807, 64
      %v873 = vpop.permute.xlu0 %872
      %874 = vrot.lane.b32.xlu0 %v808, 64
      %v875 = vpop.permute.xlu0 %874
      %876 = vrot.lane.b32.xlu0 %v809, 64
      %v877 = vpop.permute.xlu0 %876
      %878 = vrot.lane.b32.xlu0 %v810, 64
      %v879 = vpop.permute.xlu0 %878
      %880 = vrot.lane.b32.xlu0 %v811, 64
      %v881 = vpop.permute.xlu0 %880
      %882 = vrot.lane.b32.xlu0 %v812, 64
      %v883 = vpop.permute.xlu0 %882
      %884 = vrot.lane.b32.xlu0 %v813, 64
      %v885 = vpop.permute.xlu0 %884
      %886 = vrot.lane.b32.xlu0 %v814, 64
      %v887 = vpop.permute.xlu0 %886
      %888 = vrot.lane.b32.xlu0 %v815, 64
      %v889 = vpop.permute.xlu0 %888
      %890 = vrot.lane.b32.xlu0 %v816, 64
      %v891 = vpop.permute.xlu0 %890
      %892 = vrot.lane.b32.xlu0 %v817, 64
      %v893 = vpop.permute.xlu0 %892
      %894 = vrot.lane.b32.xlu0 %v818, 64
      %v895 = vpop.permute.xlu0 %894
      %896 = vrot.lane.b32.xlu0 %v819, 64
      %v897 = vpop.permute.xlu0 %896
      %898 = vrot.lane.b32.xlu0 %v820, 64
      %v899 = vpop.permute.xlu0 %898
      %900 = vrot.lane.b32.xlu0 %v821, 64
      %v901 = vpop.permute.xlu0 %900
      %902 = vrot.lane.b32.xlu0 %v822, 64
      %v903 = vpop.permute.xlu0 %902
      %904 = vrot.lane.b32.xlu0 %v823, 64
      %v905 = vpop.permute.xlu0 %904
      %906 = vrot.lane.b32.xlu0 %v824, 64
      %v907 = vpop.permute.xlu0 %906
      %908 = vrot.lane.b32.xlu0 %v825, 64
      %v909 = vpop.permute.xlu0 %908
      %910 = vrot.lane.b32.xlu0 %v826, 64
      %v911 = vpop.permute.xlu0 %910
      %912 = vrot.lane.b32.xlu0 %v827, 64
      %v913 = vpop.permute.xlu0 %912
      %914 = vrot.lane.b32.xlu0 %v828, 64
      %v915 = vpop.permute.xlu0 %914
      %916 = vrot.lane.b32.xlu0 %v829, 64
      %v917 = vpop.permute.xlu0 %916
      %918 = vrot.lane.b32.xlu0 %v830, 64
      %v919 = vpop.permute.xlu0 %918
      %920 = vrot.lane.b32.xlu0 %v831, 64
      %v921 = vpop.permute.xlu0 %920
      %922 = vrot.lane.b32.xlu0 %v832, 64
      %v923 = vpop.permute.xlu0 %922
      %924 = vrot.lane.b32.xlu0 %v833, 64
      %v925 = vpop.permute.xlu0 %924
      %926 = vrot.lane.b32.xlu0 %v834, 64
      %v927 = vpop.permute.xlu0 %926
      %928 = vrot.lane.b32.xlu0 %v835, 64
      %v929 = vpop.permute.xlu0 %928
      %930 = vrot.lane.b32.xlu0 %v836, 64
      %v931 = vpop.permute.xlu0 %930
      %932 = vrot.lane.b32.xlu0 %v837, 64
      %v933 = vpop.permute.xlu0 %932
      %vm966 = vcmask 785920
      %967 = vst.msk [vmem:[#allocation3] sm:$0xff] %vm966, %v871
      %968 = vst.msk [vmem:[#allocation3 + $0x8] sm:$0xff] %vm966, %v873
      %969 = vst.msk [vmem:[#allocation3 + $0x10] sm:$0xff] %vm966, %v875
      %970 = vst.msk [vmem:[#allocation3 + $0x18] sm:$0xff] %vm966, %v877
      %971 = vst.msk [vmem:[#allocation3 + $0x20] sm:$0xff] %vm966, %v879
      %972 = vst.msk [vmem:[#allocation3 + $0x28] sm:$0xff] %vm966, %v881
      %973 = vst.msk [vmem:[#allocation3 + $0x30] sm:$0xff] %vm966, %v883
      %974 = vst.msk [vmem:[#allocation3 + $0x38] sm:$0xff] %vm966, %v885
      %975 = vst.msk [vmem:[#allocation3 + $0x40] sm:$0xff] %vm966, %v887
      %976 = vst.msk [vmem:[#allocation3 + $0x48] sm:$0xff] %vm966, %v889
      %977 = vst.msk [vmem:[#allocation3 + $0x50] sm:$0xff] %vm966, %v891
      %978 = vst.msk [vmem:[#allocation3 + $0x58] sm:$0xff] %vm966, %v893
      %979 = vst.msk [vmem:[#allocation3 + $0x60] sm:$0xff] %vm966, %v895
      %980 = vst.msk [vmem:[#allocation3 + $0x68] sm:$0xff] %vm966, %v897
      %981 = vst.msk [vmem:[#allocation3 + $0x70] sm:$0xff] %vm966, %v899
      %982 = vst.msk [vmem:[#allocation3 + $0x78] sm:$0xff] %vm966, %v901
      %983 = vst.msk [vmem:[#allocation3 + $0x80] sm:$0xff] %vm966, %v903
      %984 = vst.msk [vmem:[#allocation3 + $0x88] sm:$0xff] %vm966, %v905
      %985 = vst.msk [vmem:[#allocation3 + $0x90] sm:$0xff] %vm966, %v907
      %986 = vst.msk [vmem:[#allocation3 + $0x98] sm:$0xff] %vm966, %v909
      %987 = vst.msk [vmem:[#allocation3 + $0xa0] sm:$0xff] %vm966, %v911
      %988 = vst.msk [vmem:[#allocation3 + $0xa8] sm:$0xff] %vm966, %v913
      %989 = vst.msk [vmem:[#allocation3 + $0xb0] sm:$0xff] %vm966, %v915
      %990 = vst.msk [vmem:[#allocation3 + $0xb8] sm:$0xff] %vm966, %v917
      %991 = vst.msk [vmem:[#allocation3 + $0xc0] sm:$0xff] %vm966, %v919
      %992 = vst.msk [vmem:[#allocation3 + $0xc8] sm:$0xff] %vm966, %v921
      %993 = vst.msk [vmem:[#allocation3 + $0xd0] sm:$0xff] %vm966, %v923
      %994 = vst.msk [vmem:[#allocation3 + $0xd8] sm:$0xff] %vm966, %v925
      %995 = vst.msk [vmem:[#allocation3 + $0xe0] sm:$0xff] %vm966, %v927
      %996 = vst.msk [vmem:[#allocation3 + $0xe8] sm:$0xff] %vm966, %v929
      %997 = vst.msk [vmem:[#allocation3 + $0xf0] sm:$0xff] %vm966, %v931
      %998 = vst.msk [vmem:[#allocation3 + $0xf8] sm:$0xff] %vm966, %v933
      %v999 = vld [vmem:[#allocation3] sm:$0xff]
      %v1000 = vld [vmem:[#allocation3 + $0x8] sm:$0xff]
      %v1001 = vld [vmem:[#allocation3 + $0x10] sm:$0xff]
      %v1002 = vld [vmem:[#allocation3 + $0x18] sm:$0xff]
      %v1003 = vld [vmem:[#allocation3 + $0x20] sm:$0xff]
      %v1004 = vld [vmem:[#allocation3 + $0x28] sm:$0xff]
      %v1005 = vld [vmem:[#allocation3 + $0x30] sm:$0xff]
      %v1006 = vld [vmem:[#allocation3 + $0x38] sm:$0xff]
      %v1007 = vld [vmem:[#allocation3 + $0x40] sm:$0xff]
      %v1008 = vld [vmem:[#allocation3 + $0x48] sm:$0xff]
      %v1009 = vld [vmem:[#allocation3 + $0x50] sm:$0xff]
      %v1010 = vld [vmem:[#allocation3 + $0x58] sm:$0xff]
      %v1011 = vld [vmem:[#allocation3 + $0x60] sm:$0xff]
      %v1012 = vld [vmem:[#allocation3 + $0x68] sm:$0xff]
      %v1013 = vld [vmem:[#allocation3 + $0x70] sm:$0xff]
      %v1014 = vld [vmem:[#allocation3 + $0x78] sm:$0xff]
      %v1015 = vld [vmem:[#allocation3 + $0x80] sm:$0xff]
      %v1016 = vld [vmem:[#allocation3 + $0x88] sm:$0xff]
      %v1017 = vld [vmem:[#allocation3 + $0x90] sm:$0xff]
      %v1018 = vld [vmem:[#allocation3 + $0x98] sm:$0xff]
      %v1019 = vld [vmem:[#allocation3 + $0xa0] sm:$0xff]
      %v1020 = vld [vmem:[#allocation3 + $0xa8] sm:$0xff]
      %v1021 = vld [vmem:[#allocation3 + $0xb0] sm:$0xff]
      %v1022 = vld [vmem:[#allocation3 + $0xb8] sm:$0xff]
      %v1023 = vld [vmem:[#allocation3 + $0xc0] sm:$0xff]
      %v1024 = vld [vmem:[#allocation3 + $0xc8] sm:$0xff]
      %v1025 = vld [vmem:[#allocation3 + $0xd0] sm:$0xff]
      %v1026 = vld [vmem:[#allocation3 + $0xd8] sm:$0xff]
      %v1027 = vld [vmem:[#allocation3 + $0xe0] sm:$0xff]
      %v1028 = vld [vmem:[#allocation3 + $0xe8] sm:$0xff]
      %v1029 = vld [vmem:[#allocation3 + $0xf0] sm:$0xff]
      %v1030 = vld [vmem:[#allocation3 + $0xf8] sm:$0xff]
      %v1031 = vld [vmem:[%s479 + $0x7] sm:$0xff]
      %v1032 = vld [vmem:[%s479 + $0xf] sm:$0xff]
      %v1033 = vld [vmem:[%s479 + $0x27] sm:$0xff]
      %v1034 = vld [vmem:[%s479 + $0x2f] sm:$0xff]
      %v1035 = vld [vmem:[%s479 + $0x47] sm:$0xff]
      %v1036 = vld [vmem:[%s479 + $0x4f] sm:$0xff]
      %v1037 = vld [vmem:[%s479 + $0x67] sm:$0xff]
      %v1038 = vld [vmem:[%s479 + $0x6f] sm:$0xff]
      %v1039 = vld [vmem:[%s479 + $0x87] sm:$0xff]
      %v1040 = vld [vmem:[%s479 + $0x8f] sm:$0xff]
      %v1041 = vld [vmem:[%s479 + $0xa7] sm:$0xff]
      %v1042 = vld [vmem:[%s479 + $0xaf] sm:$0xff]
      %v1043 = vld [vmem:[%s479 + $0xc7] sm:$0xff]
      %v1044 = vld [vmem:[%s479 + $0xcf] sm:$0xff]
      %v1045 = vld [vmem:[%s479 + $0xe7] sm:$0xff]
      %v1046 = vld [vmem:[%s479 + $0xef] sm:$0xff]
      %v1047 = vld [vmem:[%s479 + $0x107] sm:$0xff]
      %v1048 = vld [vmem:[%s479 + $0x10f] sm:$0xff]
      %v1049 = vld [vmem:[%s479 + $0x127] sm:$0xff]
      %v1050 = vld [vmem:[%s479 + $0x12f] sm:$0xff]
      %v1051 = vld [vmem:[%s479 + $0x147] sm:$0xff]
      %v1052 = vld [vmem:[%s479 + $0x14f] sm:$0xff]
      %v1053 = vld [vmem:[%s479 + $0x167] sm:$0xff]
      %v1054 = vld [vmem:[%s479 + $0x16f] sm:$0xff]
      %v1055 = vld [vmem:[%s479 + $0x187] sm:$0xff]
      %v1056 = vld [vmem:[%s479 + $0x18f] sm:$0xff]
      %v1057 = vld [vmem:[%s479 + $0x1a7] sm:$0xff]
      %v1058 = vld [vmem:[%s479 + $0x1af] sm:$0xff]
      %v1059 = vld [vmem:[%s479 + $0x1c7] sm:$0xff]
      %v1060 = vld [vmem:[%s479 + $0x1cf] sm:$0xff]
      %v1061 = vld [vmem:[%s479 + $0x1e7] sm:$0xff]
      %v1062 = vld [vmem:[%s479 + $0x1ef] sm:$0xff]
      %1063 = vst.msk [vmem:[#allocation3] sm:$0xff] %vm480, %v1031
      %1064 = vst.msk [vmem:[#allocation3 + $0x8] sm:$0xff] %vm480, %v1032
      %1065 = vst.msk [vmem:[#allocation3 + $0x10] sm:$0xff] %vm480, %v1033
      %1066 = vst.msk [vmem:[#allocation3 + $0x18] sm:$0xff] %vm480, %v1034
      %1067 = vst.msk [vmem:[#allocation3 + $0x20] sm:$0xff] %vm480, %v1035
      %1068 = vst.msk [vmem:[#allocation3 + $0x28] sm:$0xff] %vm480, %v1036
      %1069 = vst.msk [vmem:[#allocation3 + $0x30] sm:$0xff] %vm480, %v1037
      %1070 = vst.msk [vmem:[#allocation3 + $0x38] sm:$0xff] %vm480, %v1038
      %1071 = vst.msk [vmem:[#allocation3 + $0x40] sm:$0xff] %vm480, %v1039
      %1072 = vst.msk [vmem:[#allocation3 + $0x48] sm:$0xff] %vm480, %v1040
      %1073 = vst.msk [vmem:[#allocation3 + $0x50] sm:$0xff] %vm480, %v1041
      %1074 = vst.msk [vmem:[#allocation3 + $0x58] sm:$0xff] %vm480, %v1042
      %1075 = vst.msk [vmem:[#allocation3 + $0x60] sm:$0xff] %vm480, %v1043
      %1076 = vst.msk [vmem:[#allocation3 + $0x68] sm:$0xff] %vm480, %v1044
      %1077 = vst.msk [vmem:[#allocation3 + $0x70] sm:$0xff] %vm480, %v1045
      %1078 = vst.msk [vmem:[#allocation3 + $0x78] sm:$0xff] %vm480, %v1046
      %1079 = vst.msk [vmem:[#allocation3 + $0x80] sm:$0xff] %vm480, %v1047
      %1080 = vst.msk [vmem:[#allocation3 + $0x88] sm:$0xff] %vm480, %v1048
      %1081 = vst.msk [vmem:[#allocation3 + $0x90] sm:$0xff] %vm480, %v1049
      %1082 = vst.msk [vmem:[#allocation3 + $0x98] sm:$0xff] %vm480, %v1050
      %1083 = vst.msk [vmem:[#allocation3 + $0xa0] sm:$0xff] %vm480, %v1051
      %1084 = vst.msk [vmem:[#allocation3 + $0xa8] sm:$0xff] %vm480, %v1052
      %1085 = vst.msk [vmem:[#allocation3 + $0xb0] sm:$0xff] %vm480, %v1053
      %1086 = vst.msk [vmem:[#allocation3 + $0xb8] sm:$0xff] %vm480, %v1054
      %1087 = vst.msk [vmem:[#allocation3 + $0xc0] sm:$0xff] %vm480, %v1055
      %1088 = vst.msk [vmem:[#allocation3 + $0xc8] sm:$0xff] %vm480, %v1056
      %1089 = vst.msk [vmem:[#allocation3 + $0xd0] sm:$0xff] %vm480, %v1057
      %1090 = vst.msk [vmem:[#allocation3 + $0xd8] sm:$0xff] %vm480, %v1058
      %1091 = vst.msk [vmem:[#allocation3 + $0xe0] sm:$0xff] %vm480, %v1059
      %1092 = vst.msk [vmem:[#allocation3 + $0xe8] sm:$0xff] %vm480, %v1060
      %1093 = vst.msk [vmem:[#allocation3 + $0xf0] sm:$0xff] %vm480, %v1061
      %1094 = vst.msk [vmem:[#allocation3 + $0xf8] sm:$0xff] %vm480, %v1062
      %v1095 = vld [vmem:[%s479 + $0x8] sm:$0xff]
      %v1096 = vld [vmem:[%s479 + $0x10] sm:$0xff]
      %v1097 = vld [vmem:[%s479 + $0x28] sm:$0xff]
      %v1098 = vld [vmem:[%s479 + $0x30] sm:$0xff]
      %v1099 = vld [vmem:[%s479 + $0x48] sm:$0xff]
      %v1100 = vld [vmem:[%s479 + $0x50] sm:$0xff]
      %v1101 = vld [vmem:[%s479 + $0x68] sm:$0xff]
      %v1102 = vld [vmem:[%s479 + $0x70] sm:$0xff]
      %v1103 = vld [vmem:[%s479 + $0x88] sm:$0xff]
      %v1104 = vld [vmem:[%s479 + $0x90] sm:$0xff]
      %v1105 = vld [vmem:[%s479 + $0xa8] sm:$0xff]
      %v1106 = vld [vmem:[%s479 + $0xb0] sm:$0xff]
      %v1107 = vld [vmem:[%s479 + $0xc8] sm:$0xff]
      %v1108 = vld [vmem:[%s479 + $0xd0] sm:$0xff]
      %v1109 = vld [vmem:[%s479 + $0xe8] sm:$0xff]
      %v1110 = vld [vmem:[%s479 + $0xf0] sm:$0xff]
      %v1111 = vld [vmem:[%s479 + $0x108] sm:$0xff]
      %v1112 = vld [vmem:[%s479 + $0x110] sm:$0xff]
      %v1113 = vld [vmem:[%s479 + $0x128] sm:$0xff]
      %v1114 = vld [vmem:[%s479 + $0x130] sm:$0xff]
      %v1115 = vld [vmem:[%s479 + $0x148] sm:$0xff]
      %v1116 = vld [vmem:[%s479 + $0x150] sm:$0xff]
      %v1117 = vld [vmem:[%s479 + $0x168] sm:$0xff]
      %v1118 = vld [vmem:[%s479 + $0x170] sm:$0xff]
      %v1119 = vld [vmem:[%s479 + $0x188] sm:$0xff]
      %v1120 = vld [vmem:[%s479 + $0x190] sm:$0xff]
      %v1121 = vld [vmem:[%s479 + $0x1a8] sm:$0xff]
      %v1122 = vld [vmem:[%s479 + $0x1b0] sm:$0xff]
      %v1123 = vld [vmem:[%s479 + $0x1c8] sm:$0xff]
      %v1124 = vld [vmem:[%s479 + $0x1d0] sm:$0xff]
      %v1125 = vld [vmem:[%s479 + $0x1e8] sm:$0xff]
      %v1126 = vld [vmem:[%s479 + $0x1f0] sm:$0xff]
      %1159 = vrot.lane.b32.xlu0 %v1095, 32
      %v1160 = vpop.permute.xlu0 %1159
      %1161 = vrot.lane.b32.xlu0 %v1096, 32
      %v1162 = vpop.permute.xlu0 %1161
      %1163 = vrot.lane.b32.xlu0 %v1097, 32
      %v1164 = vpop.permute.xlu0 %1163
      %1165 = vrot.lane.b32.xlu0 %v1098, 32
      %v1166 = vpop.permute.xlu0 %1165
      %1167 = vrot.lane.b32.xlu0 %v1099, 32
      %v1168 = vpop.permute.xlu0 %1167
      %1169 = vrot.lane.b32.xlu0 %v1100, 32
      %v1170 = vpop.permute.xlu0 %1169
      %1171 = vrot.lane.b32.xlu0 %v1101, 32
      %v1172 = vpop.permute.xlu0 %1171
      %1173 = vrot.lane.b32.xlu0 %v1102, 32
      %v1174 = vpop.permute.xlu0 %1173
      %1175 = vrot.lane.b32.xlu0 %v1103, 32
      %v1176 = vpop.permute.xlu0 %1175
      %1177 = vrot.lane.b32.xlu0 %v1104, 32
      %v1178 = vpop.permute.xlu0 %1177
      %1179 = vrot.lane.b32.xlu0 %v1105, 32
      %v1180 = vpop.permute.xlu0 %1179
      %1181 = vrot.lane.b32.xlu0 %v1106, 32
      %v1182 = vpop.permute.xlu0 %1181
      %1183 = vrot.lane.b32.xlu0 %v1107, 32
      %v1184 = vpop.permute.xlu0 %1183
      %1185 = vrot.lane.b32.xlu0 %v1108, 32
      %v1186 = vpop.permute.xlu0 %1185
      %1187 = vrot.lane.b32.xlu0 %v1109, 32
      %v1188 = vpop.permute.xlu0 %1187
      %1189 = vrot.lane.b32.xlu0 %v1110, 32
      %v1190 = vpop.permute.xlu0 %1189
      %1191 = vrot.lane.b32.xlu0 %v1111, 32
      %v1192 = vpop.permute.xlu0 %1191
      %1193 = vrot.lane.b32.xlu0 %v1112, 32
      %v1194 = vpop.permute.xlu0 %1193
      %1195 = vrot.lane.b32.xlu0 %v1113, 32
      %v1196 = vpop.permute.xlu0 %1195
      %1197 = vrot.lane.b32.xlu0 %v1114, 32
      %v1198 = vpop.permute.xlu0 %1197
      %1199 = vrot.lane.b32.xlu0 %v1115, 32
      %v1200 = vpop.permute.xlu0 %1199
      %1201 = vrot.lane.b32.xlu0 %v1116, 32
      %v1202 = vpop.permute.xlu0 %1201
      %1203 = vrot.lane.b32.xlu0 %v1117, 32
      %v1204 = vpop.permute.xlu0 %1203
      %1205 = vrot.lane.b32.xlu0 %v1118, 32
      %v1206 = vpop.permute.xlu0 %1205
      %1207 = vrot.lane.b32.xlu0 %v1119, 32
      %v1208 = vpop.permute.xlu0 %1207
      %1209 = vrot.lane.b32.xlu0 %v1120, 32
      %v1210 = vpop.permute.xlu0 %1209
      %1211 = vrot.lane.b32.xlu0 %v1121, 32
      %v1212 = vpop.permute.xlu0 %1211
      %1213 = vrot.lane.b32.xlu0 %v1122, 32
      %v1214 = vpop.permute.xlu0 %1213
      %1215 = vrot.lane.b32.xlu0 %v1123, 32
      %v1216 = vpop.permute.xlu0 %1215
      %1217 = vrot.lane.b32.xlu0 %v1124, 32
      %v1218 = vpop.permute.xlu0 %1217
      %1219 = vrot.lane.b32.xlu0 %v1125, 32
      %v1220 = vpop.permute.xlu0 %1219
      %1221 = vrot.lane.b32.xlu0 %v1126, 32
      %v1222 = vpop.permute.xlu0 %1221
      %1255 = vst.msk [vmem:[#allocation3] sm:$0xff] %vm773, %v1160
      %1256 = vst.msk [vmem:[#allocation3 + $0x8] sm:$0xff] %vm773, %v1162
      %1257 = vst.msk [vmem:[#allocation3 + $0x10] sm:$0xff] %vm773, %v1164
      %1258 = vst.msk [vmem:[#allocation3 + $0x18] sm:$0xff] %vm773, %v1166
      %1259 = vst.msk [vmem:[#allocation3 + $0x20] sm:$0xff] %vm773, %v1168
      %1260 = vst.msk [vmem:[#allocation3 + $0x28] sm:$0xff] %vm773, %v1170
      %1261 = vst.msk [vmem:[#allocation3 + $0x30] sm:$0xff] %vm773, %v1172
      %1262 = vst.msk [vmem:[#allocation3 + $0x38] sm:$0xff] %vm773, %v1174
      %1263 = vst.msk [vmem:[#allocation3 + $0x40] sm:$0xff] %vm773, %v1176
      %1264 = vst.msk [vmem:[#allocation3 + $0x48] sm:$0xff] %vm773, %v1178
      %1265 = vst.msk [vmem:[#allocation3 + $0x50] sm:$0xff] %vm773, %v1180
      %1266 = vst.msk [vmem:[#allocation3 + $0x58] sm:$0xff] %vm773, %v1182
      %1267 = vst.msk [vmem:[#allocation3 + $0x60] sm:$0xff] %vm773, %v1184
      %1268 = vst.msk [vmem:[#allocation3 + $0x68] sm:$0xff] %vm773, %v1186
      %1269 = vst.msk [vmem:[#allocation3 + $0x70] sm:$0xff] %vm773, %v1188
      %1270 = vst.msk [vmem:[#allocation3 + $0x78] sm:$0xff] %vm773, %v1190
      %1271 = vst.msk [vmem:[#allocation3 + $0x80] sm:$0xff] %vm773, %v1192
      %1272 = vst.msk [vmem:[#allocation3 + $0x88] sm:$0xff] %vm773, %v1194
      %1273 = vst.msk [vmem:[#allocation3 + $0x90] sm:$0xff] %vm773, %v1196
      %1274 = vst.msk [vmem:[#allocation3 + $0x98] sm:$0xff] %vm773, %v1198
      %1275 = vst.msk [vmem:[#allocation3 + $0xa0] sm:$0xff] %vm773, %v1200
      %1276 = vst.msk [vmem:[#allocation3 + $0xa8] sm:$0xff] %vm773, %v1202
      %1277 = vst.msk [vmem:[#allocation3 + $0xb0] sm:$0xff] %vm773, %v1204
      %1278 = vst.msk [vmem:[#allocation3 + $0xb8] sm:$0xff] %vm773, %v1206
      %1279 = vst.msk [vmem:[#allocation3 + $0xc0] sm:$0xff] %vm773, %v1208
      %1280 = vst.msk [vmem:[#allocation3 + $0xc8] sm:$0xff] %vm773, %v1210
      %1281 = vst.msk [vmem:[#allocation3 + $0xd0] sm:$0xff] %vm773, %v1212
      %1282 = vst.msk [vmem:[#allocation3 + $0xd8] sm:$0xff] %vm773, %v1214
      %1283 = vst.msk [vmem:[#allocation3 + $0xe0] sm:$0xff] %vm773, %v1216
      %1284 = vst.msk [vmem:[#allocation3 + $0xe8] sm:$0xff] %vm773, %v1218
      %1285 = vst.msk [vmem:[#allocation3 + $0xf0] sm:$0xff] %vm773, %v1220
      %1286 = vst.msk [vmem:[#allocation3 + $0xf8] sm:$0xff] %vm773, %v1222
      %v1287 = vld [vmem:[%s479 + $0x9] sm:$0xff]
      %v1288 = vld [vmem:[%s479 + $0x11] sm:$0xff]
      %v1289 = vld [vmem:[%s479 + $0x29] sm:$0xff]
      %v1290 = vld [vmem:[%s479 + $0x31] sm:$0xff]
      %v1291 = vld [vmem:[%s479 + $0x49] sm:$0xff]
      %v1292 = vld [vmem:[%s479 + $0x51] sm:$0xff]
      %v1293 = vld [vmem:[%s479 + $0x69] sm:$0xff]
      %v1294 = vld [vmem:[%s479 + $0x71] sm:$0xff]
      %v1295 = vld [vmem:[%s479 + $0x89] sm:$0xff]
      %v1296 = vld [vmem:[%s479 + $0x91] sm:$0xff]
      %v1297 = vld [vmem:[%s479 + $0xa9] sm:$0xff]
      %v1298 = vld [vmem:[%s479 + $0xb1] sm:$0xff]
      %v1299 = vld [vmem:[%s479 + $0xc9] sm:$0xff]
      %v1300 = vld [vmem:[%s479 + $0xd1] sm:$0xff]
      %v1301 = vld [vmem:[%s479 + $0xe9] sm:$0xff]
      %v1302 = vld [vmem:[%s479 + $0xf1] sm:$0xff]
      %v1303 = vld [vmem:[%s479 + $0x109] sm:$0xff]
      %v1304 = vld [vmem:[%s479 + $0x111] sm:$0xff]
      %v1305 = vld [vmem:[%s479 + $0x129] sm:$0xff]
      %v1306 = vld [vmem:[%s479 + $0x131] sm:$0xff]
      %v1307 = vld [vmem:[%s479 + $0x149] sm:$0xff]
      %v1308 = vld [vmem:[%s479 + $0x151] sm:$0xff]
      %v1309 = vld [vmem:[%s479 + $0x169] sm:$0xff]
      %v1310 = vld [vmem:[%s479 + $0x171] sm:$0xff]
      %v1311 = vld [vmem:[%s479 + $0x189] sm:$0xff]
      %v1312 = vld [vmem:[%s479 + $0x191] sm:$0xff]
      %v1313 = vld [vmem:[%s479 + $0x1a9] sm:$0xff]
      %v1314 = vld [vmem:[%s479 + $0x1b1] sm:$0xff]
      %v1315 = vld [vmem:[%s479 + $0x1c9] sm:$0xff]
      %v1316 = vld [vmem:[%s479 + $0x1d1] sm:$0xff]
      %v1317 = vld [vmem:[%s479 + $0x1e9] sm:$0xff]
      %v1318 = vld [vmem:[%s479 + $0x1f1] sm:$0xff]
      %1351 = vrot.lane.b32.xlu0 %v1287, 64
      %v1352 = vpop.permute.xlu0 %1351
      %1353 = vrot.lane.b32.xlu0 %v1288, 64
      %v1354 = vpop.permute.xlu0 %1353
      %1355 = vrot.lane.b32.xlu0 %v1289, 64
      %v1356 = vpop.permute.xlu0 %1355
      %1357 = vrot.lane.b32.xlu0 %v1290, 64
      %v1358 = vpop.permute.xlu0 %1357
      %1359 = vrot.lane.b32.xlu0 %v1291, 64
      %v1360 = vpop.permute.xlu0 %1359
      %1361 = vrot.lane.b32.xlu0 %v1292, 64
      %v1362 = vpop.permute.xlu0 %1361
      %1363 = vrot.lane.b32.xlu0 %v1293, 64
      %v1364 = vpop.permute.xlu0 %1363
      %1365 = vrot.lane.b32.xlu0 %v1294, 64
      %v1366 = vpop.permute.xlu0 %1365
      %1367 = vrot.lane.b32.xlu0 %v1295, 64
      %v1368 = vpop.permute.xlu0 %1367
      %1369 = vrot.lane.b32.xlu0 %v1296, 64
      %v1370 = vpop.permute.xlu0 %1369
      %1371 = vrot.lane.b32.xlu0 %v1297, 64
      %v1372 = vpop.permute.xlu0 %1371
      %1373 = vrot.lane.b32.xlu0 %v1298, 64
      %v1374 = vpop.permute.xlu0 %1373
      %1375 = vrot.lane.b32.xlu0 %v1299, 64
      %v1376 = vpop.permute.xlu0 %1375
      %1377 = vrot.lane.b32.xlu0 %v1300, 64
      %v1378 = vpop.permute.xlu0 %1377
      %1379 = vrot.lane.b32.xlu0 %v1301, 64
      %v1380 = vpop.permute.xlu0 %1379
      %1381 = vrot.lane.b32.xlu0 %v1302, 64
      %v1382 = vpop.permute.xlu0 %1381
      %1383 = vrot.lane.b32.xlu0 %v1303, 64
      %v1384 = vpop.permute.xlu0 %1383
      %1385 = vrot.lane.b32.xlu0 %v1304, 64
      %v1386 = vpop.permute.xlu0 %1385
      %1387 = vrot.lane.b32.xlu0 %v1305, 64
      %v1388 = vpop.permute.xlu0 %1387
      %1389 = vrot.lane.b32.xlu0 %v1306, 64
      %v1390 = vpop.permute.xlu0 %1389
      %1391 = vrot.lane.b32.xlu0 %v1307, 64
      %v1392 = vpop.permute.xlu0 %1391
      %1393 = vrot.lane.b32.xlu0 %v1308, 64
      %v1394 = vpop.permute.xlu0 %1393
      %1395 = vrot.lane.b32.xlu0 %v1309, 64
      %v1396 = vpop.permute.xlu0 %1395
      %1397 = vrot.lane.b32.xlu0 %v1310, 64
      %v1398 = vpop.permute.xlu0 %1397
      %1399 = vrot.lane.b32.xlu0 %v1311, 64
      %v1400 = vpop.permute.xlu0 %1399
      %1401 = vrot.lane.b32.xlu0 %v1312, 64
      %v1402 = vpop.permute.xlu0 %1401
      %1403 = vrot.lane.b32.xlu0 %v1313, 64
      %v1404 = vpop.permute.xlu0 %1403
      %1405 = vrot.lane.b32.xlu0 %v1314, 64
      %v1406 = vpop.permute.xlu0 %1405
      %1407 = vrot.lane.b32.xlu0 %v1315, 64
      %v1408 = vpop.permute.xlu0 %1407
      %1409 = vrot.lane.b32.xlu0 %v1316, 64
      %v1410 = vpop.permute.xlu0 %1409
      %1411 = vrot.lane.b32.xlu0 %v1317, 64
      %v1412 = vpop.permute.xlu0 %1411
      %1413 = vrot.lane.b32.xlu0 %v1318, 64
      %v1414 = vpop.permute.xlu0 %1413
      %1447 = vst.msk [vmem:[#allocation3] sm:$0xff] %vm966, %v1352
      %1448 = vst.msk [vmem:[#allocation3 + $0x8] sm:$0xff] %vm966, %v1354
      %1449 = vst.msk [vmem:[#allocation3 + $0x10] sm:$0xff] %vm966, %v1356
      %1450 = vst.msk [vmem:[#allocation3 + $0x18] sm:$0xff] %vm966, %v1358
      %1451 = vst.msk [vmem:[#allocation3 + $0x20] sm:$0xff] %vm966, %v1360
      %1452 = vst.msk [vmem:[#allocation3 + $0x28] sm:$0xff] %vm966, %v1362
      %1453 = vst.msk [vmem:[#allocation3 + $0x30] sm:$0xff] %vm966, %v1364
      %1454 = vst.msk [vmem:[#allocation3 + $0x38] sm:$0xff] %vm966, %v1366
      %1455 = vst.msk [vmem:[#allocation3 + $0x40] sm:$0xff] %vm966, %v1368
      %1456 = vst.msk [vmem:[#allocation3 + $0x48] sm:$0xff] %vm966, %v1370
      %1457 = vst.msk [vmem:[#allocation3 + $0x50] sm:$0xff] %vm966, %v1372
      %1458 = vst.msk [vmem:[#allocation3 + $0x58] sm:$0xff] %vm966, %v1374
      %1459 = vst.msk [vmem:[#allocation3 + $0x60] sm:$0xff] %vm966, %v1376
      %1460 = vst.msk [vmem:[#allocation3 + $0x68] sm:$0xff] %vm966, %v1378
      %1461 = vst.msk [vmem:[#allocation3 + $0x70] sm:$0xff] %vm966, %v1380
      %1462 = vst.msk [vmem:[#allocation3 + $0x78] sm:$0xff] %vm966, %v1382
      %1463 = vst.msk [vmem:[#allocation3 + $0x80] sm:$0xff] %vm966, %v1384
      %1464 = vst.msk [vmem:[#allocation3 + $0x88] sm:$0xff] %vm966, %v1386
      %1465 = vst.msk [vmem:[#allocation3 + $0x90] sm:$0xff] %vm966, %v1388
      %1466 = vst.msk [vmem:[#allocation3 + $0x98] sm:$0xff] %vm966, %v1390
      %1467 = vst.msk [vmem:[#allocation3 + $0xa0] sm:$0xff] %vm966, %v1392
      %1468 = vst.msk [vmem:[#allocation3 + $0xa8] sm:$0xff] %vm966, %v1394
      %1469 = vst.msk [vmem:[#allocation3 + $0xb0] sm:$0xff] %vm966, %v1396
      %1470 = vst.msk [vmem:[#allocation3 + $0xb8] sm:$0xff] %vm966, %v1398
      %1471 = vst.msk [vmem:[#allocation3 + $0xc0] sm:$0xff] %vm966, %v1400
      %1472 = vst.msk [vmem:[#allocation3 + $0xc8] sm:$0xff] %vm966, %v1402
      %1473 = vst.msk [vmem:[#allocation3 + $0xd0] sm:$0xff] %vm966, %v1404
      %1474 = vst.msk [vmem:[#allocation3 + $0xd8] sm:$0xff] %vm966, %v1406
      %1475 = vst.msk [vmem:[#allocation3 + $0xe0] sm:$0xff] %vm966, %v1408
      %1476 = vst.msk [vmem:[#allocation3 + $0xe8] sm:$0xff] %vm966, %v1410
      %1477 = vst.msk [vmem:[#allocation3 + $0xf0] sm:$0xff] %vm966, %v1412
      %1478 = vst.msk [vmem:[#allocation3 + $0xf8] sm:$0xff] %vm966, %v1414
      %v1479 = vld [vmem:[#allocation3] sm:$0xff]
      %v1480 = vld [vmem:[#allocation3 + $0x8] sm:$0xff]
      %v1481 = vld [vmem:[#allocation3 + $0x10] sm:$0xff]
      %v1482 = vld [vmem:[#allocation3 + $0x18] sm:$0xff]
      %v1483 = vld [vmem:[#allocation3 + $0x20] sm:$0xff]
      %v1484 = vld [vmem:[#allocation3 + $0x28] sm:$0xff]
      %v1485 = vld [vmem:[#allocation3 + $0x30] sm:$0xff]
      %v1486 = vld [vmem:[#allocation3 + $0x38] sm:$0xff]
      %v1487 = vld [vmem:[#allocation3 + $0x40] sm:$0xff]
      %v1488 = vld [vmem:[#allocation3 + $0x48] sm:$0xff]
      %v1489 = vld [vmem:[#allocation3 + $0x50] sm:$0xff]
      %v1490 = vld [vmem:[#allocation3 + $0x58] sm:$0xff]
      %v1491 = vld [vmem:[#allocation3 + $0x60] sm:$0xff]
      %v1492 = vld [vmem:[#allocation3 + $0x68] sm:$0xff]
      %v1493 = vld [vmem:[#allocation3 + $0x70] sm:$0xff]
      %v1494 = vld [vmem:[#allocation3 + $0x78] sm:$0xff]
      %v1495 = vld [vmem:[#allocation3 + $0x80] sm:$0xff]
      %v1496 = vld [vmem:[#allocation3 + $0x88] sm:$0xff]
      %v1497 = vld [vmem:[#allocation3 + $0x90] sm:$0xff]
      %v1498 = vld [vmem:[#allocation3 + $0x98] sm:$0xff]
      %v1499 = vld [vmem:[#allocation3 + $0xa0] sm:$0xff]
      %v1500 = vld [vmem:[#allocation3 + $0xa8] sm:$0xff]
      %v1501 = vld [vmem:[#allocation3 + $0xb0] sm:$0xff]
      %v1502 = vld [vmem:[#allocation3 + $0xb8] sm:$0xff]
      %v1503 = vld [vmem:[#allocation3 + $0xc0] sm:$0xff]
      %v1504 = vld [vmem:[#allocation3 + $0xc8] sm:$0xff]
      %v1505 = vld [vmem:[#allocation3 + $0xd0] sm:$0xff]
      %v1506 = vld [vmem:[#allocation3 + $0xd8] sm:$0xff]
      %v1507 = vld [vmem:[#allocation3 + $0xe0] sm:$0xff]
      %v1508 = vld [vmem:[#allocation3 + $0xe8] sm:$0xff]
      %v1509 = vld [vmem:[#allocation3 + $0xf0] sm:$0xff]
      %v1510 = vld [vmem:[#allocation3 + $0xf8] sm:$0xff]
      %vm1511 = vcmask 785408
      %v1513 = vsel %vm1511, %v1479, 0
      %v1516 = vsel %vm1511, %v1480, 0
      %v1519 = vsel %vm1511, %v1481, 0
      %v1522 = vsel %vm1511, %v1482, 0
      %v1525 = vsel %vm1511, %v1483, 0
      %v1528 = vsel %vm1511, %v1484, 0
      %v1531 = vsel %vm1511, %v1485, 0
      %v1534 = vsel %vm1511, %v1486, 0
      %v1537 = vsel %vm1511, %v1487, 0
      %v1540 = vsel %vm1511, %v1488, 0
      %v1543 = vsel %vm1511, %v1489, 0
      %v1546 = vsel %vm1511, %v1490, 0
      %v1549 = vsel %vm1511, %v1491, 0
      %v1552 = vsel %vm1511, %v1492, 0
      %v1555 = vsel %vm1511, %v1493, 0
      %v1558 = vsel %vm1511, %v1494, 0
      %v1561 = vsel %vm1511, %v1495, 0
      %v1564 = vsel %vm1511, %v1496, 0
      %v1567 = vsel %vm1511, %v1497, 0
      %v1570 = vsel %vm1511, %v1498, 0
      %v1573 = vsel %vm1511, %v1499, 0
      %v1576 = vsel %vm1511, %v1500, 0
      %v1579 = vsel %vm1511, %v1501, 0
      %v1582 = vsel %vm1511, %v1502, 0
      %v1585 = vsel %vm1511, %v1503, 0
      %v1588 = vsel %vm1511, %v1504, 0
      %v1591 = vsel %vm1511, %v1505, 0
      %v1594 = vsel %vm1511, %v1506, 0
      %v1597 = vsel %vm1511, %v1507, 0
      %v1600 = vsel %vm1511, %v1508, 0
      %v1603 = vsel %vm1511, %v1509, 0
      %v1606 = vsel %vm1511, %v1510, 0
      %1608 = vmatprep.subr.mxu0 0.0
      %1609 = vmatpush1.msra.mxu0 %v525
      %1610 = vmatprep.subr.mxu0 0.0
      %1611 = vmatpush1.msra.mxu0 %v526
      %1612 = vmatprep.subr.mxu0 0.0
      %1613 = vmatpush1.msra.mxu0 %v527
      %1614 = vmatprep.subr.mxu0 0.0
      %1615 = vmatpush1.msra.mxu0 %v528
      %1616 = vmatprep.subr.mxu0 0.0
      %1617 = vmatpush1.msra.mxu0 %v529
      %1618 = vmatprep.subr.mxu0 0.0
      %1619 = vmatpush1.msra.mxu0 %v530
      %1620 = vmatprep.subr.mxu0 0.0
      %1621 = vmatpush1.msra.mxu0 %v531
      %1622 = vmatprep.subr.mxu0 0.0
      %1623 = vmatpush1.msra.mxu0 %v532
      %1624 = vmatprep.subr.mxu0 0.0
      %1625 = vmatpush1.msra.mxu0 %v533
      %1626 = vmatprep.subr.mxu0 0.0
      %1627 = vmatpush1.msra.mxu0 %v534
      %1628 = vmatprep.subr.mxu0 0.0
      %1629 = vmatpush1.msra.mxu0 %v535
      %1630 = vmatprep.subr.mxu0 0.0
      %1631 = vmatpush1.msra.mxu0 %v536
      %1632 = vmatprep.subr.mxu0 0.0
      %1633 = vmatpush1.msra.mxu0 0.0
      %1634 = vmatprep.subr.mxu0 0.0
      %1635 = vmatpush1.msra.mxu0 0.0
      %1636 = vmatprep.subr.mxu0 0.0
      %1637 = vmatpush1.msra.mxu0 0.0
      %1638 = vmatprep.subr.mxu0 0.0
      %1639 = vmatpush1.msra.mxu0 0.0
      %1640 = vmatprep.subr.mxu0 0.0
      %1641 = vmatpush1.msra.mxu0 0.0
      %1642 = vmatprep.subr.mxu0 0.0
      %1643 = vmatpush1.msra.mxu0 0.0
      %1644 = vmatprep.subr.mxu0 0.0
      %1645 = vmatpush1.msra.mxu0 0.0
      %1646 = vmatprep.subr.mxu0 0.0
      %1647 = vmatpush1.msra.mxu0 0.0
      %1648 = vmatprep.subr.mxu0 0.0
      %1649 = vmatpush1.msra.mxu0 0.0
      %1650 = vmatprep.subr.mxu0 0.0
      %1651 = vmatpush1.msra.mxu0 0.0
      %1652 = vmatprep.subr.mxu0 0.0
      %1653 = vmatpush1.msra.mxu0 0.0
      %1654 = vmatprep.subr.mxu0 0.0
      %1655 = vmatpush1.msra.mxu0 0.0
      %1656 = vmatprep.subr.mxu0 0.0
      %1657 = vmatpush1.msra.mxu0 0.0
      %1658 = vmatprep.subr.mxu0 0.0
      %1659 = vmatpush1.msra.mxu0 0.0
      %1660 = vmatprep.subr.mxu0 0.0
      %1661 = vmatpush1.msra.mxu0 0.0
      %1662 = vmatprep.subr.mxu0 0.0
      %1663 = vmatpush1.msra.mxu0 0.0
      %1664 = vmatprep.subr.mxu0 0.0
      %1665 = vmatpush1.msra.mxu0 0.0
      %1666 = vmatprep.subr.mxu0 0.0
      %1667 = vmatpush1.msra.mxu0 0.0
      %1668 = vmatprep.subr.mxu0 0.0
      %1669 = vmatpush1.msra.mxu0 0.0
      %1670 = vmatprep.subr.mxu0 0.0
      %1671 = vmatpush1.msra.mxu0 0.0
      %1672 = vmatprep.mubr.f32.mxu0 0.0
      %1673 = vmatmul.mubr.f32.gmra.mrb[0].mxu0 %v1513
      %v1674 = vpop.f32.mrb[0].mxu0
      %v1675 = vadd.f32 0.0, %v1674
      %v1676 = vpop.f32.mrb[0].mxu0
      %1677 = vmatprep.mubr.f32.mxu0 0.0
      %1678 = vmatmul.mubr.f32.gmra.mrb[0].mxu0 %v1516
      %v1679 = vpop.f32.mrb[0].mxu0
      %v1680 = vadd.f32 0.0, %v1679
      %v1681 = vpop.f32.mrb[0].mxu0
      %1682 = vmatprep.mubr.f32.mxu0 0.0
      %1683 = vmatmul.mubr.f32.gmra.mrb[0].mxu0 %v1519
      %v1684 = vpop.f32.mrb[0].mxu0
      %v1685 = vadd.f32 0.0, %v1684
      %v1686 = vpop.f32.mrb[0].mxu0
      %1687 = vmatprep.mubr.f32.mxu0 0.0
      %1688 = vmatmul.mubr.f32.gmra.mrb[0].mxu0 %v1522
      %v1689 = vpop.f32.mrb[0].mxu0
      %v1690 = vadd.f32 0.0, %v1689
      %v1691 = vpop.f32.mrb[0].mxu0
      %1692 = vmatprep.mubr.f32.mxu0 0.0
      %1693 = vmatmul.mubr.f32.gmra.mrb[0].mxu0 %v1525
      %v1694 = vpop.f32.mrb[0].mxu0
      %v1695 = vadd.f32 0.0, %v1694
      %v1696 = vpop.f32.mrb[0].mxu0
      %1697 = vmatprep.mubr.f32.mxu0 0.0
      %1698 = vmatmul.mubr.f32.gmra.mrb[0].mxu0 %v1528
      %v1699 = vpop.f32.mrb[0].mxu0
      %v1700 = vadd.f32 0.0, %v1699
      %v1701 = vpop.f32.mrb[0].mxu0
      %1702 = vmatprep.mubr.f32.mxu0 0.0
      %1703 = vmatmul.mubr.f32.gmra.mrb[0].mxu0 %v1531
      %v1704 = vpop.f32.mrb[0].mxu0
      %v1705 = vadd.f32 0.0, %v1704
      %v1706 = vpop.f32.mrb[0].mxu0
      %1707 = vmatprep.mubr.f32.mxu0 0.0
      %1708 = vmatmul.mubr.f32.gmra.mrb[0].mxu0 %v1534
      %v1709 = vpop.f32.mrb[0].mxu0
      %v1710 = vadd.f32 0.0, %v1709
      %v1711 = vpop.f32.mrb[0].mxu0
      %1712 = vmatprep.mubr.f32.mxu0 0.0
      %1713 = vmatmul.mubr.f32.gmra.mrb[0].mxu0 %v1537
      %v1714 = vpop.f32.mrb[0].mxu0
      %v1715 = vadd.f32 0.0, %v1714
      %v1716 = vpop.f32.mrb[0].mxu0
      %1717 = vmatprep.mubr.f32.mxu0 0.0
      %1718 = vmatmul.mubr.f32.gmra.mrb[0].mxu0 %v1540
      %v1719 = vpop.f32.mrb[0].mxu0
      %v1720 = vadd.f32 0.0, %v1719
      %v1721 = vpop.f32.mrb[0].mxu0
      %1722 = vmatprep.mubr.f32.mxu0 0.0
      %1723 = vmatmul.mubr.f32.gmra.mrb[0].mxu0 %v1543
      %v1724 = vpop.f32.mrb[0].mxu0
      %v1725 = vadd.f32 0.0, %v1724
      %v1726 = vpop.f32.mrb[0].mxu0
      %1727 = vmatprep.mubr.f32.mxu0 0.0
      %1728 = vmatmul.mubr.f32.gmra.mrb[0].mxu0 %v1546
      %v1729 = vpop.f32.mrb[0].mxu0
      %v1730 = vadd.f32 0.0, %v1729
      %v1731 = vpop.f32.mrb[0].mxu0
      %1732 = vmatprep.mubr.f32.mxu0 0.0
      %1733 = vmatmul.mubr.f32.gmra.mrb[0].mxu0 %v1549
      %v1734 = vpop.f32.mrb[0].mxu0
      %v1735 = vadd.f32 0.0, %v1734
      %v1736 = vpop.f32.mrb[0].mxu0
      %1737 = vmatprep.mubr.f32.mxu0 0.0
      %1738 = vmatmul.mubr.f32.gmra.mrb[0].mxu0 %v1552
      %v1739 = vpop.f32.mrb[0].mxu0
      %v1740 = vadd.f32 0.0, %v1739
      %v1741 = vpop.f32.mrb[0].mxu0
      %1742 = vmatprep.mubr.f32.mxu0 0.0
      %1743 = vmatmul.mubr.f32.gmra.mrb[0].mxu0 %v1555
      %v1744 = vpop.f32.mrb[0].mxu0
      %v1745 = vadd.f32 0.0, %v1744
      %v1746 = vpop.f32.mrb[0].mxu0
      %1747 = vmatprep.mubr.f32.mxu0 0.0
      %1748 = vmatmul.mubr.f32.gmra.mrb[0].mxu0 %v1558
      %v1749 = vpop.f32.mrb[0].mxu0
      %v1750 = vadd.f32 0.0, %v1749
      %v1751 = vpop.f32.mrb[0].mxu0
      %1752 = vmatprep.mubr.f32.mxu0 0.0
      %1753 = vmatmul.mubr.f32.gmra.mrb[0].mxu0 %v1561
      %v1754 = vpop.f32.mrb[0].mxu0
      %v1755 = vadd.f32 0.0, %v1754
      %v1756 = vpop.f32.mrb[0].mxu0
      %1757 = vmatprep.mubr.f32.mxu0 0.0
      %1758 = vmatmul.mubr.f32.gmra.mrb[0].mxu0 %v1564
      %v1759 = vpop.f32.mrb[0].mxu0
      %v1760 = vadd.f32 0.0, %v1759
      %v1761 = vpop.f32.mrb[0].mxu0
      %1762 = vmatprep.mubr.f32.mxu0 0.0
      %1763 = vmatmul.mubr.f32.gmra.mrb[0].mxu0 %v1567
      %v1764 = vpop.f32.mrb[0].mxu0
      %v1765 = vadd.f32 0.0, %v1764
      %v1766 = vpop.f32.mrb[0].mxu0
      %1767 = vmatprep.mubr.f32.mxu0 0.0
      %1768 = vmatmul.mubr.f32.gmra.mrb[0].mxu0 %v1570
      %v1769 = vpop.f32.mrb[0].mxu0
      %v1770 = vadd.f32 0.0, %v1769
      %v1771 = vpop.f32.mrb[0].mxu0
      %1772 = vmatprep.mubr.f32.mxu0 0.0
      %1773 = vmatmul.mubr.f32.gmra.mrb[0].mxu0 %v1573
      %v1774 = vpop.f32.mrb[0].mxu0
      %v1775 = vadd.f32 0.0, %v1774
      %v1776 = vpop.f32.mrb[0].mxu0
      %1777 = vmatprep.mubr.f32.mxu0 0.0
      %1778 = vmatmul.mubr.f32.gmra.mrb[0].mxu0 %v1576
      %v1779 = vpop.f32.mrb[0].mxu0
      %v1780 = vadd.f32 0.0, %v1779
      %v1781 = vpop.f32.mrb[0].mxu0
      %1782 = vmatprep.mubr.f32.mxu0 0.0
      %1783 = vmatmul.mubr.f32.gmra.mrb[0].mxu0 %v1579
      %v1784 = vpop.f32.mrb[0].mxu0
      %v1785 = vadd.f32 0.0, %v1784
      %v1786 = vpop.f32.mrb[0].mxu0
      %1787 = vmatprep.mubr.f32.mxu0 0.0
      %1788 = vmatmul.mubr.f32.gmra.mrb[0].mxu0 %v1582
      %v1789 = vpop.f32.mrb[0].mxu0
      %v1790 = vadd.f32 0.0, %v1789
      %v1791 = vpop.f32.mrb[0].mxu0
      %1792 = vmatprep.mubr.f32.mxu0 0.0
      %1793 = vmatmul.mubr.f32.gmra.mrb[0].mxu0 %v1585
      %v1794 = vpop.f32.mrb[0].mxu0
      %v1795 = vadd.f32 0.0, %v1794
      %v1796 = vpop.f32.mrb[0].mxu0
      %1797 = vmatprep.mubr.f32.mxu0 0.0
      %1798 = vmatmul.mubr.f32.gmra.mrb[0].mxu0 %v1588
      %v1799 = vpop.f32.mrb[0].mxu0
      %v1800 = vadd.f32 0.0, %v1799
      %v1801 = vpop.f32.mrb[0].mxu0
      %1802 = vmatprep.mubr.f32.mxu0 0.0
      %1803 = vmatmul.mubr.f32.gmra.mrb[0].mxu0 %v1591
      %v1804 = vpop.f32.mrb[0].mxu0
      %v1805 = vadd.f32 0.0, %v1804
      %v1806 = vpop.f32.mrb[0].mxu0
      %1807 = vmatprep.mubr.f32.mxu0 0.0
      %1808 = vmatmul.mubr.f32.gmra.mrb[0].mxu0 %v1594
      %v1809 = vpop.f32.mrb[0].mxu0
      %v1810 = vadd.f32 0.0, %v1809
      %v1811 = vpop.f32.mrb[0].mxu0
      %1812 = vmatprep.mubr.f32.mxu0 0.0
      %1813 = vmatmul.mubr.f32.gmra.mrb[0].mxu0 %v1597
      %v1814 = vpop.f32.mrb[0].mxu0
      %v1815 = vadd.f32 0.0, %v1814
      %v1816 = vpop.f32.mrb[0].mxu0
      %1817 = vmatprep.mubr.f32.mxu0 0.0
      %1818 = vmatmul.mubr.f32.gmra.mrb[0].mxu0 %v1600
      %v1819 = vpop.f32.mrb[0].mxu0
      %v1820 = vadd.f32 0.0, %v1819
      %v1821 = vpop.f32.mrb[0].mxu0
      %1822 = vmatprep.mubr.f32.mxu0 0.0
      %1823 = vmatmul.mubr.f32.gmra.mrb[0].mxu0 %v1603
      %v1824 = vpop.f32.mrb[0].mxu0
      %v1825 = vadd.f32 0.0, %v1824
      %v1826 = vpop.f32.mrb[0].mxu0
      %1827 = vmatprep.mubr.f32.mxu0 0.0
      %1828 = vmatmul.mubr.f32.gmra.mrb[0].mxu0 %v1606
      %v1829 = vpop.f32.mrb[0].mxu0
      %v1830 = vadd.f32 0.0, %v1829
      %v1831 = vpop.f32.mrb[0].mxu0
      %1832 = vdwg.mxu0
      %v1834 = vsel %vm1511, %v999, 0
      %v1837 = vsel %vm1511, %v1000, 0
      %v1840 = vsel %vm1511, %v1001, 0
      %v1843 = vsel %vm1511, %v1002, 0
      %v1846 = vsel %vm1511, %v1003, 0
      %v1849 = vsel %vm1511, %v1004, 0
      %v1852 = vsel %vm1511, %v1005, 0
      %v1855 = vsel %vm1511, %v1006, 0
      %v1858 = vsel %vm1511, %v1007, 0
      %v1861 = vsel %vm1511, %v1008, 0
      %v1864 = vsel %vm1511, %v1009, 0
      %v1867 = vsel %vm1511, %v1010, 0
      %v1870 = vsel %vm1511, %v1011, 0
      %v1873 = vsel %vm1511, %v1012, 0
      %v1876 = vsel %vm1511, %v1013, 0
      %v1879 = vsel %vm1511, %v1014, 0
      %v1882 = vsel %vm1511, %v1015, 0
      %v1885 = vsel %vm1511, %v1016, 0
      %v1888 = vsel %vm1511, %v1017, 0
      %v1891 = vsel %vm1511, %v1018, 0
      %v1894 = vsel %vm1511, %v1019, 0
      %v1897 = vsel %vm1511, %v1020, 0
      %v1900 = vsel %vm1511, %v1021, 0
      %v1903 = vsel %vm1511, %v1022, 0
      %v1906 = vsel %vm1511, %v1023, 0
      %v1909 = vsel %vm1511, %v1024, 0
      %v1912 = vsel %vm1511, %v1025, 0
      %v1915 = vsel %vm1511, %v1026, 0
      %v1918 = vsel %vm1511, %v1027, 0
      %v1921 = vsel %vm1511, %v1028, 0
      %v1924 = vsel %vm1511, %v1029, 0
      %v1927 = vsel %vm1511, %v1030, 0
      %1929 = vmatprep.subr.mxu0 0.0
      %1930 = vmatpush1.msra.mxu0 %v513
      %1931 = vmatprep.subr.mxu0 0.0
      %1932 = vmatpush1.msra.mxu0 %v514
      %1933 = vmatprep.subr.mxu0 0.0
      %1934 = vmatpush1.msra.mxu0 %v515
      %1935 = vmatprep.subr.mxu0 0.0
      %1936 = vmatpush1.msra.mxu0 %v516
      %1937 = vmatprep.subr.mxu0 0.0
      %1938 = vmatpush1.msra.mxu0 %v517
      %1939 = vmatprep.subr.mxu0 0.0
      %1940 = vmatpush1.msra.mxu0 %v518
      %1941 = vmatprep.subr.mxu0 0.0
      %1942 = vmatpush1.msra.mxu0 %v519
      %1943 = vmatprep.subr.mxu0 0.0
      %1944 = vmatpush1.msra.mxu0 %v520
      %1945 = vmatprep.subr.mxu0 0.0
      %1946 = vmatpush1.msra.mxu0 %v521
      %1947 = vmatprep.subr.mxu0 0.0
      %1948 = vmatpush1.msra.mxu0 %v522
      %1949 = vmatprep.subr.mxu0 0.0
      %1950 = vmatpush1.msra.mxu0 %v523
      %1951 = vmatprep.subr.mxu0 0.0
      %1952 = vmatpush1.msra.mxu0 %v524
      %1953 = vmatprep.subr.mxu0 0.0
      %1954 = vmatpush1.msra.mxu0 0.0
      %1955 = vmatprep.subr.mxu0 0.0
      %1956 = vmatpush1.msra.mxu0 0.0
      %1957 = vmatprep.subr.mxu0 0.0
      %1958 = vmatpush1.msra.mxu0 0.0
      %1959 = vmatprep.subr.mxu0 0.0
      %1960 = vmatpush1.msra.mxu0 0.0
      %1961 = vmatprep.subr.mxu0 0.0
      %1962 = vmatpush1.msra.mxu0 0.0
      %1963 = vmatprep.subr.mxu0 0.0
      %1964 = vmatpush1.msra.mxu0 0.0
      %1965 = vmatprep.subr.mxu0 0.0
      %1966 = vmatpush1.msra.mxu0 0.0
      %1967 = vmatprep.subr.mxu0 0.0
      %1968 = vmatpush1.msra.mxu0 0.0
      %1969 = vmatprep.subr.mxu0 0.0
      %1970 = vmatpush1.msra.mxu0 0.0
      %1971 = vmatprep.subr.mxu0 0.0
      %1972 = vmatpush1.msra.mxu0 0.0
      %1973 = vmatprep.subr.mxu0 0.0
      %1974 = vmatpush1.msra.mxu0 0.0
      %1975 = vmatprep.subr.mxu0 0.0
      %1976 = vmatpush1.msra.mxu0 0.0
      %1977 = vmatprep.subr.mxu0 0.0
      %1978 = vmatpush1.msra.mxu0 0.0
      %1979 = vmatprep.subr.mxu0 0.0
      %1980 = vmatpush1.msra.mxu0 0.0
      %1981 = vmatprep.subr.mxu0 0.0
      %1982 = vmatpush1.msra.mxu0 0.0
      %1983 = vmatprep.subr.mxu0 0.0
      %1984 = vmatpush1.msra.mxu0 0.0
      %1985 = vmatprep.subr.mxu0 0.0
      %1986 = vmatpush1.msra.mxu0 0.0
      %1987 = vmatprep.subr.mxu0 0.0
      %1988 = vmatpush1.msra.mxu0 0.0
      %1989 = vmatprep.subr.mxu0 0.0
      %1990 = vmatpush1.msra.mxu0 0.0
      %1991 = vmatprep.subr.mxu0 0.0
      %1992 = vmatpush1.msra.mxu0 0.0
      %1993 = vmatprep.mubr.f32.mxu0 0.0
      %1994 = vmatmul.mubr.f32.gmra.mrb[0].mxu0 %v1834
      %v1995 = vpop.f32.mrb[0].mxu0
      %v1996 = vadd.f32 %v1675, %v1995
      %v1997 = vpop.f32.mrb[0].mxu0
      %1998 = vmatprep.mubr.f32.mxu0 0.0
      %1999 = vmatmul.mubr.f32.gmra.mrb[0].mxu0 %v1837
      %v2000 = vpop.f32.mrb[0].mxu0
      %v2001 = vadd.f32 %v1680, %v2000
      %v2002 = vpop.f32.mrb[0].mxu0
      %2003 = vmatprep.mubr.f32.mxu0 0.0
      %2004 = vmatmul.mubr.f32.gmra.mrb[0].mxu0 %v1840
      %v2005 = vpop.f32.mrb[0].mxu0
      %v2006 = vadd.f32 %v1685, %v2005
      %v2007 = vpop.f32.mrb[0].mxu0
      %2008 = vmatprep.mubr.f32.mxu0 0.0
      %2009 = vmatmul.mubr.f32.gmra.mrb[0].mxu0 %v1843
      %v2010 = vpop.f32.mrb[0].mxu0
      %v2011 = vadd.f32 %v1690, %v2010
      %v2012 = vpop.f32.mrb[0].mxu0
      %2013 = vmatprep.mubr.f32.mxu0 0.0
      %2014 = vmatmul.mubr.f32.gmra.mrb[0].mxu0 %v1846
      %v2015 = vpop.f32.mrb[0].mxu0
      %v2016 = vadd.f32 %v1695, %v2015
      %v2017 = vpop.f32.mrb[0].mxu0
      %2018 = vmatprep.mubr.f32.mxu0 0.0
      %2019 = vmatmul.mubr.f32.gmra.mrb[0].mxu0 %v1849
      %v2020 = vpop.f32.mrb[0].mxu0
      %v2021 = vadd.f32 %v1700, %v2020
      %v2022 = vpop.f32.mrb[0].mxu0
      %2023 = vmatprep.mubr.f32.mxu0 0.0
      %2024 = vmatmul.mubr.f32.gmra.mrb[0].mxu0 %v1852
      %v2025 = vpop.f32.mrb[0].mxu0
      %v2026 = vadd.f32 %v1705, %v2025
      %v2027 = vpop.f32.mrb[0].mxu0
      %2028 = vmatprep.mubr.f32.mxu0 0.0
      %2029 = vmatmul.mubr.f32.gmra.mrb[0].mxu0 %v1855
      %v2030 = vpop.f32.mrb[0].mxu0
      %v2031 = vadd.f32 %v1710, %v2030
      %v2032 = vpop.f32.mrb[0].mxu0
      %2033 = vmatprep.mubr.f32.mxu0 0.0
      %2034 = vmatmul.mubr.f32.gmra.mrb[0].mxu0 %v1858
      %v2035 = vpop.f32.mrb[0].mxu0
      %v2036 = vadd.f32 %v1715, %v2035
      %v2037 = vpop.f32.mrb[0].mxu0
      %2038 = vmatprep.mubr.f32.mxu0 0.0
      %2039 = vmatmul.mubr.f32.gmra.mrb[0].mxu0 %v1861
      %v2040 = vpop.f32.mrb[0].mxu0
      %v2041 = vadd.f32 %v1720, %v2040
      %v2042 = vpop.f32.mrb[0].mxu0
      %2043 = vmatprep.mubr.f32.mxu0 0.0
      %2044 = vmatmul.mubr.f32.gmra.mrb[0].mxu0 %v1864
      %v2045 = vpop.f32.mrb[0].mxu0
      %v2046 = vadd.f32 %v1725, %v2045
      %v2047 = vpop.f32.mrb[0].mxu0
      %2048 = vmatprep.mubr.f32.mxu0 0.0
      %2049 = vmatmul.mubr.f32.gmra.mrb[0].mxu0 %v1867
      %v2050 = vpop.f32.mrb[0].mxu0
      %v2051 = vadd.f32 %v1730, %v2050
      %v2052 = vpop.f32.mrb[0].mxu0
      %2053 = vmatprep.mubr.f32.mxu0 0.0
      %2054 = vmatmul.mubr.f32.gmra.mrb[0].mxu0 %v1870
      %v2055 = vpop.f32.mrb[0].mxu0
      %v2056 = vadd.f32 %v1735, %v2055
      %v2057 = vpop.f32.mrb[0].mxu0
      %2058 = vmatprep.mubr.f32.mxu0 0.0
      %2059 = vmatmul.mubr.f32.gmra.mrb[0].mxu0 %v1873
      %v2060 = vpop.f32.mrb[0].mxu0
      %v2061 = vadd.f32 %v1740, %v2060
      %v2062 = vpop.f32.mrb[0].mxu0
      %2063 = vmatprep.mubr.f32.mxu0 0.0
      %2064 = vmatmul.mubr.f32.gmra.mrb[0].mxu0 %v1876
      %v2065 = vpop.f32.mrb[0].mxu0
      %v2066 = vadd.f32 %v1745, %v2065
      %v2067 = vpop.f32.mrb[0].mxu0
      %2068 = vmatprep.mubr.f32.mxu0 0.0
      %2069 = vmatmul.mubr.f32.gmra.mrb[0].mxu0 %v1879
      %v2070 = vpop.f32.mrb[0].mxu0
      %v2071 = vadd.f32 %v1750, %v2070
      %v2072 = vpop.f32.mrb[0].mxu0
      %2073 = vmatprep.mubr.f32.mxu0 0.0
      %2074 = vmatmul.mubr.f32.gmra.mrb[0].mxu0 %v1882
      %v2075 = vpop.f32.mrb[0].mxu0
      %v2076 = vadd.f32 %v1755, %v2075
      %v2077 = vpop.f32.mrb[0].mxu0
      %2078 = vmatprep.mubr.f32.mxu0 0.0
      %2079 = vmatmul.mubr.f32.gmra.mrb[0].mxu0 %v1885
      %v2080 = vpop.f32.mrb[0].mxu0
      %v2081 = vadd.f32 %v1760, %v2080
      %v2082 = vpop.f32.mrb[0].mxu0
      %2083 = vmatprep.mubr.f32.mxu0 0.0
      %2084 = vmatmul.mubr.f32.gmra.mrb[0].mxu0 %v1888
      %v2085 = vpop.f32.mrb[0].mxu0
      %v2086 = vadd.f32 %v1765, %v2085
      %v2087 = vpop.f32.mrb[0].mxu0
      %2088 = vmatprep.mubr.f32.mxu0 0.0
      %2089 = vmatmul.mubr.f32.gmra.mrb[0].mxu0 %v1891
      %v2090 = vpop.f32.mrb[0].mxu0
      %v2091 = vadd.f32 %v1770, %v2090
      %v2092 = vpop.f32.mrb[0].mxu0
      %2093 = vmatprep.mubr.f32.mxu0 0.0
      %2094 = vmatmul.mubr.f32.gmra.mrb[0].mxu0 %v1894
      %v2095 = vpop.f32.mrb[0].mxu0
      %v2096 = vadd.f32 %v1775, %v2095
      %v2097 = vpop.f32.mrb[0].mxu0
      %2098 = vmatprep.mubr.f32.mxu0 0.0
      %2099 = vmatmul.mubr.f32.gmra.mrb[0].mxu0 %v1897
      %v2100 = vpop.f32.mrb[0].mxu0
      %v2101 = vadd.f32 %v1780, %v2100
      %v2102 = vpop.f32.mrb[0].mxu0
      %2103 = vmatprep.mubr.f32.mxu0 0.0
      %2104 = vmatmul.mubr.f32.gmra.mrb[0].mxu0 %v1900
      %v2105 = vpop.f32.mrb[0].mxu0
      %v2106 = vadd.f32 %v1785, %v2105
      %v2107 = vpop.f32.mrb[0].mxu0
      %2108 = vmatprep.mubr.f32.mxu0 0.0
      %2109 = vmatmul.mubr.f32.gmra.mrb[0].mxu0 %v1903
      %v2110 = vpop.f32.mrb[0].mxu0
      %v2111 = vadd.f32 %v1790, %v2110
      %v2112 = vpop.f32.mrb[0].mxu0
      %2113 = vmatprep.mubr.f32.mxu0 0.0
      %2114 = vmatmul.mubr.f32.gmra.mrb[0].mxu0 %v1906
      %v2115 = vpop.f32.mrb[0].mxu0
      %v2116 = vadd.f32 %v1795, %v2115
      %v2117 = vpop.f32.mrb[0].mxu0
      %2118 = vmatprep.mubr.f32.mxu0 0.0
      %2119 = vmatmul.mubr.f32.gmra.mrb[0].mxu0 %v1909
      %v2120 = vpop.f32.mrb[0].mxu0
      %v2121 = vadd.f32 %v1800, %v2120
      %v2122 = vpop.f32.mrb[0].mxu0
      %2123 = vmatprep.mubr.f32.mxu0 0.0
      %2124 = vmatmul.mubr.f32.gmra.mrb[0].mxu0 %v1912
      %v2125 = vpop.f32.mrb[0].mxu0
      %v2126 = vadd.f32 %v1805, %v2125
      %v2127 = vpop.f32.mrb[0].mxu0
      %2128 = vmatprep.mubr.f32.mxu0 0.0
      %2129 = vmatmul.mubr.f32.gmra.mrb[0].mxu0 %v1915
      %v2130 = vpop.f32.mrb[0].mxu0
      %v2131 = vadd.f32 %v1810, %v2130
      %v2132 = vpop.f32.mrb[0].mxu0
      %2133 = vmatprep.mubr.f32.mxu0 0.0
      %2134 = vmatmul.mubr.f32.gmra.mrb[0].mxu0 %v1918
      %v2135 = vpop.f32.mrb[0].mxu0
      %v2136 = vadd.f32 %v1815, %v2135
      %v2137 = vpop.f32.mrb[0].mxu0
      %2138 = vmatprep.mubr.f32.mxu0 0.0
      %2139 = vmatmul.mubr.f32.gmra.mrb[0].mxu0 %v1921
      %v2140 = vpop.f32.mrb[0].mxu0
      %v2141 = vadd.f32 %v1820, %v2140
      %v2142 = vpop.f32.mrb[0].mxu0
      %2143 = vmatprep.mubr.f32.mxu0 0.0
      %2144 = vmatmul.mubr.f32.gmra.mrb[0].mxu0 %v1924
      %v2145 = vpop.f32.mrb[0].mxu0
      %v2146 = vadd.f32 %v1825, %v2145
      %v2147 = vpop.f32.mrb[0].mxu0
      %2148 = vmatprep.mubr.f32.mxu0 0.0
      %2149 = vmatmul.mubr.f32.gmra.mrb[0].mxu0 %v1927
      %v2150 = vpop.f32.mrb[0].mxu0
      %v2151 = vadd.f32 %v1830, %v2150
      %v2152 = vpop.f32.mrb[0].mxu0
      %2153 = vdwg.mxu0
      %s2154 = scalar_lea.vmem [#allocation2], 64
      %v2155 = vld [vmem:[%s2154 + $0x7] sm:$0xff]
      %v2156 = vld [vmem:[%s2154 + $0xf] sm:$0xff]
      %v2157 = vld [vmem:[%s2154 + $0x27] sm:$0xff]
      %v2158 = vld [vmem:[%s2154 + $0x2f] sm:$0xff]
      %v2159 = vld [vmem:[%s2154 + $0x47] sm:$0xff]
      %v2160 = vld [vmem:[%s2154 + $0x4f] sm:$0xff]
      %v2161 = vld [vmem:[%s2154 + $0x67] sm:$0xff]
      %v2162 = vld [vmem:[%s2154 + $0x6f] sm:$0xff]
      %v2163 = vld [vmem:[%s2154 + $0x87] sm:$0xff]
      %v2164 = vld [vmem:[%s2154 + $0x8f] sm:$0xff]
      %v2165 = vld [vmem:[%s2154 + $0xa7] sm:$0xff]
      %v2166 = vld [vmem:[%s2154 + $0xaf] sm:$0xff]
      %v2167 = vld [vmem:[%s2154 + $0xc7] sm:$0xff]
      %v2168 = vld [vmem:[%s2154 + $0xcf] sm:$0xff]
      %v2169 = vld [vmem:[%s2154 + $0xe7] sm:$0xff]
      %v2170 = vld [vmem:[%s2154 + $0xef] sm:$0xff]
      %v2171 = vld [vmem:[%s2154 + $0x107] sm:$0xff]
      %v2172 = vld [vmem:[%s2154 + $0x10f] sm:$0xff]
      %v2173 = vld [vmem:[%s2154 + $0x127] sm:$0xff]
      %v2174 = vld [vmem:[%s2154 + $0x12f] sm:$0xff]
      %v2175 = vld [vmem:[%s2154 + $0x147] sm:$0xff]
      %v2176 = vld [vmem:[%s2154 + $0x14f] sm:$0xff]
      %v2177 = vld [vmem:[%s2154 + $0x167] sm:$0xff]
      %v2178 = vld [vmem:[%s2154 + $0x16f] sm:$0xff]
      %v2179 = vld [vmem:[%s2154 + $0x187] sm:$0xff]
      %v2180 = vld [vmem:[%s2154 + $0x18f] sm:$0xff]
      %v2181 = vld [vmem:[%s2154 + $0x1a7] sm:$0xff]
      %v2182 = vld [vmem:[%s2154 + $0x1af] sm:$0xff]
      %v2183 = vld [vmem:[%s2154 + $0x1c7] sm:$0xff]
      %v2184 = vld [vmem:[%s2154 + $0x1cf] sm:$0xff]
      %v2185 = vld [vmem:[%s2154 + $0x1e7] sm:$0xff]
      %v2186 = vld [vmem:[%s2154 + $0x1ef] sm:$0xff]
      %2187 = vst.msk [vmem:[#allocation3] sm:$0xff] %vm480, %v2155
      %2188 = vst.msk [vmem:[#allocation3 + $0x8] sm:$0xff] %vm480, %v2156
      %2189 = vst.msk [vmem:[#allocation3 + $0x10] sm:$0xff] %vm480, %v2157
      %2190 = vst.msk [vmem:[#allocation3 + $0x18] sm:$0xff] %vm480, %v2158
      %2191 = vst.msk [vmem:[#allocation3 + $0x20] sm:$0xff] %vm480, %v2159
      %2192 = vst.msk [vmem:[#allocation3 + $0x28] sm:$0xff] %vm480, %v2160
      %2193 = vst.msk [vmem:[#allocation3 + $0x30] sm:$0xff] %vm480, %v2161
      %2194 = vst.msk [vmem:[#allocation3 + $0x38] sm:$0xff] %vm480, %v2162
      %2195 = vst.msk [vmem:[#allocation3 + $0x40] sm:$0xff] %vm480, %v2163
      %2196 = vst.msk [vmem:[#allocation3 + $0x48] sm:$0xff] %vm480, %v2164
      %2197 = vst.msk [vmem:[#allocation3 + $0x50] sm:$0xff] %vm480, %v2165
      %2198 = vst.msk [vmem:[#allocation3 + $0x58] sm:$0xff] %vm480, %v2166
      %2199 = vst.msk [vmem:[#allocation3 + $0x60] sm:$0xff] %vm480, %v2167
      %2200 = vst.msk [vmem:[#allocation3 + $0x68] sm:$0xff] %vm480, %v2168
      %2201 = vst.msk [vmem:[#allocation3 + $0x70] sm:$0xff] %vm480, %v2169
      %2202 = vst.msk [vmem:[#allocation3 + $0x78] sm:$0xff] %vm480, %v2170
      %2203 = vst.msk [vmem:[#allocation3 + $0x80] sm:$0xff] %vm480, %v2171
      %2204 = vst.msk [vmem:[#allocation3 + $0x88] sm:$0xff] %vm480, %v2172
      %2205 = vst.msk [vmem:[#allocation3 + $0x90] sm:$0xff] %vm480, %v2173
      %2206 = vst.msk [vmem:[#allocation3 + $0x98] sm:$0xff] %vm480, %v2174
      %2207 = vst.msk [vmem:[#allocation3 + $0xa0] sm:$0xff] %vm480, %v2175
      %2208 = vst.msk [vmem:[#allocation3 + $0xa8] sm:$0xff] %vm480, %v2176
      %2209 = vst.msk [vmem:[#allocation3 + $0xb0] sm:$0xff] %vm480, %v2177
      %2210 = vst.msk [vmem:[#allocation3 + $0xb8] sm:$0xff] %vm480, %v2178
      %2211 = vst.msk [vmem:[#allocation3 + $0xc0] sm:$0xff] %vm480, %v2179
      %2212 = vst.msk [vmem:[#allocation3 + $0xc8] sm:$0xff] %vm480, %v2180
      %2213 = vst.msk [vmem:[#allocation3 + $0xd0] sm:$0xff] %vm480, %v2181
      %2214 = vst.msk [vmem:[#allocation3 + $0xd8] sm:$0xff] %vm480, %v2182
      %2215 = vst.msk [vmem:[#allocation3 + $0xe0] sm:$0xff] %vm480, %v2183
      %2216 = vst.msk [vmem:[#allocation3 + $0xe8] sm:$0xff] %vm480, %v2184
      %2217 = vst.msk [vmem:[#allocation3 + $0xf0] sm:$0xff] %vm480, %v2185
      %2218 = vst.msk [vmem:[#allocation3 + $0xf8] sm:$0xff] %vm480, %v2186
      %v2219 = vld [vmem:[%s2154 + $0x8] sm:$0xff]
      %v2220 = vld [vmem:[%s2154 + $0x10] sm:$0xff]
      %v2221 = vld [vmem:[%s2154 + $0x28] sm:$0xff]
      %v2222 = vld [vmem:[%s2154 + $0x30] sm:$0xff]
      %v2223 = vld [vmem:[%s2154 + $0x48] sm:$0xff]
      %v2224 = vld [vmem:[%s2154 + $0x50] sm:$0xff]
      %v2225 = vld [vmem:[%s2154 + $0x68] sm:$0xff]
      %v2226 = vld [vmem:[%s2154 + $0x70] sm:$0xff]
      %v2227 = vld [vmem:[%s2154 + $0x88] sm:$0xff]
      %v2228 = vld [vmem:[%s2154 + $0x90] sm:$0xff]
      %v2229 = vld [vmem:[%s2154 + $0xa8] sm:$0xff]
      %v2230 = vld [vmem:[%s2154 + $0xb0] sm:$0xff]
      %v2231 = vld [vmem:[%s2154 + $0xc8] sm:$0xff]
      %v2232 = vld [vmem:[%s2154 + $0xd0] sm:$0xff]
      %v2233 = vld [vmem:[%s2154 + $0xe8] sm:$0xff]
      %v2234 = vld [vmem:[%s2154 + $0xf0] sm:$0xff]
      %v2235 = vld [vmem:[%s2154 + $0x108] sm:$0xff]
      %v2236 = vld [vmem:[%s2154 + $0x110] sm:$0xff]
      %v2237 = vld [vmem:[%s2154 + $0x128] sm:$0xff]
      %v2238 = vld [vmem:[%s2154 + $0x130] sm:$0xff]
      %v2239 = vld [vmem:[%s2154 + $0x148] sm:$0xff]
      %v2240 = vld [vmem:[%s2154 + $0x150] sm:$0xff]
      %v2241 = vld [vmem:[%s2154 + $0x168] sm:$0xff]
      %v2242 = vld [vmem:[%s2154 + $0x170] sm:$0xff]
      %v2243 = vld [vmem:[%s2154 + $0x188] sm:$0xff]
      %v2244 = vld [vmem:[%s2154 + $0x190] sm:$0xff]
      %v2245 = vld [vmem:[%s2154 + $0x1a8] sm:$0xff]
      %v2246 = vld [vmem:[%s2154 + $0x1b0] sm:$0xff]
      %v2247 = vld [vmem:[%s2154 + $0x1c8] sm:$0xff]
      %v2248 = vld [vmem:[%s2154 + $0x1d0] sm:$0xff]
      %v2249 = vld [vmem:[%s2154 + $0x1e8] sm:$0xff]
      %v2250 = vld [vmem:[%s2154 + $0x1f0] sm:$0xff]
      %2283 = vrot.lane.b32.xlu0 %v2219, 32
      %v2284 = vpop.permute.xlu0 %2283
      %2285 = vrot.lane.b32.xlu0 %v2220, 32
      %v2286 = vpop.permute.xlu0 %2285
      %2287 = vrot.lane.b32.xlu0 %v2221, 32
      %v2288 = vpop.permute.xlu0 %2287
      %2289 = vrot.lane.b32.xlu0 %v2222, 32
      %v2290 = vpop.permute.xlu0 %2289
      %2291 = vrot.lane.b32.xlu0 %v2223, 32
      %v2292 = vpop.permute.xlu0 %2291
      %2293 = vrot.lane.b32.xlu0 %v2224, 32
      %v2294 = vpop.permute.xlu0 %2293
      %2295 = vrot.lane.b32.xlu0 %v2225, 32
      %v2296 = vpop.permute.xlu0 %2295
      %2297 = vrot.lane.b32.xlu0 %v2226, 32
      %v2298 = vpop.permute.xlu0 %2297
      %2299 = vrot.lane.b32.xlu0 %v2227, 32
      %v2300 = vpop.permute.xlu0 %2299
      %2301 = vrot.lane.b32.xlu0 %v2228, 32
      %v2302 = vpop.permute.xlu0 %2301
      %2303 = vrot.lane.b32.xlu0 %v2229, 32
      %v2304 = vpop.permute.xlu0 %2303
      %2305 = vrot.lane.b32.xlu0 %v2230, 32
      %v2306 = vpop.permute.xlu0 %2305
      %2307 = vrot.lane.b32.xlu0 %v2231, 32
      %v2308 = vpop.permute.xlu0 %2307
      %2309 = vrot.lane.b32.xlu0 %v2232, 32
      %v2310 = vpop.permute.xlu0 %2309
      %2311 = vrot.lane.b32.xlu0 %v2233, 32
      %v2312 = vpop.permute.xlu0 %2311
      %2313 = vrot.lane.b32.xlu0 %v2234, 32
      %v2314 = vpop.permute.xlu0 %2313
      %2315 = vrot.lane.b32.xlu0 %v2235, 32
      %v2316 = vpop.permute.xlu0 %2315
      %2317 = vrot.lane.b32.xlu0 %v2236, 32
      %v2318 = vpop.permute.xlu0 %2317
      %2319 = vrot.lane.b32.xlu0 %v2237, 32
      %v2320 = vpop.permute.xlu0 %2319
      %2321 = vrot.lane.b32.xlu0 %v2238, 32
      %v2322 = vpop.permute.xlu0 %2321
      %2323 = vrot.lane.b32.xlu0 %v2239, 32
      %v2324 = vpop.permute.xlu0 %2323
      %2325 = vrot.lane.b32.xlu0 %v2240, 32
      %v2326 = vpop.permute.xlu0 %2325
      %2327 = vrot.lane.b32.xlu0 %v2241, 32
      %v2328 = vpop.permute.xlu0 %2327
      %2329 = vrot.lane.b32.xlu0 %v2242, 32
      %v2330 = vpop.permute.xlu0 %2329
      %2331 = vrot.lane.b32.xlu0 %v2243, 32
      %v2332 = vpop.permute.xlu0 %2331
      %2333 = vrot.lane.b32.xlu0 %v2244, 32
      %v2334 = vpop.permute.xlu0 %2333
      %2335 = vrot.lane.b32.xlu0 %v2245, 32
      %v2336 = vpop.permute.xlu0 %2335
      %2337 = vrot.lane.b32.xlu0 %v2246, 32
      %v2338 = vpop.permute.xlu0 %2337
      %2339 = vrot.lane.b32.xlu0 %v2247, 32
      %v2340 = vpop.permute.xlu0 %2339
      %2341 = vrot.lane.b32.xlu0 %v2248, 32
      %v2342 = vpop.permute.xlu0 %2341
      %2343 = vrot.lane.b32.xlu0 %v2249, 32
      %v2344 = vpop.permute.xlu0 %2343
      %2345 = vrot.lane.b32.xlu0 %v2250, 32
      %v2346 = vpop.permute.xlu0 %2345
      %2379 = vst.msk [vmem:[#allocation3] sm:$0xff] %vm773, %v2284
      %2380 = vst.msk [vmem:[#allocation3 + $0x8] sm:$0xff] %vm773, %v2286
      %2381 = vst.msk [vmem:[#allocation3 + $0x10] sm:$0xff] %vm773, %v2288
      %2382 = vst.msk [vmem:[#allocation3 + $0x18] sm:$0xff] %vm773, %v2290
      %2383 = vst.msk [vmem:[#allocation3 + $0x20] sm:$0xff] %vm773, %v2292
      %2384 = vst.msk [vmem:[#allocation3 + $0x28] sm:$0xff] %vm773, %v2294
      %2385 = vst.msk [vmem:[#allocation3 + $0x30] sm:$0xff] %vm773, %v2296
      %2386 = vst.msk [vmem:[#allocation3 + $0x38] sm:$0xff] %vm773, %v2298
      %2387 = vst.msk [vmem:[#allocation3 + $0x40] sm:$0xff] %vm773, %v2300
      %2388 = vst.msk [vmem:[#allocation3 + $0x48] sm:$0xff] %vm773, %v2302
      %2389 = vst.msk [vmem:[#allocation3 + $0x50] sm:$0xff] %vm773, %v2304
      %2390 = vst.msk [vmem:[#allocation3 + $0x58] sm:$0xff] %vm773, %v2306
      %2391 = vst.msk [vmem:[#allocation3 + $0x60] sm:$0xff] %vm773, %v2308
      %2392 = vst.msk [vmem:[#allocation3 + $0x68] sm:$0xff] %vm773, %v2310
      %2393 = vst.msk [vmem:[#allocation3 + $0x70] sm:$0xff] %vm773, %v2312
      %2394 = vst.msk [vmem:[#allocation3 + $0x78] sm:$0xff] %vm773, %v2314
      %2395 = vst.msk [vmem:[#allocation3 + $0x80] sm:$0xff] %vm773, %v2316
      %2396 = vst.msk [vmem:[#allocation3 + $0x88] sm:$0xff] %vm773, %v2318
      %2397 = vst.msk [vmem:[#allocation3 + $0x90] sm:$0xff] %vm773, %v2320
      %2398 = vst.msk [vmem:[#allocation3 + $0x98] sm:$0xff] %vm773, %v2322
      %2399 = vst.msk [vmem:[#allocation3 + $0xa0] sm:$0xff] %vm773, %v2324
      %2400 = vst.msk [vmem:[#allocation3 + $0xa8] sm:$0xff] %vm773, %v2326
      %2401 = vst.msk [vmem:[#allocation3 + $0xb0] sm:$0xff] %vm773, %v2328
      %2402 = vst.msk [vmem:[#allocation3 + $0xb8] sm:$0xff] %vm773, %v2330
      %2403 = vst.msk [vmem:[#allocation3 + $0xc0] sm:$0xff] %vm773, %v2332
      %2404 = vst.msk [vmem:[#allocation3 + $0xc8] sm:$0xff] %vm773, %v2334
      %2405 = vst.msk [vmem:[#allocation3 + $0xd0] sm:$0xff] %vm773, %v2336
      %2406 = vst.msk [vmem:[#allocation3 + $0xd8] sm:$0xff] %vm773, %v2338
      %2407 = vst.msk [vmem:[#allocation3 + $0xe0] sm:$0xff] %vm773, %v2340
      %2408 = vst.msk [vmem:[#allocation3 + $0xe8] sm:$0xff] %vm773, %v2342
      %2409 = vst.msk [vmem:[#allocation3 + $0xf0] sm:$0xff] %vm773, %v2344
      %2410 = vst.msk [vmem:[#allocation3 + $0xf8] sm:$0xff] %vm773, %v2346
      %v2411 = vld [vmem:[%s2154 + $0x9] sm:$0xff]
      %v2412 = vld [vmem:[%s2154 + $0x11] sm:$0xff]
      %v2413 = vld [vmem:[%s2154 + $0x29] sm:$0xff]
      %v2414 = vld [vmem:[%s2154 + $0x31] sm:$0xff]
      %v2415 = vld [vmem:[%s2154 + $0x49] sm:$0xff]
      %v2416 = vld [vmem:[%s2154 + $0x51] sm:$0xff]
      %v2417 = vld [vmem:[%s2154 + $0x69] sm:$0xff]
      %v2418 = vld [vmem:[%s2154 + $0x71] sm:$0xff]
      %v2419 = vld [vmem:[%s2154 + $0x89] sm:$0xff]
      %v2420 = vld [vmem:[%s2154 + $0x91] sm:$0xff]
      %v2421 = vld [vmem:[%s2154 + $0xa9] sm:$0xff]
      %v2422 = vld [vmem:[%s2154 + $0xb1] sm:$0xff]
      %v2423 = vld [vmem:[%s2154 + $0xc9] sm:$0xff]
      %v2424 = vld [vmem:[%s2154 + $0xd1] sm:$0xff]
      %v2425 = vld [vmem:[%s2154 + $0xe9] sm:$0xff]
      %v2426 = vld [vmem:[%s2154 + $0xf1] sm:$0xff]
      %v2427 = vld [vmem:[%s2154 + $0x109] sm:$0xff]
      %v2428 = vld [vmem:[%s2154 + $0x111] sm:$0xff]
      %v2429 = vld [vmem:[%s2154 + $0x129] sm:$0xff]
      %v2430 = vld [vmem:[%s2154 + $0x131] sm:$0xff]
      %v2431 = vld [vmem:[%s2154 + $0x149] sm:$0xff]
      %v2432 = vld [vmem:[%s2154 + $0x151] sm:$0xff]
      %v2433 = vld [vmem:[%s2154 + $0x169] sm:$0xff]
      %v2434 = vld [vmem:[%s2154 + $0x171] sm:$0xff]
      %v2435 = vld [vmem:[%s2154 + $0x189] sm:$0xff]
      %v2436 = vld [vmem:[%s2154 + $0x191] sm:$0xff]
      %v2437 = vld [vmem:[%s2154 + $0x1a9] sm:$0xff]
      %v2438 = vld [vmem:[%s2154 + $0x1b1] sm:$0xff]
      %v2439 = vld [vmem:[%s2154 + $0x1c9] sm:$0xff]
      %v2440 = vld [vmem:[%s2154 + $0x1d1] sm:$0xff]
      %v2441 = vld [vmem:[%s2154 + $0x1e9] sm:$0xff]
      %v2442 = vld [vmem:[%s2154 + $0x1f1] sm:$0xff]
      %2475 = vrot.lane.b32.xlu0 %v2411, 64
      %v2476 = vpop.permute.xlu0 %2475
      %2477 = vrot.lane.b32.xlu0 %v2412, 64
      %v2478 = vpop.permute.xlu0 %2477
      %2479 = vrot.lane.b32.xlu0 %v2413, 64
      %v2480 = vpop.permute.xlu0 %2479
      %2481 = vrot.lane.b32.xlu0 %v2414, 64
      %v2482 = vpop.permute.xlu0 %2481
      %2483 = vrot.lane.b32.xlu0 %v2415, 64
      %v2484 = vpop.permute.xlu0 %2483
      %2485 = vrot.lane.b32.xlu0 %v2416, 64
      %v2486 = vpop.permute.xlu0 %2485
      %2487 = vrot.lane.b32.xlu0 %v2417, 64
      %v2488 = vpop.permute.xlu0 %2487
      %2489 = vrot.lane.b32.xlu0 %v2418, 64
      %v2490 = vpop.permute.xlu0 %2489
      %2491 = vrot.lane.b32.xlu0 %v2419, 64
      %v2492 = vpop.permute.xlu0 %2491
      %2493 = vrot.lane.b32.xlu0 %v2420, 64
      %v2494 = vpop.permute.xlu0 %2493
      %2495 = vrot.lane.b32.xlu0 %v2421, 64
      %v2496 = vpop.permute.xlu0 %2495
      %2497 = vrot.lane.b32.xlu0 %v2422, 64
      %v2498 = vpop.permute.xlu0 %2497
      %2499 = vrot.lane.b32.xlu0 %v2423, 64
      %v2500 = vpop.permute.xlu0 %2499
      %2501 = vrot.lane.b32.xlu0 %v2424, 64
      %v2502 = vpop.permute.xlu0 %2501
      %2503 = vrot.lane.b32.xlu0 %v2425, 64
      %v2504 = vpop.permute.xlu0 %2503
      %2505 = vrot.lane.b32.xlu0 %v2426, 64
      %v2506 = vpop.permute.xlu0 %2505
      %2507 = vrot.lane.b32.xlu0 %v2427, 64
      %v2508 = vpop.permute.xlu0 %2507
      %2509 = vrot.lane.b32.xlu0 %v2428, 64
      %v2510 = vpop.permute.xlu0 %2509
      %2511 = vrot.lane.b32.xlu0 %v2429, 64
      %v2512 = vpop.permute.xlu0 %2511
      %2513 = vrot.lane.b32.xlu0 %v2430, 64
      %v2514 = vpop.permute.xlu0 %2513
      %2515 = vrot.lane.b32.xlu0 %v2431, 64
      %v2516 = vpop.permute.xlu0 %2515
      %2517 = vrot.lane.b32.xlu0 %v2432, 64
      %v2518 = vpop.permute.xlu0 %2517
      %2519 = vrot.lane.b32.xlu0 %v2433, 64
      %v2520 = vpop.permute.xlu0 %2519
      %2521 = vrot.lane.b32.xlu0 %v2434, 64
      %v2522 = vpop.permute.xlu0 %2521
      %2523 = vrot.lane.b32.xlu0 %v2435, 64
      %v2524 = vpop.permute.xlu0 %2523
      %2525 = vrot.lane.b32.xlu0 %v2436, 64
      %v2526 = vpop.permute.xlu0 %2525
      %2527 = vrot.lane.b32.xlu0 %v2437, 64
      %v2528 = vpop.permute.xlu0 %2527
      %2529 = vrot.lane.b32.xlu0 %v2438, 64
      %v2530 = vpop.permute.xlu0 %2529
      %2531 = vrot.lane.b32.xlu0 %v2439, 64
      %v2532 = vpop.permute.xlu0 %2531
      %2533 = vrot.lane.b32.xlu0 %v2440, 64
      %v2534 = vpop.permute.xlu0 %2533
      %2535 = vrot.lane.b32.xlu0 %v2441, 64
      %v2536 = vpop.permute.xlu0 %2535
      %2537 = vrot.lane.b32.xlu0 %v2442, 64
      %v2538 = vpop.permute.xlu0 %2537
      %2571 = vst.msk [vmem:[#allocation3] sm:$0xff] %vm966, %v2476
      %2572 = vst.msk [vmem:[#allocation3 + $0x8] sm:$0xff] %vm966, %v2478
      %2573 = vst.msk [vmem:[#allocation3 + $0x10] sm:$0xff] %vm966, %v2480
      %2574 = vst.msk [vmem:[#allocation3 + $0x18] sm:$0xff] %vm966, %v2482
      %2575 = vst.msk [vmem:[#allocation3 + $0x20] sm:$0xff] %vm966, %v2484
      %2576 = vst.msk [vmem:[#allocation3 + $0x28] sm:$0xff] %vm966, %v2486
      %2577 = vst.msk [vmem:[#allocation3 + $0x30] sm:$0xff] %vm966, %v2488
      %2578 = vst.msk [vmem:[#allocation3 + $0x38] sm:$0xff] %vm966, %v2490
      %2579 = vst.msk [vmem:[#allocation3 + $0x40] sm:$0xff] %vm966, %v2492
      %2580 = vst.msk [vmem:[#allocation3 + $0x48] sm:$0xff] %vm966, %v2494
      %2581 = vst.msk [vmem:[#allocation3 + $0x50] sm:$0xff] %vm966, %v2496
      %2582 = vst.msk [vmem:[#allocation3 + $0x58] sm:$0xff] %vm966, %v2498
      %2583 = vst.msk [vmem:[#allocation3 + $0x60] sm:$0xff] %vm966, %v2500
      %2584 = vst.msk [vmem:[#allocation3 + $0x68] sm:$0xff] %vm966, %v2502
      %2585 = vst.msk [vmem:[#allocation3 + $0x70] sm:$0xff] %vm966, %v2504
      %2586 = vst.msk [vmem:[#allocation3 + $0x78] sm:$0xff] %vm966, %v2506
      %2587 = vst.msk [vmem:[#allocation3 + $0x80] sm:$0xff] %vm966, %v2508
      %2588 = vst.msk [vmem:[#allocation3 + $0x88] sm:$0xff] %vm966, %v2510
      %2589 = vst.msk [vmem:[#allocation3 + $0x90] sm:$0xff] %vm966, %v2512
      %2590 = vst.msk [vmem:[#allocation3 + $0x98] sm:$0xff] %vm966, %v2514
      %2591 = vst.msk [vmem:[#allocation3 + $0xa0] sm:$0xff] %vm966, %v2516
      %2592 = vst.msk [vmem:[#allocation3 + $0xa8] sm:$0xff] %vm966, %v2518
      %2593 = vst.msk [vmem:[#allocation3 + $0xb0] sm:$0xff] %vm966, %v2520
      %2594 = vst.msk [vmem:[#allocation3 + $0xb8] sm:$0xff] %vm966, %v2522
      %2595 = vst.msk [vmem:[#allocation3 + $0xc0] sm:$0xff] %vm966, %v2524
      %2596 = vst.msk [vmem:[#allocation3 + $0xc8] sm:$0xff] %vm966, %v2526
      %2597 = vst.msk [vmem:[#allocation3 + $0xd0] sm:$0xff] %vm966, %v2528
      %2598 = vst.msk [vmem:[#allocation3 + $0xd8] sm:$0xff] %vm966, %v2530
      %2599 = vst.msk [vmem:[#allocation3 + $0xe0] sm:$0xff] %vm966, %v2532
      %2600 = vst.msk [vmem:[#allocation3 + $0xe8] sm:$0xff] %vm966, %v2534
      %2601 = vst.msk [vmem:[#allocation3 + $0xf0] sm:$0xff] %vm966, %v2536
      %2602 = vst.msk [vmem:[#allocation3 + $0xf8] sm:$0xff] %vm966, %v2538
      %v2603 = vld [vmem:[#allocation3] sm:$0xff]
      %v2604 = vld [vmem:[#allocation3 + $0x8] sm:$0xff]
      %v2605 = vld [vmem:[#allocation3 + $0x10] sm:$0xff]
      %v2606 = vld [vmem:[#allocation3 + $0x18] sm:$0xff]
      %v2607 = vld [vmem:[#allocation3 + $0x20] sm:$0xff]
      %v2608 = vld [vmem:[#allocation3 + $0x28] sm:$0xff]
      %v2609 = vld [vmem:[#allocation3 + $0x30] sm:$0xff]
      %v2610 = vld [vmem:[#allocation3 + $0x38] sm:$0xff]
      %v2611 = vld [vmem:[#allocation3 + $0x40] sm:$0xff]
      %v2612 = vld [vmem:[#allocation3 + $0x48] sm:$0xff]
      %v2613 = vld [vmem:[#allocation3 + $0x50] sm:$0xff]
      %v2614 = vld [vmem:[#allocation3 + $0x58] sm:$0xff]
      %v2615 = vld [vmem:[#allocation3 + $0x60] sm:$0xff]
      %v2616 = vld [vmem:[#allocation3 + $0x68] sm:$0xff]
      %v2617 = vld [vmem:[#allocation3 + $0x70] sm:$0xff]
      %v2618 = vld [vmem:[#allocation3 + $0x78] sm:$0xff]
      %v2619 = vld [vmem:[#allocation3 + $0x80] sm:$0xff]
      %v2620 = vld [vmem:[#allocation3 + $0x88] sm:$0xff]
      %v2621 = vld [vmem:[#allocation3 + $0x90] sm:$0xff]
      %v2622 = vld [vmem:[#allocation3 + $0x98] sm:$0xff]
      %v2623 = vld [vmem:[#allocation3 + $0xa0] sm:$0xff]
      %v2624 = vld [vmem:[#allocation3 + $0xa8] sm:$0xff]
      %v2625 = vld [vmem:[#allocation3 + $0xb0] sm:$0xff]
      %v2626 = vld [vmem:[#allocation3 + $0xb8] sm:$0xff]
      %v2627 = vld [vmem:[#allocation3 + $0xc0] sm:$0xff]
      %v2628 = vld [vmem:[#allocation3 + $0xc8] sm:$0xff]
      %v2629 = vld [vmem:[#allocation3 + $0xd0] sm:$0xff]
      %v2630 = vld [vmem:[#allocation3 + $0xd8] sm:$0xff]
      %v2631 = vld [vmem:[#allocation3 + $0xe0] sm:$0xff]
      %v2632 = vld [vmem:[#allocation3 + $0xe8] sm:$0xff]
      %v2633 = vld [vmem:[#allocation3 + $0xf0] sm:$0xff]
      %v2634 = vld [vmem:[#allocation3 + $0xf8] sm:$0xff]
      %v2636 = vsel %vm1511, %v2603, 0
      %v2639 = vsel %vm1511, %v2604, 0
      %v2642 = vsel %vm1511, %v2605, 0
      %v2645 = vsel %vm1511, %v2606, 0
      %v2648 = vsel %vm1511, %v2607, 0
      %v2651 = vsel %vm1511, %v2608, 0
      %v2654 = vsel %vm1511, %v2609, 0
      %v2657 = vsel %vm1511, %v2610, 0
      %v2660 = vsel %vm1511, %v2611, 0
      %v2663 = vsel %vm1511, %v2612, 0
      %v2666 = vsel %vm1511, %v2613, 0
      %v2669 = vsel %vm1511, %v2614, 0
      %v2672 = vsel %vm1511, %v2615, 0
      %v2675 = vsel %vm1511, %v2616, 0
      %v2678 = vsel %vm1511, %v2617, 0
      %v2681 = vsel %vm1511, %v2618, 0
      %v2684 = vsel %vm1511, %v2619, 0
      %v2687 = vsel %vm1511, %v2620, 0
      %v2690 = vsel %vm1511, %v2621, 0
      %v2693 = vsel %vm1511, %v2622, 0
      %v2696 = vsel %vm1511, %v2623, 0
      %v2699 = vsel %vm1511, %v2624, 0
      %v2702 = vsel %vm1511, %v2625, 0
      %v2705 = vsel %vm1511, %v2626, 0
      %v2708 = vsel %vm1511, %v2627, 0
      %v2711 = vsel %vm1511, %v2628, 0
      %v2714 = vsel %vm1511, %v2629, 0
      %v2717 = vsel %vm1511, %v2630, 0
      %v2720 = vsel %vm1511, %v2631, 0
      %v2723 = vsel %vm1511, %v2632, 0
      %v2726 = vsel %vm1511, %v2633, 0
      %v2729 = vsel %vm1511, %v2634, 0
      %2731 = vmatprep.subr.mxu0 0.0
      %2732 = vmatpush1.msra.mxu0 %v537
      %2733 = vmatprep.subr.mxu0 0.0
      %2734 = vmatpush1.msra.mxu0 %v538
      %2735 = vmatprep.subr.mxu0 0.0
      %2736 = vmatpush1.msra.mxu0 %v539
      %2737 = vmatprep.subr.mxu0 0.0
      %2738 = vmatpush1.msra.mxu0 %v540
      %2739 = vmatprep.subr.mxu0 0.0
      %2740 = vmatpush1.msra.mxu0 %v541
      %2741 = vmatprep.subr.mxu0 0.0
      %2742 = vmatpush1.msra.mxu0 %v542
      %2743 = vmatprep.subr.mxu0 0.0
      %2744 = vmatpush1.msra.mxu0 %v543
      %2745 = vmatprep.subr.mxu0 0.0
      %2746 = vmatpush1.msra.mxu0 %v544
      %2747 = vmatprep.subr.mxu0 0.0
      %2748 = vmatpush1.msra.mxu0 %v545
      %2749 = vmatprep.subr.mxu0 0.0
      %2750 = vmatpush1.msra.mxu0 %v546
      %2751 = vmatprep.subr.mxu0 0.0
      %2752 = vmatpush1.msra.mxu0 %v547
      %2753 = vmatprep.subr.mxu0 0.0
      %2754 = vmatpush1.msra.mxu0 %v548
      %2755 = vmatprep.subr.mxu0 0.0
      %2756 = vmatpush1.msra.mxu0 0.0
      %2757 = vmatprep.subr.mxu0 0.0
      %2758 = vmatpush1.msra.mxu0 0.0
      %2759 = vmatprep.subr.mxu0 0.0
      %2760 = vmatpush1.msra.mxu0 0.0
      %2761 = vmatprep.subr.mxu0 0.0
      %2762 = vmatpush1.msra.mxu0 0.0
      %2763 = vmatprep.subr.mxu0 0.0
      %2764 = vmatpush1.msra.mxu0 0.0
      %2765 = vmatprep.subr.mxu0 0.0
      %2766 = vmatpush1.msra.mxu0 0.0
      %2767 = vmatprep.subr.mxu0 0.0
      %2768 = vmatpush1.msra.mxu0 0.0
      %2769 = vmatprep.subr.mxu0 0.0
      %2770 = vmatpush1.msra.mxu0 0.0
      %2771 = vmatprep.subr.mxu0 0.0
      %2772 = vmatpush1.msra.mxu0 0.0
      %2773 = vmatprep.subr.mxu0 0.0
      %2774 = vmatpush1.msra.mxu0 0.0
      %2775 = vmatprep.subr.mxu0 0.0
      %2776 = vmatpush1.msra.mxu0 0.0
      %2777 = vmatprep.subr.mxu0 0.0
      %2778 = vmatpush1.msra.mxu0 0.0
      %2779 = vmatprep.subr.mxu0 0.0
      %2780 = vmatpush1.msra.mxu0 0.0
      %2781 = vmatprep.subr.mxu0 0.0
      %2782 = vmatpush1.msra.mxu0 0.0
      %2783 = vmatprep.subr.mxu0 0.0
      %2784 = vmatpush1.msra.mxu0 0.0
      %2785 = vmatprep.subr.mxu0 0.0
      %2786 = vmatpush1.msra.mxu0 0.0
      %2787 = vmatprep.subr.mxu0 0.0
      %2788 = vmatpush1.msra.mxu0 0.0
      %2789 = vmatprep.subr.mxu0 0.0
      %2790 = vmatpush1.msra.mxu0 0.0
      %2791 = vmatprep.subr.mxu0 0.0
      %2792 = vmatpush1.msra.mxu0 0.0
      %2793 = vmatprep.subr.mxu0 0.0
      %2794 = vmatpush1.msra.mxu0 0.0
      %2795 = vmatprep.mubr.f32.mxu0 0.0
      %2796 = vmatmul.mubr.f32.gmra.mrb[0].mxu0 %v2636
      %v2797 = vpop.f32.mrb[0].mxu0
      %v2798 = vadd.f32 0.0, %v2797
      %v2799 = vpop.f32.mrb[0].mxu0
      %2800 = vmatprep.mubr.f32.mxu0 0.0
      %2801 = vmatmul.mubr.f32.gmra.mrb[0].mxu0 %v2639
      %v2802 = vpop.f32.mrb[0].mxu0
      %v2803 = vadd.f32 0.0, %v2802
      %v2804 = vpop.f32.mrb[0].mxu0
      %2805 = vmatprep.mubr.f32.mxu0 0.0
      %2806 = vmatmul.mubr.f32.gmra.mrb[0].mxu0 %v2642
      %v2807 = vpop.f32.mrb[0].mxu0
      %v2808 = vadd.f32 0.0, %v2807
      %v2809 = vpop.f32.mrb[0].mxu0
      %2810 = vmatprep.mubr.f32.mxu0 0.0
      %2811 = vmatmul.mubr.f32.gmra.mrb[0].mxu0 %v2645
      %v2812 = vpop.f32.mrb[0].mxu0
      %v2813 = vadd.f32 0.0, %v2812
      %v2814 = vpop.f32.mrb[0].mxu0
      %2815 = vmatprep.mubr.f32.mxu0 0.0
      %2816 = vmatmul.mubr.f32.gmra.mrb[0].mxu0 %v2648
      %v2817 = vpop.f32.mrb[0].mxu0
      %v2818 = vadd.f32 0.0, %v2817
      %v2819 = vpop.f32.mrb[0].mxu0
      %2820 = vmatprep.mubr.f32.mxu0 0.0
      %2821 = vmatmul.mubr.f32.gmra.mrb[0].mxu0 %v2651
      %v2822 = vpop.f32.mrb[0].mxu0
      %v2823 = vadd.f32 0.0, %v2822
      %v2824 = vpop.f32.mrb[0].mxu0
      %2825 = vmatprep.mubr.f32.mxu0 0.0
      %2826 = vmatmul.mubr.f32.gmra.mrb[0].mxu0 %v2654
      %v2827 = vpop.f32.mrb[0].mxu0
      %v2828 = vadd.f32 0.0, %v2827
      %v2829 = vpop.f32.mrb[0].mxu0
      %2830 = vmatprep.mubr.f32.mxu0 0.0
      %2831 = vmatmul.mubr.f32.gmra.mrb[0].mxu0 %v2657
      %v2832 = vpop.f32.mrb[0].mxu0
      %v2833 = vadd.f32 0.0, %v2832
      %v2834 = vpop.f32.mrb[0].mxu0
      %2835 = vmatprep.mubr.f32.mxu0 0.0
      %2836 = vmatmul.mubr.f32.gmra.mrb[0].mxu0 %v2660
      %v2837 = vpop.f32.mrb[0].mxu0
      %v2838 = vadd.f32 0.0, %v2837
      %v2839 = vpop.f32.mrb[0].mxu0
      %2840 = vmatprep.mubr.f32.mxu0 0.0
      %2841 = vmatmul.mubr.f32.gmra.mrb[0].mxu0 %v2663
      %v2842 = vpop.f32.mrb[0].mxu0
      %v2843 = vadd.f32 0.0, %v2842
      %v2844 = vpop.f32.mrb[0].mxu0
      %2845 = vmatprep.mubr.f32.mxu0 0.0
      %2846 = vmatmul.mubr.f32.gmra.mrb[0].mxu0 %v2666
      %v2847 = vpop.f32.mrb[0].mxu0
      %v2848 = vadd.f32 0.0, %v2847
      %v2849 = vpop.f32.mrb[0].mxu0
      %2850 = vmatprep.mubr.f32.mxu0 0.0
      %2851 = vmatmul.mubr.f32.gmra.mrb[0].mxu0 %v2669
      %v2852 = vpop.f32.mrb[0].mxu0
      %v2853 = vadd.f32 0.0, %v2852
      %v2854 = vpop.f32.mrb[0].mxu0
      %2855 = vmatprep.mubr.f32.mxu0 0.0
      %2856 = vmatmul.mubr.f32.gmra.mrb[0].mxu0 %v2672
      %v2857 = vpop.f32.mrb[0].mxu0
      %v2858 = vadd.f32 0.0, %v2857
      %v2859 = vpop.f32.mrb[0].mxu0
      %2860 = vmatprep.mubr.f32.mxu0 0.0
      %2861 = vmatmul.mubr.f32.gmra.mrb[0].mxu0 %v2675
      %v2862 = vpop.f32.mrb[0].mxu0
      %v2863 = vadd.f32 0.0, %v2862
      %v2864 = vpop.f32.mrb[0].mxu0
      %2865 = vmatprep.mubr.f32.mxu0 0.0
      %2866 = vmatmul.mubr.f32.gmra.mrb[0].mxu0 %v2678
      %v2867 = vpop.f32.mrb[0].mxu0
      %v2868 = vadd.f32 0.0, %v2867
      %v2869 = vpop.f32.mrb[0].mxu0
      %2870 = vmatprep.mubr.f32.mxu0 0.0
      %2871 = vmatmul.mubr.f32.gmra.mrb[0].mxu0 %v2681
      %v2872 = vpop.f32.mrb[0].mxu0
      %v2873 = vadd.f32 0.0, %v2872
      %v2874 = vpop.f32.mrb[0].mxu0
      %2875 = vmatprep.mubr.f32.mxu0 0.0
      %2876 = vmatmul.mubr.f32.gmra.mrb[0].mxu0 %v2684
      %v2877 = vpop.f32.mrb[0].mxu0
      %v2878 = vadd.f32 0.0, %v2877
      %v2879 = vpop.f32.mrb[0].mxu0
      %2880 = vmatprep.mubr.f32.mxu0 0.0
      %2881 = vmatmul.mubr.f32.gmra.mrb[0].mxu0 %v2687
      %v2882 = vpop.f32.mrb[0].mxu0
      %v2883 = vadd.f32 0.0, %v2882
      %v2884 = vpop.f32.mrb[0].mxu0
      %2885 = vmatprep.mubr.f32.mxu0 0.0
      %2886 = vmatmul.mubr.f32.gmra.mrb[0].mxu0 %v2690
      %v2887 = vpop.f32.mrb[0].mxu0
      %v2888 = vadd.f32 0.0, %v2887
      %v2889 = vpop.f32.mrb[0].mxu0
      %2890 = vmatprep.mubr.f32.mxu0 0.0
      %2891 = vmatmul.mubr.f32.gmra.mrb[0].mxu0 %v2693
      %v2892 = vpop.f32.mrb[0].mxu0
      %v2893 = vadd.f32 0.0, %v2892
      %v2894 = vpop.f32.mrb[0].mxu0
      %2895 = vmatprep.mubr.f32.mxu0 0.0
      %2896 = vmatmul.mubr.f32.gmra.mrb[0].mxu0 %v2696
      %v2897 = vpop.f32.mrb[0].mxu0
      %v2898 = vadd.f32 0.0, %v2897
      %v2899 = vpop.f32.mrb[0].mxu0
      %2900 = vmatprep.mubr.f32.mxu0 0.0
      %2901 = vmatmul.mubr.f32.gmra.mrb[0].mxu0 %v2699
      %v2902 = vpop.f32.mrb[0].mxu0
      %v2903 = vadd.f32 0.0, %v2902
      %v2904 = vpop.f32.mrb[0].mxu0
      %2905 = vmatprep.mubr.f32.mxu0 0.0
      %2906 = vmatmul.mubr.f32.gmra.mrb[0].mxu0 %v2702
      %v2907 = vpop.f32.mrb[0].mxu0
      %v2908 = vadd.f32 0.0, %v2907
      %v2909 = vpop.f32.mrb[0].mxu0
      %2910 = vmatprep.mubr.f32.mxu0 0.0
      %2911 = vmatmul.mubr.f32.gmra.mrb[0].mxu0 %v2705
      %v2912 = vpop.f32.mrb[0].mxu0
      %v2913 = vadd.f32 0.0, %v2912
      %v2914 = vpop.f32.mrb[0].mxu0
      %2915 = vmatprep.mubr.f32.mxu0 0.0
      %2916 = vmatmul.mubr.f32.gmra.mrb[0].mxu0 %v2708
      %v2917 = vpop.f32.mrb[0].mxu0
      %v2918 = vadd.f32 0.0, %v2917
      %v2919 = vpop.f32.mrb[0].mxu0
      %2920 = vmatprep.mubr.f32.mxu0 0.0
      %2921 = vmatmul.mubr.f32.gmra.mrb[0].mxu0 %v2711
      %v2922 = vpop.f32.mrb[0].mxu0
      %v2923 = vadd.f32 0.0, %v2922
      %v2924 = vpop.f32.mrb[0].mxu0
      %2925 = vmatprep.mubr.f32.mxu0 0.0
      %2926 = vmatmul.mubr.f32.gmra.mrb[0].mxu0 %v2714
      %v2927 = vpop.f32.mrb[0].mxu0
      %v2928 = vadd.f32 0.0, %v2927
      %v2929 = vpop.f32.mrb[0].mxu0
      %2930 = vmatprep.mubr.f32.mxu0 0.0
      %2931 = vmatmul.mubr.f32.gmra.mrb[0].mxu0 %v2717
      %v2932 = vpop.f32.mrb[0].mxu0
      %v2933 = vadd.f32 0.0, %v2932
      %v2934 = vpop.f32.mrb[0].mxu0
      %2935 = vmatprep.mubr.f32.mxu0 0.0
      %2936 = vmatmul.mubr.f32.gmra.mrb[0].mxu0 %v2720
      %v2937 = vpop.f32.mrb[0].mxu0
      %v2938 = vadd.f32 0.0, %v2937
      %v2939 = vpop.f32.mrb[0].mxu0
      %2940 = vmatprep.mubr.f32.mxu0 0.0
      %2941 = vmatmul.mubr.f32.gmra.mrb[0].mxu0 %v2723
      %v2942 = vpop.f32.mrb[0].mxu0
      %v2943 = vadd.f32 0.0, %v2942
      %v2944 = vpop.f32.mrb[0].mxu0
      %2945 = vmatprep.mubr.f32.mxu0 0.0
      %2946 = vmatmul.mubr.f32.gmra.mrb[0].mxu0 %v2726
      %v2947 = vpop.f32.mrb[0].mxu0
      %v2948 = vadd.f32 0.0, %v2947
      %v2949 = vpop.f32.mrb[0].mxu0
      %2950 = vmatprep.mubr.f32.mxu0 0.0
      %2951 = vmatmul.mubr.f32.gmra.mrb[0].mxu0 %v2729
      %v2952 = vpop.f32.mrb[0].mxu0
      %v2953 = vadd.f32 0.0, %v2952
      %v2954 = vpop.f32.mrb[0].mxu0
      %2955 = vdwg.mxu0
      %v2956 = vadd.f32 %v1996, %v2798
      %v2957 = vadd.f32 %v2001, %v2803
      %v2958 = vadd.f32 %v2006, %v2808
      %v2959 = vadd.f32 %v2011, %v2813
      %v2960 = vadd.f32 %v2016, %v2818
      %v2961 = vadd.f32 %v2021, %v2823
      %v2962 = vadd.f32 %v2026, %v2828
      %v2963 = vadd.f32 %v2031, %v2833
      %v2964 = vadd.f32 %v2036, %v2838
      %v2965 = vadd.f32 %v2041, %v2843
      %v2966 = vadd.f32 %v2046, %v2848
      %v2967 = vadd.f32 %v2051, %v2853
      %v2968 = vadd.f32 %v2056, %v2858
      %v2969 = vadd.f32 %v2061, %v2863
      %v2970 = vadd.f32 %v2066, %v2868
      %v2971 = vadd.f32 %v2071, %v2873
      %v2972 = vadd.f32 %v2076, %v2878
      %v2973 = vadd.f32 %v2081, %v2883
      %v2974 = vadd.f32 %v2086, %v2888
      %v2975 = vadd.f32 %v2091, %v2893
      %v2976 = vadd.f32 %v2096, %v2898
      %v2977 = vadd.f32 %v2101, %v2903
      %v2978 = vadd.f32 %v2106, %v2908
      %v2979 = vadd.f32 %v2111, %v2913
      %v2980 = vadd.f32 %v2116, %v2918
      %v2981 = vadd.f32 %v2121, %v2923
      %v2982 = vadd.f32 %v2126, %v2928
      %v2983 = vadd.f32 %v2131, %v2933
      %v2984 = vadd.f32 %v2136, %v2938
      %v2985 = vadd.f32 %v2141, %v2943
      %v2986 = vadd.f32 %v2146, %v2948
      %v2987 = vadd.f32 %v2151, %v2953
      %v2988 = vld [vmem:[%s291] sm:$0x1]
      %v2990 = vlaneseq
      %v2991 = vshrl.u32 %v2990, 7
      %v2992 = vsub.s32 0, %v2991
      %v2993 = vrot.slane %v2988, %v2992
      %v2995 = vadd.f32 %v2956, %v2993
      %v2996 = vadd.f32 %v2957, %v2993
      %v2997 = vadd.f32 %v2958, %v2993
      %v2998 = vadd.f32 %v2959, %v2993
      %v2999 = vadd.f32 %v2960, %v2993
      %v3000 = vadd.f32 %v2961, %v2993
      %v3001 = vadd.f32 %v2962, %v2993
      %v3002 = vadd.f32 %v2963, %v2993
      %v3003 = vadd.f32 %v2964, %v2993
      %v3004 = vadd.f32 %v2965, %v2993
      %v3005 = vadd.f32 %v2966, %v2993
      %v3006 = vadd.f32 %v2967, %v2993
      %v3007 = vadd.f32 %v2968, %v2993
      %v3008 = vadd.f32 %v2969, %v2993
      %v3009 = vadd.f32 %v2970, %v2993
      %v3010 = vadd.f32 %v2971, %v2993
      %v3011 = vadd.f32 %v2972, %v2993
      %v3012 = vadd.f32 %v2973, %v2993
      %v3013 = vadd.f32 %v2974, %v2993
      %v3014 = vadd.f32 %v2975, %v2993
      %v3015 = vadd.f32 %v2976, %v2993
      %v3016 = vadd.f32 %v2977, %v2993
      %v3017 = vadd.f32 %v2978, %v2993
      %v3018 = vadd.f32 %v2979, %v2993
      %v3019 = vadd.f32 %v2980, %v2993
      %v3020 = vadd.f32 %v2981, %v2993
      %v3021 = vadd.f32 %v2982, %v2993
      %v3022 = vadd.f32 %v2983, %v2993
      %v3023 = vadd.f32 %v2984, %v2993
      %v3024 = vadd.f32 %v2985, %v2993
      %v3025 = vadd.f32 %v2986, %v2993
      %v3026 = vadd.f32 %v2987, %v2993
      %v3027 = vmax.f32 %v2995, 0.0
      %v3028 = vmax.f32 %v2996, 0.0
      %v3029 = vmax.f32 %v2997, 0.0
      %v3030 = vmax.f32 %v2998, 0.0
      %v3031 = vmax.f32 %v2999, 0.0
      %v3032 = vmax.f32 %v3000, 0.0
      %v3033 = vmax.f32 %v3001, 0.0
      %v3034 = vmax.f32 %v3002, 0.0
      %v3035 = vmax.f32 %v3003, 0.0
      %v3036 = vmax.f32 %v3004, 0.0
      %v3037 = vmax.f32 %v3005, 0.0
      %v3038 = vmax.f32 %v3006, 0.0
      %v3039 = vmax.f32 %v3007, 0.0
      %v3040 = vmax.f32 %v3008, 0.0
      %v3041 = vmax.f32 %v3009, 0.0
      %v3042 = vmax.f32 %v3010, 0.0
      %v3043 = vmax.f32 %v3011, 0.0
      %v3044 = vmax.f32 %v3012, 0.0
      %v3045 = vmax.f32 %v3013, 0.0
      %v3046 = vmax.f32 %v3014, 0.0
      %v3047 = vmax.f32 %v3015, 0.0
      %v3048 = vmax.f32 %v3016, 0.0
      %v3049 = vmax.f32 %v3017, 0.0
      %v3050 = vmax.f32 %v3018, 0.0
      %v3051 = vmax.f32 %v3019, 0.0
      %v3052 = vmax.f32 %v3020, 0.0
      %v3053 = vmax.f32 %v3021, 0.0
      %v3054 = vmax.f32 %v3022, 0.0
      %v3055 = vmax.f32 %v3023, 0.0
      %v3056 = vmax.f32 %v3024, 0.0
      %v3057 = vmax.f32 %v3025, 0.0
      %v3058 = vmax.f32 %v3026, 0.0
      %3059 = vst.msk [vmem:[%s479 + $0x8] sm:$0xff] %vm480, %v3027
      %3060 = vst.msk [vmem:[%s479 + $0x10] sm:$0xff] %vm480, %v3028
      %3061 = vst.msk [vmem:[%s479 + $0x28] sm:$0xff] %vm480, %v3029
      %3062 = vst.msk [vmem:[%s479 + $0x30] sm:$0xff] %vm480, %v3030
      %3063 = vst.msk [vmem:[%s479 + $0x48] sm:$0xff] %vm480, %v3031
      %3064 = vst.msk [vmem:[%s479 + $0x50] sm:$0xff] %vm480, %v3032
      %3065 = vst.msk [vmem:[%s479 + $0x68] sm:$0xff] %vm480, %v3033
      %3066 = vst.msk [vmem:[%s479 + $0x70] sm:$0xff] %vm480, %v3034
      %3067 = vst.msk [vmem:[%s479 + $0x88] sm:$0xff] %vm480, %v3035
      %3068 = vst.msk [vmem:[%s479 + $0x90] sm:$0xff] %vm480, %v3036
      %3069 = vst.msk [vmem:[%s479 + $0xa8] sm:$0xff] %vm480, %v3037
      %3070 = vst.msk [vmem:[%s479 + $0xb0] sm:$0xff] %vm480, %v3038
      %3071 = vst.msk [vmem:[%s479 + $0xc8] sm:$0xff] %vm480, %v3039
      %3072 = vst.msk [vmem:[%s479 + $0xd0] sm:$0xff] %vm480, %v3040
      %3073 = vst.msk [vmem:[%s479 + $0xe8] sm:$0xff] %vm480, %v3041
      %3074 = vst.msk [vmem:[%s479 + $0xf0] sm:$0xff] %vm480, %v3042
      %3075 = vst.msk [vmem:[%s479 + $0x108] sm:$0xff] %vm480, %v3043
      %3076 = vst.msk [vmem:[%s479 + $0x110] sm:$0xff] %vm480, %v3044
      %3077 = vst.msk [vmem:[%s479 + $0x128] sm:$0xff] %vm480, %v3045
      %3078 = vst.msk [vmem:[%s479 + $0x130] sm:$0xff] %vm480, %v3046
      %3079 = vst.msk [vmem:[%s479 + $0x148] sm:$0xff] %vm480, %v3047
      %3080 = vst.msk [vmem:[%s479 + $0x150] sm:$0xff] %vm480, %v3048
      %3081 = vst.msk [vmem:[%s479 + $0x168] sm:$0xff] %vm480, %v3049
      %3082 = vst.msk [vmem:[%s479 + $0x170] sm:$0xff] %vm480, %v3050
      %3083 = vst.msk [vmem:[%s479 + $0x188] sm:$0xff] %vm480, %v3051
      %3084 = vst.msk [vmem:[%s479 + $0x190] sm:$0xff] %vm480, %v3052
      %3085 = vst.msk [vmem:[%s479 + $0x1a8] sm:$0xff] %vm480, %v3053
      %3086 = vst.msk [vmem:[%s479 + $0x1b0] sm:$0xff] %vm480, %v3054
      %3087 = vst.msk [vmem:[%s479 + $0x1c8] sm:$0xff] %vm480, %v3055
      %3088 = vst.msk [vmem:[%s479 + $0x1d0] sm:$0xff] %vm480, %v3056
      %3089 = vst.msk [vmem:[%s479 + $0x1e8] sm:$0xff] %vm480, %v3057
      %3090 = vst.msk [vmem:[%s479 + $0x1f0] sm:$0xff] %vm480, %v3058
      %v3091 = vld [vmem:[%s296] sm:$0xff]
      %v3092 = vld [vmem:[%s296 + $0x8] sm:$0xff]
      %v3093 = vld [vmem:[%s296 + $0x10] sm:$0xff]
      %v3094 = vld [vmem:[%s296 + $0x18] sm:$0xff]
      %v3095 = vld [vmem:[%s296 + $0x20] sm:$0xff]
      %v3096 = vld [vmem:[%s296 + $0x28] sm:$0xff]
      %v3097 = vld [vmem:[%s296 + $0x30] sm:$0xff]
      %v3098 = vld [vmem:[%s296 + $0x38] sm:$0xff]
      %v3099 = vld [vmem:[%s296 + $0x40] sm:$0xff]
      %v3100 = vld [vmem:[%s296 + $0x48] sm:$0xff]
      %v3101 = vld [vmem:[%s296 + $0x50] sm:$0xff]
      %v3102 = vld [vmem:[%s296 + $0x58] sm:$0xff]
      %v3103 = vld [vmem:[%s296 + $0x60] sm:$0xff]
      %v3104 = vld [vmem:[%s296 + $0x68] sm:$0xff]
      %v3105 = vld [vmem:[%s296 + $0x70] sm:$0xff]
      %v3106 = vld [vmem:[%s296 + $0x78] sm:$0xff]
      %v3107 = vld [vmem:[%s296 + $0x80] sm:$0xff]
      %v3108 = vld [vmem:[%s296 + $0x88] sm:$0xff]
      %v3109 = vld [vmem:[%s296 + $0x90] sm:$0xff]
      %v3110 = vld [vmem:[%s296 + $0x98] sm:$0xff]
      %v3111 = vld [vmem:[%s296 + $0xa0] sm:$0xff]
      %v3112 = vld [vmem:[%s296 + $0xa8] sm:$0xff]
      %v3113 = vld [vmem:[%s296 + $0xb0] sm:$0xff]
      %v3114 = vld [vmem:[%s296 + $0xb8] sm:$0xff]
      %v3115 = vld [vmem:[%s296 + $0xc0] sm:$0xff]
      %v3116 = vld [vmem:[%s296 + $0xc8] sm:$0xff]
      %v3117 = vld [vmem:[%s296 + $0xd0] sm:$0xff]
      %v3118 = vld [vmem:[%s296 + $0xd8] sm:$0xff]
      %v3119 = vld [vmem:[%s296 + $0xe0] sm:$0xff]
      %v3120 = vld [vmem:[%s296 + $0xe8] sm:$0xff]
      %v3121 = vld [vmem:[%s296 + $0xf0] sm:$0xff]
      %v3122 = vld [vmem:[%s296 + $0xf8] sm:$0xff]
      %v3123 = vld [vmem:[%s296 + $0x100] sm:$0xff]
      %v3124 = vld [vmem:[%s296 + $0x108] sm:$0xff]
      %v3125 = vld [vmem:[%s296 + $0x110] sm:$0xff]
      %v3126 = vld [vmem:[%s296 + $0x118] sm:$0xff]
      %v3127 = vld [vmem:[#allocation2 + $0x7] sm:$0xff]
      %v3128 = vld [vmem:[#allocation2 + $0xf] sm:$0xff]
      %v3129 = vld [vmem:[#allocation2 + $0x27] sm:$0xff]
      %v3130 = vld [vmem:[#allocation2 + $0x2f] sm:$0xff]
      %v3131 = vld [vmem:[#allocation2 + $0x47] sm:$0xff]
      %v3132 = vld [vmem:[#allocation2 + $0x4f] sm:$0xff]
      %v3133 = vld [vmem:[#allocation2 + $0x67] sm:$0xff]
      %v3134 = vld [vmem:[#allocation2 + $0x6f] sm:$0xff]
      %v3135 = vld [vmem:[#allocation2 + $0x87] sm:$0xff]
      %v3136 = vld [vmem:[#allocation2 + $0x8f] sm:$0xff]
      %v3137 = vld [vmem:[#allocation2 + $0xa7] sm:$0xff]
      %v3138 = vld [vmem:[#allocation2 + $0xaf] sm:$0xff]
      %v3139 = vld [vmem:[#allocation2 + $0xc7] sm:$0xff]
      %v3140 = vld [vmem:[#allocation2 + $0xcf] sm:$0xff]
      %v3141 = vld [vmem:[#allocation2 + $0xe7] sm:$0xff]
      %v3142 = vld [vmem:[#allocation2 + $0xef] sm:$0xff]
      %v3143 = vld [vmem:[#allocation2 + $0x107] sm:$0xff]
      %v3144 = vld [vmem:[#allocation2 + $0x10f] sm:$0xff]
      %v3145 = vld [vmem:[#allocation2 + $0x127] sm:$0xff]
      %v3146 = vld [vmem:[#allocation2 + $0x12f] sm:$0xff]
      %v3147 = vld [vmem:[#allocation2 + $0x147] sm:$0xff]
      %v3148 = vld [vmem:[#allocation2 + $0x14f] sm:$0xff]
      %v3149 = vld [vmem:[#allocation2 + $0x167] sm:$0xff]
      %v3150 = vld [vmem:[#allocation2 + $0x16f] sm:$0xff]
      %v3151 = vld [vmem:[#allocation2 + $0x187] sm:$0xff]
      %v3152 = vld [vmem:[#allocation2 + $0x18f] sm:$0xff]
      %v3153 = vld [vmem:[#allocation2 + $0x1a7] sm:$0xff]
      %v3154 = vld [vmem:[#allocation2 + $0x1af] sm:$0xff]
      %v3155 = vld [vmem:[#allocation2 + $0x1c7] sm:$0xff]
      %v3156 = vld [vmem:[#allocation2 + $0x1cf] sm:$0xff]
      %v3157 = vld [vmem:[#allocation2 + $0x1e7] sm:$0xff]
      %v3158 = vld [vmem:[#allocation2 + $0x1ef] sm:$0xff]
      %3159 = vst.msk [vmem:[#allocation3] sm:$0xff] %vm480, %v3127
      %3160 = vst.msk [vmem:[#allocation3 + $0x8] sm:$0xff] %vm480, %v3128
      %3161 = vst.msk [vmem:[#allocation3 + $0x10] sm:$0xff] %vm480, %v3129
      %3162 = vst.msk [vmem:[#allocation3 + $0x18] sm:$0xff] %vm480, %v3130
      %3163 = vst.msk [vmem:[#allocation3 + $0x20] sm:$0xff] %vm480, %v3131
      %3164 = vst.msk [vmem:[#allocation3 + $0x28] sm:$0xff] %vm480, %v3132
      %3165 = vst.msk [vmem:[#allocation3 + $0x30] sm:$0xff] %vm480, %v3133
      %3166 = vst.msk [vmem:[#allocation3 + $0x38] sm:$0xff] %vm480, %v3134
      %3167 = vst.msk [vmem:[#allocation3 + $0x40] sm:$0xff] %vm480, %v3135
      %3168 = vst.msk [vmem:[#allocation3 + $0x48] sm:$0xff] %vm480, %v3136
      %3169 = vst.msk [vmem:[#allocation3 + $0x50] sm:$0xff] %vm480, %v3137
      %3170 = vst.msk [vmem:[#allocation3 + $0x58] sm:$0xff] %vm480, %v3138
      %3171 = vst.msk [vmem:[#allocation3 + $0x60] sm:$0xff] %vm480, %v3139
      %3172 = vst.msk [vmem:[#allocation3 + $0x68] sm:$0xff] %vm480, %v3140
      %3173 = vst.msk [vmem:[#allocation3 + $0x70] sm:$0xff] %vm480, %v3141
      %3174 = vst.msk [vmem:[#allocation3 + $0x78] sm:$0xff] %vm480, %v3142
      %3175 = vst.msk [vmem:[#allocation3 + $0x80] sm:$0xff] %vm480, %v3143
      %3176 = vst.msk [vmem:[#allocation3 + $0x88] sm:$0xff] %vm480, %v3144
      %3177 = vst.msk [vmem:[#allocation3 + $0x90] sm:$0xff] %vm480, %v3145
      %3178 = vst.msk [vmem:[#allocation3 + $0x98] sm:$0xff] %vm480, %v3146
      %3179 = vst.msk [vmem:[#allocation3 + $0xa0] sm:$0xff] %vm480, %v3147
      %3180 = vst.msk [vmem:[#allocation3 + $0xa8] sm:$0xff] %vm480, %v3148
      %3181 = vst.msk [vmem:[#allocation3 + $0xb0] sm:$0xff] %vm480, %v3149
      %3182 = vst.msk [vmem:[#allocation3 + $0xb8] sm:$0xff] %vm480, %v3150
      %3183 = vst.msk [vmem:[#allocation3 + $0xc0] sm:$0xff] %vm480, %v3151
      %3184 = vst.msk [vmem:[#allocation3 + $0xc8] sm:$0xff] %vm480, %v3152
      %3185 = vst.msk [vmem:[#allocation3 + $0xd0] sm:$0xff] %vm480, %v3153
      %3186 = vst.msk [vmem:[#allocation3 + $0xd8] sm:$0xff] %vm480, %v3154
      %3187 = vst.msk [vmem:[#allocation3 + $0xe0] sm:$0xff] %vm480, %v3155
      %3188 = vst.msk [vmem:[#allocation3 + $0xe8] sm:$0xff] %vm480, %v3156
      %3189 = vst.msk [vmem:[#allocation3 + $0xf0] sm:$0xff] %vm480, %v3157
      %3190 = vst.msk [vmem:[#allocation3 + $0xf8] sm:$0xff] %vm480, %v3158
      %v3191 = vld [vmem:[#allocation2 + $0x8] sm:$0xff]
      %v3192 = vld [vmem:[#allocation2 + $0x10] sm:$0xff]
      %v3193 = vld [vmem:[#allocation2 + $0x28] sm:$0xff]
      %v3194 = vld [vmem:[#allocation2 + $0x30] sm:$0xff]
      %v3195 = vld [vmem:[#allocation2 + $0x48] sm:$0xff]
      %v3196 = vld [vmem:[#allocation2 + $0x50] sm:$0xff]
      %v3197 = vld [vmem:[#allocation2 + $0x68] sm:$0xff]
      %v3198 = vld [vmem:[#allocation2 + $0x70] sm:$0xff]
      %v3199 = vld [vmem:[#allocation2 + $0x88] sm:$0xff]
      %v3200 = vld [vmem:[#allocation2 + $0x90] sm:$0xff]
      %v3201 = vld [vmem:[#allocation2 + $0xa8] sm:$0xff]
      %v3202 = vld [vmem:[#allocation2 + $0xb0] sm:$0xff]
      %v3203 = vld [vmem:[#allocation2 + $0xc8] sm:$0xff]
      %v3204 = vld [vmem:[#allocation2 + $0xd0] sm:$0xff]
      %v3205 = vld [vmem:[#allocation2 + $0xe8] sm:$0xff]
      %v3206 = vld [vmem:[#allocation2 + $0xf0] sm:$0xff]
      %v3207 = vld [vmem:[#allocation2 + $0x108] sm:$0xff]
      %v3208 = vld [vmem:[#allocation2 + $0x110] sm:$0xff]
      %v3209 = vld [vmem:[#allocation2 + $0x128] sm:$0xff]
      %v3210 = vld [vmem:[#allocation2 + $0x130] sm:$0xff]
      %v3211 = vld [vmem:[#allocation2 + $0x148] sm:$0xff]
      %v3212 = vld [vmem:[#allocation2 + $0x150] sm:$0xff]
      %v3213 = vld [vmem:[#allocation2 + $0x168] sm:$0xff]
      %v3214 = vld [vmem:[#allocation2 + $0x170] sm:$0xff]
      %v3215 = vld [vmem:[#allocation2 + $0x188] sm:$0xff]
      %v3216 = vld [vmem:[#allocation2 + $0x190] sm:$0xff]
      %v3217 = vld [vmem:[#allocation2 + $0x1a8] sm:$0xff]
      %v3218 = vld [vmem:[#allocation2 + $0x1b0] sm:$0xff]
      %v3219 = vld [vmem:[#allocation2 + $0x1c8] sm:$0xff]
      %v3220 = vld [vmem:[#allocation2 + $0x1d0] sm:$0xff]
      %v3221 = vld [vmem:[#allocation2 + $0x1e8] sm:$0xff]
      %v3222 = vld [vmem:[#allocation2 + $0x1f0] sm:$0xff]
      %3255 = vrot.lane.b32.xlu0 %v3191, 32
      %v3256 = vpop.permute.xlu0 %3255
      %3257 = vrot.lane.b32.xlu0 %v3192, 32
      %v3258 = vpop.permute.xlu0 %3257
      %3259 = vrot.lane.b32.xlu0 %v3193, 32
      %v3260 = vpop.permute.xlu0 %3259
      %3261 = vrot.lane.b32.xlu0 %v3194, 32
      %v3262 = vpop.permute.xlu0 %3261
      %3263 = vrot.lane.b32.xlu0 %v3195, 32
      %v3264 = vpop.permute.xlu0 %3263
      %3265 = vrot.lane.b32.xlu0 %v3196, 32
      %v3266 = vpop.permute.xlu0 %3265
      %3267 = vrot.lane.b32.xlu0 %v3197, 32
      %v3268 = vpop.permute.xlu0 %3267
      %3269 = vrot.lane.b32.xlu0 %v3198, 32
      %v3270 = vpop.permute.xlu0 %3269
      %3271 = vrot.lane.b32.xlu0 %v3199, 32
      %v3272 = vpop.permute.xlu0 %3271
      %3273 = vrot.lane.b32.xlu0 %v3200, 32
      %v3274 = vpop.permute.xlu0 %3273
      %3275 = vrot.lane.b32.xlu0 %v3201, 32
      %v3276 = vpop.permute.xlu0 %3275
      %3277 = vrot.lane.b32.xlu0 %v3202, 32
      %v3278 = vpop.permute.xlu0 %3277
      %3279 = vrot.lane.b32.xlu0 %v3203, 32
      %v3280 = vpop.permute.xlu0 %3279
      %3281 = vrot.lane.b32.xlu0 %v3204, 32
      %v3282 = vpop.permute.xlu0 %3281
      %3283 = vrot.lane.b32.xlu0 %v3205, 32
      %v3284 = vpop.permute.xlu0 %3283
      %3285 = vrot.lane.b32.xlu0 %v3206, 32
      %v3286 = vpop.permute.xlu0 %3285
      %3287 = vrot.lane.b32.xlu0 %v3207, 32
      %v3288 = vpop.permute.xlu0 %3287
      %3289 = vrot.lane.b32.xlu0 %v3208, 32
      %v3290 = vpop.permute.xlu0 %3289
      %3291 = vrot.lane.b32.xlu0 %v3209, 32
      %v3292 = vpop.permute.xlu0 %3291
      %3293 = vrot.lane.b32.xlu0 %v3210, 32
      %v3294 = vpop.permute.xlu0 %3293
      %3295 = vrot.lane.b32.xlu0 %v3211, 32
      %v3296 = vpop.permute.xlu0 %3295
      %3297 = vrot.lane.b32.xlu0 %v3212, 32
      %v3298 = vpop.permute.xlu0 %3297
      %3299 = vrot.lane.b32.xlu0 %v3213, 32
      %v3300 = vpop.permute.xlu0 %3299
      %3301 = vrot.lane.b32.xlu0 %v3214, 32
      %v3302 = vpop.permute.xlu0 %3301
      %3303 = vrot.lane.b32.xlu0 %v3215, 32
      %v3304 = vpop.permute.xlu0 %3303
      %3305 = vrot.lane.b32.xlu0 %v3216, 32
      %v3306 = vpop.permute.xlu0 %3305
      %3307 = vrot.lane.b32.xlu0 %v3217, 32
      %v3308 = vpop.permute.xlu0 %3307
      %3309 = vrot.lane.b32.xlu0 %v3218, 32
      %v3310 = vpop.permute.xlu0 %3309
      %3311 = vrot.lane.b32.xlu0 %v3219, 32
      %v3312 = vpop.permute.xlu0 %3311
      %3313 = vrot.lane.b32.xlu0 %v3220, 32
      %v3314 = vpop.permute.xlu0 %3313
      %3315 = vrot.lane.b32.xlu0 %v3221, 32
      %v3316 = vpop.permute.xlu0 %3315
      %3317 = vrot.lane.b32.xlu0 %v3222, 32
      %v3318 = vpop.permute.xlu0 %3317
      %3351 = vst.msk [vmem:[#allocation3] sm:$0xff] %vm773, %v3256
      %3352 = vst.msk [vmem:[#allocation3 + $0x8] sm:$0xff] %vm773, %v3258
      %3353 = vst.msk [vmem:[#allocation3 + $0x10] sm:$0xff] %vm773, %v3260
      %3354 = vst.msk [vmem:[#allocation3 + $0x18] sm:$0xff] %vm773, %v3262
      %3355 = vst.msk [vmem:[#allocation3 + $0x20] sm:$0xff] %vm773, %v3264
      %3356 = vst.msk [vmem:[#allocation3 + $0x28] sm:$0xff] %vm773, %v3266
      %3357 = vst.msk [vmem:[#allocation3 + $0x30] sm:$0xff] %vm773, %v3268
      %3358 = vst.msk [vmem:[#allocation3 + $0x38] sm:$0xff] %vm773, %v3270
      %3359 = vst.msk [vmem:[#allocation3 + $0x40] sm:$0xff] %vm773, %v3272
      %3360 = vst.msk [vmem:[#allocation3 + $0x48] sm:$0xff] %vm773, %v3274
      %3361 = vst.msk [vmem:[#allocation3 + $0x50] sm:$0xff] %vm773, %v3276
      %3362 = vst.msk [vmem:[#allocation3 + $0x58] sm:$0xff] %vm773, %v3278
      %3363 = vst.msk [vmem:[#allocation3 + $0x60] sm:$0xff] %vm773, %v3280
      %3364 = vst.msk [vmem:[#allocation3 + $0x68] sm:$0xff] %vm773, %v3282
      %3365 = vst.msk [vmem:[#allocation3 + $0x70] sm:$0xff] %vm773, %v3284
      %3366 = vst.msk [vmem:[#allocation3 + $0x78] sm:$0xff] %vm773, %v3286
      %3367 = vst.msk [vmem:[#allocation3 + $0x80] sm:$0xff] %vm773, %v3288
      %3368 = vst.msk [vmem:[#allocation3 + $0x88] sm:$0xff] %vm773, %v3290
      %3369 = vst.msk [vmem:[#allocation3 + $0x90] sm:$0xff] %vm773, %v3292
      %3370 = vst.msk [vmem:[#allocation3 + $0x98] sm:$0xff] %vm773, %v3294
      %3371 = vst.msk [vmem:[#allocation3 + $0xa0] sm:$0xff] %vm773, %v3296
      %3372 = vst.msk [vmem:[#allocation3 + $0xa8] sm:$0xff] %vm773, %v3298
      %3373 = vst.msk [vmem:[#allocation3 + $0xb0] sm:$0xff] %vm773, %v3300
      %3374 = vst.msk [vmem:[#allocation3 + $0xb8] sm:$0xff] %vm773, %v3302
      %3375 = vst.msk [vmem:[#allocation3 + $0xc0] sm:$0xff] %vm773, %v3304
      %3376 = vst.msk [vmem:[#allocation3 + $0xc8] sm:$0xff] %vm773, %v3306
      %3377 = vst.msk [vmem:[#allocation3 + $0xd0] sm:$0xff] %vm773, %v3308
      %3378 = vst.msk [vmem:[#allocation3 + $0xd8] sm:$0xff] %vm773, %v3310
      %3379 = vst.msk [vmem:[#allocation3 + $0xe0] sm:$0xff] %vm773, %v3312
      %3380 = vst.msk [vmem:[#allocation3 + $0xe8] sm:$0xff] %vm773, %v3314
      %3381 = vst.msk [vmem:[#allocation3 + $0xf0] sm:$0xff] %vm773, %v3316
      %3382 = vst.msk [vmem:[#allocation3 + $0xf8] sm:$0xff] %vm773, %v3318
      %v3383 = vld [vmem:[#allocation2 + $0x9] sm:$0xff]
      %v3384 = vld [vmem:[#allocation2 + $0x11] sm:$0xff]
      %v3385 = vld [vmem:[#allocation2 + $0x29] sm:$0xff]
      %v3386 = vld [vmem:[#allocation2 + $0x31] sm:$0xff]
      %v3387 = vld [vmem:[#allocation2 + $0x49] sm:$0xff]
      %v3388 = vld [vmem:[#allocation2 + $0x51] sm:$0xff]
      %v3389 = vld [vmem:[#allocation2 + $0x69] sm:$0xff]
      %v3390 = vld [vmem:[#allocation2 + $0x71] sm:$0xff]
      %v3391 = vld [vmem:[#allocation2 + $0x89] sm:$0xff]
      %v3392 = vld [vmem:[#allocation2 + $0x91] sm:$0xff]
      %v3393 = vld [vmem:[#allocation2 + $0xa9] sm:$0xff]
      %v3394 = vld [vmem:[#allocation2 + $0xb1] sm:$0xff]
      %v3395 = vld [vmem:[#allocation2 + $0xc9] sm:$0xff]
      %v3396 = vld [vmem:[#allocation2 + $0xd1] sm:$0xff]
      %v3397 = vld [vmem:[#allocation2 + $0xe9] sm:$0xff]
      %v3398 = vld [vmem:[#allocation2 + $0xf1] sm:$0xff]
      %v3399 = vld [vmem:[#allocation2 + $0x109] sm:$0xff]
      %v3400 = vld [vmem:[#allocation2 + $0x111] sm:$0xff]
      %v3401 = vld [vmem:[#allocation2 + $0x129] sm:$0xff]
      %v3402 = vld [vmem:[#allocation2 + $0x131] sm:$0xff]
      %v3403 = vld [vmem:[#allocation2 + $0x149] sm:$0xff]
      %v3404 = vld [vmem:[#allocation2 + $0x151] sm:$0xff]
      %v3405 = vld [vmem:[#allocation2 + $0x169] sm:$0xff]
      %v3406 = vld [vmem:[#allocation2 + $0x171] sm:$0xff]
      %v3407 = vld [vmem:[#allocation2 + $0x189] sm:$0xff]
      %v3408 = vld [vmem:[#allocation2 + $0x191] sm:$0xff]
      %v3409 = vld [vmem:[#allocation2 + $0x1a9] sm:$0xff]
      %v3410 = vld [vmem:[#allocation2 + $0x1b1] sm:$0xff]
      %v3411 = vld [vmem:[#allocation2 + $0x1c9] sm:$0xff]
      %v3412 = vld [vmem:[#allocation2 + $0x1d1] sm:$0xff]
      %v3413 = vld [vmem:[#allocation2 + $0x1e9] sm:$0xff]
      %v3414 = vld [vmem:[#allocation2 + $0x1f1] sm:$0xff]
      %3447 = vrot.lane.b32.xlu0 %v3383, 64
      %v3448 = vpop.permute.xlu0 %3447
      %3449 = vrot.lane.b32.xlu0 %v3384, 64
      %v3450 = vpop.permute.xlu0 %3449
      %3451 = vrot.lane.b32.xlu0 %v3385, 64
      %v3452 = vpop.permute.xlu0 %3451
      %3453 = vrot.lane.b32.xlu0 %v3386, 64
      %v3454 = vpop.permute.xlu0 %3453
      %3455 = vrot.lane.b32.xlu0 %v3387, 64
      %v3456 = vpop.permute.xlu0 %3455
      %3457 = vrot.lane.b32.xlu0 %v3388, 64
      %v3458 = vpop.permute.xlu0 %3457
      %3459 = vrot.lane.b32.xlu0 %v3389, 64
      %v3460 = vpop.permute.xlu0 %3459
      %3461 = vrot.lane.b32.xlu0 %v3390, 64
      %v3462 = vpop.permute.xlu0 %3461
      %3463 = vrot.lane.b32.xlu0 %v3391, 64
      %v3464 = vpop.permute.xlu0 %3463
      %3465 = vrot.lane.b32.xlu0 %v3392, 64
      %v3466 = vpop.permute.xlu0 %3465
      %3467 = vrot.lane.b32.xlu0 %v3393, 64
      %v3468 = vpop.permute.xlu0 %3467
      %3469 = vrot.lane.b32.xlu0 %v3394, 64
      %v3470 = vpop.permute.xlu0 %3469
      %3471 = vrot.lane.b32.xlu0 %v3395, 64
      %v3472 = vpop.permute.xlu0 %3471
      %3473 = vrot.lane.b32.xlu0 %v3396, 64
      %v3474 = vpop.permute.xlu0 %3473
      %3475 = vrot.lane.b32.xlu0 %v3397, 64
      %v3476 = vpop.permute.xlu0 %3475
      %3477 = vrot.lane.b32.xlu0 %v3398, 64
      %v3478 = vpop.permute.xlu0 %3477
      %3479 = vrot.lane.b32.xlu0 %v3399, 64
      %v3480 = vpop.permute.xlu0 %3479
      %3481 = vrot.lane.b32.xlu0 %v3400, 64
      %v3482 = vpop.permute.xlu0 %3481
      %3483 = vrot.lane.b32.xlu0 %v3401, 64
      %v3484 = vpop.permute.xlu0 %3483
      %3485 = vrot.lane.b32.xlu0 %v3402, 64
      %v3486 = vpop.permute.xlu0 %3485
      %3487 = vrot.lane.b32.xlu0 %v3403, 64
      %v3488 = vpop.permute.xlu0 %3487
      %3489 = vrot.lane.b32.xlu0 %v3404, 64
      %v3490 = vpop.permute.xlu0 %3489
      %3491 = vrot.lane.b32.xlu0 %v3405, 64
      %v3492 = vpop.permute.xlu0 %3491
      %3493 = vrot.lane.b32.xlu0 %v3406, 64
      %v3494 = vpop.permute.xlu0 %3493
      %3495 = vrot.lane.b32.xlu0 %v3407, 64
      %v3496 = vpop.permute.xlu0 %3495
      %3497 = vrot.lane.b32.xlu0 %v3408, 64
      %v3498 = vpop.permute.xlu0 %3497
      %3499 = vrot.lane.b32.xlu0 %v3409, 64
      %v3500 = vpop.permute.xlu0 %3499
      %3501 = vrot.lane.b32.xlu0 %v3410, 64
      %v3502 = vpop.permute.xlu0 %3501
      %3503 = vrot.lane.b32.xlu0 %v3411, 64
      %v3504 = vpop.permute.xlu0 %3503
      %3505 = vrot.lane.b32.xlu0 %v3412, 64
      %v3506 = vpop.permute.xlu0 %3505
      %3507 = vrot.lane.b32.xlu0 %v3413, 64
      %v3508 = vpop.permute.xlu0 %3507
      %3509 = vrot.lane.b32.xlu0 %v3414, 64
      %v3510 = vpop.permute.xlu0 %3509
      %3543 = vst.msk [vmem:[#allocation3] sm:$0xff] %vm966, %v3448
      %3544 = vst.msk [vmem:[#allocation3 + $0x8] sm:$0xff] %vm966, %v3450
      %3545 = vst.msk [vmem:[#allocation3 + $0x10] sm:$0xff] %vm966, %v3452
      %3546 = vst.msk [vmem:[#allocation3 + $0x18] sm:$0xff] %vm966, %v3454
      %3547 = vst.msk [vmem:[#allocation3 + $0x20] sm:$0xff] %vm966, %v3456
      %3548 = vst.msk [vmem:[#allocation3 + $0x28] sm:$0xff] %vm966, %v3458
      %3549 = vst.msk [vmem:[#allocation3 + $0x30] sm:$0xff] %vm966, %v3460
      %3550 = vst.msk [vmem:[#allocation3 + $0x38] sm:$0xff] %vm966, %v3462
      %3551 = vst.msk [vmem:[#allocation3 + $0x40] sm:$0xff] %vm966, %v3464
      %3552 = vst.msk [vmem:[#allocation3 + $0x48] sm:$0xff] %vm966, %v3466
      %3553 = vst.msk [vmem:[#allocation3 + $0x50] sm:$0xff] %vm966, %v3468
      %3554 = vst.msk [vmem:[#allocation3 + $0x58] sm:$0xff] %vm966, %v3470
      %3555 = vst.msk [vmem:[#allocation3 + $0x60] sm:$0xff] %vm966, %v3472
      %3556 = vst.msk [vmem:[#allocation3 + $0x68] sm:$0xff] %vm966, %v3474
      %3557 = vst.msk [vmem:[#allocation3 + $0x70] sm:$0xff] %vm966, %v3476
      %3558 = vst.msk [vmem:[#allocation3 + $0x78] sm:$0xff] %vm966, %v3478
      %3559 = vst.msk [vmem:[#allocation3 + $0x80] sm:$0xff] %vm966, %v3480
      %3560 = vst.msk [vmem:[#allocation3 + $0x88] sm:$0xff] %vm966, %v3482
      %3561 = vst.msk [vmem:[#allocation3 + $0x90] sm:$0xff] %vm966, %v3484
      %3562 = vst.msk [vmem:[#allocation3 + $0x98] sm:$0xff] %vm966, %v3486
      %3563 = vst.msk [vmem:[#allocation3 + $0xa0] sm:$0xff] %vm966, %v3488
      %3564 = vst.msk [vmem:[#allocation3 + $0xa8] sm:$0xff] %vm966, %v3490
      %3565 = vst.msk [vmem:[#allocation3 + $0xb0] sm:$0xff] %vm966, %v3492
      %3566 = vst.msk [vmem:[#allocation3 + $0xb8] sm:$0xff] %vm966, %v3494
      %3567 = vst.msk [vmem:[#allocation3 + $0xc0] sm:$0xff] %vm966, %v3496
      %3568 = vst.msk [vmem:[#allocation3 + $0xc8] sm:$0xff] %vm966, %v3498
      %3569 = vst.msk [vmem:[#allocation3 + $0xd0] sm:$0xff] %vm966, %v3500
      %3570 = vst.msk [vmem:[#allocation3 + $0xd8] sm:$0xff] %vm966, %v3502
      %3571 = vst.msk [vmem:[#allocation3 + $0xe0] sm:$0xff] %vm966, %v3504
      %3572 = vst.msk [vmem:[#allocation3 + $0xe8] sm:$0xff] %vm966, %v3506
      %3573 = vst.msk [vmem:[#allocation3 + $0xf0] sm:$0xff] %vm966, %v3508
      %3574 = vst.msk [vmem:[#allocation3 + $0xf8] sm:$0xff] %vm966, %v3510
      %v3575 = vld [vmem:[#allocation3] sm:$0xff]
      %v3576 = vld [vmem:[#allocation3 + $0x8] sm:$0xff]
      %v3577 = vld [vmem:[#allocation3 + $0x10] sm:$0xff]
      %v3578 = vld [vmem:[#allocation3 + $0x18] sm:$0xff]
      %v3579 = vld [vmem:[#allocation3 + $0x20] sm:$0xff]
      %v3580 = vld [vmem:[#allocation3 + $0x28] sm:$0xff]
      %v3581 = vld [vmem:[#allocation3 + $0x30] sm:$0xff]
      %v3582 = vld [vmem:[#allocation3 + $0x38] sm:$0xff]
      %v3583 = vld [vmem:[#allocation3 + $0x40] sm:$0xff]
      %v3584 = vld [vmem:[#allocation3 + $0x48] sm:$0xff]
      %v3585 = vld [vmem:[#allocation3 + $0x50] sm:$0xff]
      %v3586 = vld [vmem:[#allocation3 + $0x58] sm:$0xff]
      %v3587 = vld [vmem:[#allocation3 + $0x60] sm:$0xff]
      %v3588 = vld [vmem:[#allocation3 + $0x68] sm:$0xff]
      %v3589 = vld [vmem:[#allocation3 + $0x70] sm:$0xff]
      %v3590 = vld [vmem:[#allocation3 + $0x78] sm:$0xff]
      %v3591 = vld [vmem:[#allocation3 + $0x80] sm:$0xff]
      %v3592 = vld [vmem:[#allocation3 + $0x88] sm:$0xff]
      %v3593 = vld [vmem:[#allocation3 + $0x90] sm:$0xff]
      %v3594 = vld [vmem:[#allocation3 + $0x98] sm:$0xff]
      %v3595 = vld [vmem:[#allocation3 + $0xa0] sm:$0xff]
      %v3596 = vld [vmem:[#allocation3 + $0xa8] sm:$0xff]
      %v3597 = vld [vmem:[#allocation3 + $0xb0] sm:$0xff]
      %v3598 = vld [vmem:[#allocation3 + $0xb8] sm:$0xff]
      %v3599 = vld [vmem:[#allocation3 + $0xc0] sm:$0xff]
      %v3600 = vld [vmem:[#allocation3 + $0xc8] sm:$0xff]
      %v3601 = vld [vmem:[#allocation3 + $0xd0] sm:$0xff]
      %v3602 = vld [vmem:[#allocation3 + $0xd8] sm:$0xff]
      %v3603 = vld [vmem:[#allocation3 + $0xe0] sm:$0xff]
      %v3604 = vld [vmem:[#allocation3 + $0xe8] sm:$0xff]
      %v3605 = vld [vmem:[#allocation3 + $0xf0] sm:$0xff]
      %v3606 = vld [vmem:[#allocation3 + $0xf8] sm:$0xff]
      %v3607 = vld [vmem:[%s479 + $0x7] sm:$0xff]
      %v3608 = vld [vmem:[%s479 + $0xf] sm:$0xff]
      %v3609 = vld [vmem:[%s479 + $0x27] sm:$0xff]
      %v3610 = vld [vmem:[%s479 + $0x2f] sm:$0xff]
      %v3611 = vld [vmem:[%s479 + $0x47] sm:$0xff]
      %v3612 = vld [vmem:[%s479 + $0x4f] sm:$0xff]
      %v3613 = vld [vmem:[%s479 + $0x67] sm:$0xff]
      %v3614 = vld [vmem:[%s479 + $0x6f] sm:$0xff]
      %v3615 = vld [vmem:[%s479 + $0x87] sm:$0xff]
      %v3616 = vld [vmem:[%s479 + $0x8f] sm:$0xff]
      %v3617 = vld [vmem:[%s479 + $0xa7] sm:$0xff]
      %v3618 = vld [vmem:[%s479 + $0xaf] sm:$0xff]
      %v3619 = vld [vmem:[%s479 + $0xc7] sm:$0xff]
      %v3620 = vld [vmem:[%s479 + $0xcf] sm:$0xff]
      %v3621 = vld [vmem:[%s479 + $0xe7] sm:$0xff]
      %v3622 = vld [vmem:[%s479 + $0xef] sm:$0xff]
      %v3623 = vld [vmem:[%s479 + $0x107] sm:$0xff]
      %v3624 = vld [vmem:[%s479 + $0x10f] sm:$0xff]
      %v3625 = vld [vmem:[%s479 + $0x127] sm:$0xff]
      %v3626 = vld [vmem:[%s479 + $0x12f] sm:$0xff]
      %v3627 = vld [vmem:[%s479 + $0x147] sm:$0xff]
      %v3628 = vld [vmem:[%s479 + $0x14f] sm:$0xff]
      %v3629 = vld [vmem:[%s479 + $0x167] sm:$0xff]
      %v3630 = vld [vmem:[%s479 + $0x16f] sm:$0xff]
      %v3631 = vld [vmem:[%s479 + $0x187] sm:$0xff]
      %v3632 = vld [vmem:[%s479 + $0x18f] sm:$0xff]
      %v3633 = vld [vmem:[%s479 + $0x1a7] sm:$0xff]
      %v3634 = vld [vmem:[%s479 + $0x1af] sm:$0xff]
      %v3635 = vld [vmem:[%s479 + $0x1c7] sm:$0xff]
      %v3636 = vld [vmem:[%s479 + $0x1cf] sm:$0xff]
      %v3637 = vld [vmem:[%s479 + $0x1e7] sm:$0xff]
      %v3638 = vld [vmem:[%s479 + $0x1ef] sm:$0xff]
      %3639 = vst.msk [vmem:[#allocation3] sm:$0xff] %vm480, %v3607
      %3640 = vst.msk [vmem:[#allocation3 + $0x8] sm:$0xff] %vm480, %v3608
      %3641 = vst.msk [vmem:[#allocation3 + $0x10] sm:$0xff] %vm480, %v3609
      %3642 = vst.msk [vmem:[#allocation3 + $0x18] sm:$0xff] %vm480, %v3610
      %3643 = vst.msk [vmem:[#allocation3 + $0x20] sm:$0xff] %vm480, %v3611
      %3644 = vst.msk [vmem:[#allocation3 + $0x28] sm:$0xff] %vm480, %v3612
      %3645 = vst.msk [vmem:[#allocation3 + $0x30] sm:$0xff] %vm480, %v3613
      %3646 = vst.msk [vmem:[#allocation3 + $0x38] sm:$0xff] %vm480, %v3614
      %3647 = vst.msk [vmem:[#allocation3 + $0x40] sm:$0xff] %vm480, %v3615
      %3648 = vst.msk [vmem:[#allocation3 + $0x48] sm:$0xff] %vm480, %v3616
      %3649 = vst.msk [vmem:[#allocation3 + $0x50] sm:$0xff] %vm480, %v3617
      %3650 = vst.msk [vmem:[#allocation3 + $0x58] sm:$0xff] %vm480, %v3618
      %3651 = vst.msk [vmem:[#allocation3 + $0x60] sm:$0xff] %vm480, %v3619
      %3652 = vst.msk [vmem:[#allocation3 + $0x68] sm:$0xff] %vm480, %v3620
      %3653 = vst.msk [vmem:[#allocation3 + $0x70] sm:$0xff] %vm480, %v3621
      %3654 = vst.msk [vmem:[#allocation3 + $0x78] sm:$0xff] %vm480, %v3622
      %3655 = vst.msk [vmem:[#allocation3 + $0x80] sm:$0xff] %vm480, %v3623
      %3656 = vst.msk [vmem:[#allocation3 + $0x88] sm:$0xff] %vm480, %v3624
      %3657 = vst.msk [vmem:[#allocation3 + $0x90] sm:$0xff] %vm480, %v3625
      %3658 = vst.msk [vmem:[#allocation3 + $0x98] sm:$0xff] %vm480, %v3626
      %3659 = vst.msk [vmem:[#allocation3 + $0xa0] sm:$0xff] %vm480, %v3627
      %3660 = vst.msk [vmem:[#allocation3 + $0xa8] sm:$0xff] %vm480, %v3628
      %3661 = vst.msk [vmem:[#allocation3 + $0xb0] sm:$0xff] %vm480, %v3629
      %3662 = vst.msk [vmem:[#allocation3 + $0xb8] sm:$0xff] %vm480, %v3630
      %3663 = vst.msk [vmem:[#allocation3 + $0xc0] sm:$0xff] %vm480, %v3631
      %3664 = vst.msk [vmem:[#allocation3 + $0xc8] sm:$0xff] %vm480, %v3632
      %3665 = vst.msk [vmem:[#allocation3 + $0xd0] sm:$0xff] %vm480, %v3633
      %3666 = vst.msk [vmem:[#allocation3 + $0xd8] sm:$0xff] %vm480, %v3634
      %3667 = vst.msk [vmem:[#allocation3 + $0xe0] sm:$0xff] %vm480, %v3635
      %3668 = vst.msk [vmem:[#allocation3 + $0xe8] sm:$0xff] %vm480, %v3636
      %3669 = vst.msk [vmem:[#allocation3 + $0xf0] sm:$0xff] %vm480, %v3637
      %3670 = vst.msk [vmem:[#allocation3 + $0xf8] sm:$0xff] %vm480, %v3638
      %v3671 = vld [vmem:[%s479 + $0x8] sm:$0xff]
      %v3672 = vld [vmem:[%s479 + $0x10] sm:$0xff]
      %v3673 = vld [vmem:[%s479 + $0x28] sm:$0xff]
      %v3674 = vld [vmem:[%s479 + $0x30] sm:$0xff]
      %v3675 = vld [vmem:[%s479 + $0x48] sm:$0xff]
      %v3676 = vld [vmem:[%s479 + $0x50] sm:$0xff]
      %v3677 = vld [vmem:[%s479 + $0x68] sm:$0xff]
      %v3678 = vld [vmem:[%s479 + $0x70] sm:$0xff]
      %v3679 = vld [vmem:[%s479 + $0x88] sm:$0xff]
      %v3680 = vld [vmem:[%s479 + $0x90] sm:$0xff]
      %v3681 = vld [vmem:[%s479 + $0xa8] sm:$0xff]
      %v3682 = vld [vmem:[%s479 + $0xb0] sm:$0xff]
      %v3683 = vld [vmem:[%s479 + $0xc8] sm:$0xff]
      %v3684 = vld [vmem:[%s479 + $0xd0] sm:$0xff]
      %v3685 = vld [vmem:[%s479 + $0xe8] sm:$0xff]
      %v3686 = vld [vmem:[%s479 + $0xf0] sm:$0xff]
      %v3687 = vld [vmem:[%s479 + $0x108] sm:$0xff]
      %v3688 = vld [vmem:[%s479 + $0x110] sm:$0xff]
      %v3689 = vld [vmem:[%s479 + $0x128] sm:$0xff]
      %v3690 = vld [vmem:[%s479 + $0x130] sm:$0xff]
      %v3691 = vld [vmem:[%s479 + $0x148] sm:$0xff]
      %v3692 = vld [vmem:[%s479 + $0x150] sm:$0xff]
      %v3693 = vld [vmem:[%s479 + $0x168] sm:$0xff]
      %v3694 = vld [vmem:[%s479 + $0x170] sm:$0xff]
      %v3695 = vld [vmem:[%s479 + $0x188] sm:$0xff]
      %v3696 = vld [vmem:[%s479 + $0x190] sm:$0xff]
      %v3697 = vld [vmem:[%s479 + $0x1a8] sm:$0xff]
      %v3698 = vld [vmem:[%s479 + $0x1b0] sm:$0xff]
      %v3699 = vld [vmem:[%s479 + $0x1c8] sm:$0xff]
      %v3700 = vld [vmem:[%s479 + $0x1d0] sm:$0xff]
      %v3701 = vld [vmem:[%s479 + $0x1e8] sm:$0xff]
      %v3702 = vld [vmem:[%s479 + $0x1f0] sm:$0xff]
      %3735 = vrot.lane.b32.xlu0 %v3671, 32
      %v3736 = vpop.permute.xlu0 %3735
      %3737 = vrot.lane.b32.xlu0 %v3672, 32
      %v3738 = vpop.permute.xlu0 %3737
      %3739 = vrot.lane.b32.xlu0 %v3673, 32
      %v3740 = vpop.permute.xlu0 %3739
      %3741 = vrot.lane.b32.xlu0 %v3674, 32
      %v3742 = vpop.permute.xlu0 %3741
      %3743 = vrot.lane.b32.xlu0 %v3675, 32
      %v3744 = vpop.permute.xlu0 %3743
      %3745 = vrot.lane.b32.xlu0 %v3676, 32
      %v3746 = vpop.permute.xlu0 %3745
      %3747 = vrot.lane.b32.xlu0 %v3677, 32
      %v3748 = vpop.permute.xlu0 %3747
      %3749 = vrot.lane.b32.xlu0 %v3678, 32
      %v3750 = vpop.permute.xlu0 %3749
      %3751 = vrot.lane.b32.xlu0 %v3679, 32
      %v3752 = vpop.permute.xlu0 %3751
      %3753 = vrot.lane.b32.xlu0 %v3680, 32
      %v3754 = vpop.permute.xlu0 %3753
      %3755 = vrot.lane.b32.xlu0 %v3681, 32
      %v3756 = vpop.permute.xlu0 %3755
      %3757 = vrot.lane.b32.xlu0 %v3682, 32
      %v3758 = vpop.permute.xlu0 %3757
      %3759 = vrot.lane.b32.xlu0 %v3683, 32
      %v3760 = vpop.permute.xlu0 %3759
      %3761 = vrot.lane.b32.xlu0 %v3684, 32
      %v3762 = vpop.permute.xlu0 %3761
      %3763 = vrot.lane.b32.xlu0 %v3685, 32
      %v3764 = vpop.permute.xlu0 %3763
      %3765 = vrot.lane.b32.xlu0 %v3686, 32
      %v3766 = vpop.permute.xlu0 %3765
      %3767 = vrot.lane.b32.xlu0 %v3687, 32
      %v3768 = vpop.permute.xlu0 %3767
      %3769 = vrot.lane.b32.xlu0 %v3688, 32
      %v3770 = vpop.permute.xlu0 %3769
      %3771 = vrot.lane.b32.xlu0 %v3689, 32
      %v3772 = vpop.permute.xlu0 %3771
      %3773 = vrot.lane.b32.xlu0 %v3690, 32
      %v3774 = vpop.permute.xlu0 %3773
      %3775 = vrot.lane.b32.xlu0 %v3691, 32
      %v3776 = vpop.permute.xlu0 %3775
      %3777 = vrot.lane.b32.xlu0 %v3692, 32
      %v3778 = vpop.permute.xlu0 %3777
      %3779 = vrot.lane.b32.xlu0 %v3693, 32
      %v3780 = vpop.permute.xlu0 %3779
      %3781 = vrot.lane.b32.xlu0 %v3694, 32
      %v3782 = vpop.permute.xlu0 %3781
      %3783 = vrot.lane.b32.xlu0 %v3695, 32
      %v3784 = vpop.permute.xlu0 %3783
      %3785 = vrot.lane.b32.xlu0 %v3696, 32
      %v3786 = vpop.permute.xlu0 %3785
      %3787 = vrot.lane.b32.xlu0 %v3697, 32
      %v3788 = vpop.permute.xlu0 %3787
      %3789 = vrot.lane.b32.xlu0 %v3698, 32
      %v3790 = vpop.permute.xlu0 %3789
      %3791 = vrot.lane.b32.xlu0 %v3699, 32
      %v3792 = vpop.permute.xlu0 %3791
      %3793 = vrot.lane.b32.xlu0 %v3700, 32
      %v3794 = vpop.permute.xlu0 %3793
      %3795 = vrot.lane.b32.xlu0 %v3701, 32
      %v3796 = vpop.permute.xlu0 %3795
      %3797 = vrot.lane.b32.xlu0 %v3702, 32
      %v3798 = vpop.permute.xlu0 %3797
      %3831 = vst.msk [vmem:[#allocation3] sm:$0xff] %vm773, %v3736
      %3832 = vst.msk [vmem:[#allocation3 + $0x8] sm:$0xff] %vm773, %v3738
      %3833 = vst.msk [vmem:[#allocation3 + $0x10] sm:$0xff] %vm773, %v3740
      %3834 = vst.msk [vmem:[#allocation3 + $0x18] sm:$0xff] %vm773, %v3742
      %3835 = vst.msk [vmem:[#allocation3 + $0x20] sm:$0xff] %vm773, %v3744
      %3836 = vst.msk [vmem:[#allocation3 + $0x28] sm:$0xff] %vm773, %v3746
      %3837 = vst.msk [vmem:[#allocation3 + $0x30] sm:$0xff] %vm773, %v3748
      %3838 = vst.msk [vmem:[#allocation3 + $0x38] sm:$0xff] %vm773, %v3750
      %3839 = vst.msk [vmem:[#allocation3 + $0x40] sm:$0xff] %vm773, %v3752
      %3840 = vst.msk [vmem:[#allocation3 + $0x48] sm:$0xff] %vm773, %v3754
      %3841 = vst.msk [vmem:[#allocation3 + $0x50] sm:$0xff] %vm773, %v3756
      %3842 = vst.msk [vmem:[#allocation3 + $0x58] sm:$0xff] %vm773, %v3758
      %3843 = vst.msk [vmem:[#allocation3 + $0x60] sm:$0xff] %vm773, %v3760
      %3844 = vst.msk [vmem:[#allocation3 + $0x68] sm:$0xff] %vm773, %v3762
      %3845 = vst.msk [vmem:[#allocation3 + $0x70] sm:$0xff] %vm773, %v3764
      %3846 = vst.msk [vmem:[#allocation3 + $0x78] sm:$0xff] %vm773, %v3766
      %3847 = vst.msk [vmem:[#allocation3 + $0x80] sm:$0xff] %vm773, %v3768
      %3848 = vst.msk [vmem:[#allocation3 + $0x88] sm:$0xff] %vm773, %v3770
      %3849 = vst.msk [vmem:[#allocation3 + $0x90] sm:$0xff] %vm773, %v3772
      %3850 = vst.msk [vmem:[#allocation3 + $0x98] sm:$0xff] %vm773, %v3774
      %3851 = vst.msk [vmem:[#allocation3 + $0xa0] sm:$0xff] %vm773, %v3776
      %3852 = vst.msk [vmem:[#allocation3 + $0xa8] sm:$0xff] %vm773, %v3778
      %3853 = vst.msk [vmem:[#allocation3 + $0xb0] sm:$0xff] %vm773, %v3780
      %3854 = vst.msk [vmem:[#allocation3 + $0xb8] sm:$0xff] %vm773, %v3782
      %3855 = vst.msk [vmem:[#allocation3 + $0xc0] sm:$0xff] %vm773, %v3784
      %3856 = vst.msk [vmem:[#allocation3 + $0xc8] sm:$0xff] %vm773, %v3786
      %3857 = vst.msk [vmem:[#allocation3 + $0xd0] sm:$0xff] %vm773, %v3788
      %3858 = vst.msk [vmem:[#allocation3 + $0xd8] sm:$0xff] %vm773, %v3790
      %3859 = vst.msk [vmem:[#allocation3 + $0xe0] sm:$0xff] %vm773, %v3792
      %3860 = vst.msk [vmem:[#allocation3 + $0xe8] sm:$0xff] %vm773, %v3794
      %3861 = vst.msk [vmem:[#allocation3 + $0xf0] sm:$0xff] %vm773, %v3796
      %3862 = vst.msk [vmem:[#allocation3 + $0xf8] sm:$0xff] %vm773, %v3798
      %v3863 = vld [vmem:[%s479 + $0x9] sm:$0xff]
      %v3864 = vld [vmem:[%s479 + $0x11] sm:$0xff]
      %v3865 = vld [vmem:[%s479 + $0x29] sm:$0xff]
      %v3866 = vld [vmem:[%s479 + $0x31] sm:$0xff]
      %v3867 = vld [vmem:[%s479 + $0x49] sm:$0xff]
      %v3868 = vld [vmem:[%s479 + $0x51] sm:$0xff]
      %v3869 = vld [vmem:[%s479 + $0x69] sm:$0xff]
      %v3870 = vld [vmem:[%s479 + $0x71] sm:$0xff]
      %v3871 = vld [vmem:[%s479 + $0x89] sm:$0xff]
      %v3872 = vld [vmem:[%s479 + $0x91] sm:$0xff]
      %v3873 = vld [vmem:[%s479 + $0xa9] sm:$0xff]
      %v3874 = vld [vmem:[%s479 + $0xb1] sm:$0xff]
      %v3875 = vld [vmem:[%s479 + $0xc9] sm:$0xff]
      %v3876 = vld [vmem:[%s479 + $0xd1] sm:$0xff]
      %v3877 = vld [vmem:[%s479 + $0xe9] sm:$0xff]
      %v3878 = vld [vmem:[%s479 + $0xf1] sm:$0xff]
      %v3879 = vld [vmem:[%s479 + $0x109] sm:$0xff]
      %v3880 = vld [vmem:[%s479 + $0x111] sm:$0xff]
      %v3881 = vld [vmem:[%s479 + $0x129] sm:$0xff]
      %v3882 = vld [vmem:[%s479 + $0x131] sm:$0xff]
      %v3883 = vld [vmem:[%s479 + $0x149] sm:$0xff]
      %v3884 = vld [vmem:[%s479 + $0x151] sm:$0xff]
      %v3885 = vld [vmem:[%s479 + $0x169] sm:$0xff]
      %v3886 = vld [vmem:[%s479 + $0x171] sm:$0xff]
      %v3887 = vld [vmem:[%s479 + $0x189] sm:$0xff]
      %v3888 = vld [vmem:[%s479 + $0x191] sm:$0xff]
      %v3889 = vld [vmem:[%s479 + $0x1a9] sm:$0xff]
      %v3890 = vld [vmem:[%s479 + $0x1b1] sm:$0xff]
      %v3891 = vld [vmem:[%s479 + $0x1c9] sm:$0xff]
      %v3892 = vld [vmem:[%s479 + $0x1d1] sm:$0xff]
      %v3893 = vld [vmem:[%s479 + $0x1e9] sm:$0xff]
      %v3894 = vld [vmem:[%s479 + $0x1f1] sm:$0xff]
      %3927 = vrot.lane.b32.xlu0 %v3863, 64
      %v3928 = vpop.permute.xlu0 %3927
      %3929 = vrot.lane.b32.xlu0 %v3864, 64
      %v3930 = vpop.permute.xlu0 %3929
      %3931 = vrot.lane.b32.xlu0 %v3865, 64
      %v3932 = vpop.permute.xlu0 %3931
      %3933 = vrot.lane.b32.xlu0 %v3866, 64
      %v3934 = vpop.permute.xlu0 %3933
      %3935 = vrot.lane.b32.xlu0 %v3867, 64
      %v3936 = vpop.permute.xlu0 %3935
      %3937 = vrot.lane.b32.xlu0 %v3868, 64
      %v3938 = vpop.permute.xlu0 %3937
      %3939 = vrot.lane.b32.xlu0 %v3869, 64
      %v3940 = vpop.permute.xlu0 %3939
      %3941 = vrot.lane.b32.xlu0 %v3870, 64
      %v3942 = vpop.permute.xlu0 %3941
      %3943 = vrot.lane.b32.xlu0 %v3871, 64
      %v3944 = vpop.permute.xlu0 %3943
      %3945 = vrot.lane.b32.xlu0 %v3872, 64
      %v3946 = vpop.permute.xlu0 %3945
      %3947 = vrot.lane.b32.xlu0 %v3873, 64
      %v3948 = vpop.permute.xlu0 %3947
      %3949 = vrot.lane.b32.xlu0 %v3874, 64
      %v3950 = vpop.permute.xlu0 %3949
      %3951 = vrot.lane.b32.xlu0 %v3875, 64
      %v3952 = vpop.permute.xlu0 %3951
      %3953 = vrot.lane.b32.xlu0 %v3876, 64
      %v3954 = vpop.permute.xlu0 %3953
      %3955 = vrot.lane.b32.xlu0 %v3877, 64
      %v3956 = vpop.permute.xlu0 %3955
      %3957 = vrot.lane.b32.xlu0 %v3878, 64
      %v3958 = vpop.permute.xlu0 %3957
      %3959 = vrot.lane.b32.xlu0 %v3879, 64
      %v3960 = vpop.permute.xlu0 %3959
      %3961 = vrot.lane.b32.xlu0 %v3880, 64
      %v3962 = vpop.permute.xlu0 %3961
      %3963 = vrot.lane.b32.xlu0 %v3881, 64
      %v3964 = vpop.permute.xlu0 %3963
      %3965 = vrot.lane.b32.xlu0 %v3882, 64
      %v3966 = vpop.permute.xlu0 %3965
      %3967 = vrot.lane.b32.xlu0 %v3883, 64
      %v3968 = vpop.permute.xlu0 %3967
      %3969 = vrot.lane.b32.xlu0 %v3884, 64
      %v3970 = vpop.permute.xlu0 %3969
      %3971 = vrot.lane.b32.xlu0 %v3885, 64
      %v3972 = vpop.permute.xlu0 %3971
      %3973 = vrot.lane.b32.xlu0 %v3886, 64
      %v3974 = vpop.permute.xlu0 %3973
      %3975 = vrot.lane.b32.xlu0 %v3887, 64
      %v3976 = vpop.permute.xlu0 %3975
      %3977 = vrot.lane.b32.xlu0 %v3888, 64
      %v3978 = vpop.permute.xlu0 %3977
      %3979 = vrot.lane.b32.xlu0 %v3889, 64
      %v3980 = vpop.permute.xlu0 %3979
      %3981 = vrot.lane.b32.xlu0 %v3890, 64
      %v3982 = vpop.permute.xlu0 %3981
      %3983 = vrot.lane.b32.xlu0 %v3891, 64
      %v3984 = vpop.permute.xlu0 %3983
      %3985 = vrot.lane.b32.xlu0 %v3892, 64
      %v3986 = vpop.permute.xlu0 %3985
      %3987 = vrot.lane.b32.xlu0 %v3893, 64
      %v3988 = vpop.permute.xlu0 %3987
      %3989 = vrot.lane.b32.xlu0 %v3894, 64
      %v3990 = vpop.permute.xlu0 %3989
      %4023 = vst.msk [vmem:[#allocation3] sm:$0xff] %vm966, %v3928
      %4024 = vst.msk [vmem:[#allocation3 + $0x8] sm:$0xff] %vm966, %v3930
      %4025 = vst.msk [vmem:[#allocation3 + $0x10] sm:$0xff] %vm966, %v3932
      %4026 = vst.msk [vmem:[#allocation3 + $0x18] sm:$0xff] %vm966, %v3934
      %4027 = vst.msk [vmem:[#allocation3 + $0x20] sm:$0xff] %vm966, %v3936
      %4028 = vst.msk [vmem:[#allocation3 + $0x28] sm:$0xff] %vm966, %v3938
      %4029 = vst.msk [vmem:[#allocation3 + $0x30] sm:$0xff] %vm966, %v3940
      %4030 = vst.msk [vmem:[#allocation3 + $0x38] sm:$0xff] %vm966, %v3942
      %4031 = vst.msk [vmem:[#allocation3 + $0x40] sm:$0xff] %vm966, %v3944
      %4032 = vst.msk [vmem:[#allocation3 + $0x48] sm:$0xff] %vm966, %v3946
      %4033 = vst.msk [vmem:[#allocation3 + $0x50] sm:$0xff] %vm966, %v3948
      %4034 = vst.msk [vmem:[#allocation3 + $0x58] sm:$0xff] %vm966, %v3950
      %4035 = vst.msk [vmem:[#allocation3 + $0x60] sm:$0xff] %vm966, %v3952
      %4036 = vst.msk [vmem:[#allocation3 + $0x68] sm:$0xff] %vm966, %v3954
      %4037 = vst.msk [vmem:[#allocation3 + $0x70] sm:$0xff] %vm966, %v3956
      %4038 = vst.msk [vmem:[#allocation3 + $0x78] sm:$0xff] %vm966, %v3958
      %4039 = vst.msk [vmem:[#allocation3 + $0x80] sm:$0xff] %vm966, %v3960
      %4040 = vst.msk [vmem:[#allocation3 + $0x88] sm:$0xff] %vm966, %v3962
      %4041 = vst.msk [vmem:[#allocation3 + $0x90] sm:$0xff] %vm966, %v3964
      %4042 = vst.msk [vmem:[#allocation3 + $0x98] sm:$0xff] %vm966, %v3966
      %4043 = vst.msk [vmem:[#allocation3 + $0xa0] sm:$0xff] %vm966, %v3968
      %4044 = vst.msk [vmem:[#allocation3 + $0xa8] sm:$0xff] %vm966, %v3970
      %4045 = vst.msk [vmem:[#allocation3 + $0xb0] sm:$0xff] %vm966, %v3972
      %4046 = vst.msk [vmem:[#allocation3 + $0xb8] sm:$0xff] %vm966, %v3974
      %4047 = vst.msk [vmem:[#allocation3 + $0xc0] sm:$0xff] %vm966, %v3976
      %4048 = vst.msk [vmem:[#allocation3 + $0xc8] sm:$0xff] %vm966, %v3978
      %4049 = vst.msk [vmem:[#allocation3 + $0xd0] sm:$0xff] %vm966, %v3980
      %4050 = vst.msk [vmem:[#allocation3 + $0xd8] sm:$0xff] %vm966, %v3982
      %4051 = vst.msk [vmem:[#allocation3 + $0xe0] sm:$0xff] %vm966, %v3984
      %4052 = vst.msk [vmem:[#allocation3 + $0xe8] sm:$0xff] %vm966, %v3986
      %4053 = vst.msk [vmem:[#allocation3 + $0xf0] sm:$0xff] %vm966, %v3988
      %4054 = vst.msk [vmem:[#allocation3 + $0xf8] sm:$0xff] %vm966, %v3990
      %v4055 = vld [vmem:[#allocation3] sm:$0xff]
      %v4056 = vld [vmem:[#allocation3 + $0x8] sm:$0xff]
      %v4057 = vld [vmem:[#allocation3 + $0x10] sm:$0xff]
      %v4058 = vld [vmem:[#allocation3 + $0x18] sm:$0xff]
      %v4059 = vld [vmem:[#allocation3 + $0x20] sm:$0xff]
      %v4060 = vld [vmem:[#allocation3 + $0x28] sm:$0xff]
      %v4061 = vld [vmem:[#allocation3 + $0x30] sm:$0xff]
      %v4062 = vld [vmem:[#allocation3 + $0x38] sm:$0xff]
      %v4063 = vld [vmem:[#allocation3 + $0x40] sm:$0xff]
      %v4064 = vld [vmem:[#allocation3 + $0x48] sm:$0xff]
      %v4065 = vld [vmem:[#allocation3 + $0x50] sm:$0xff]
      %v4066 = vld [vmem:[#allocation3 + $0x58] sm:$0xff]
      %v4067 = vld [vmem:[#allocation3 + $0x60] sm:$0xff]
      %v4068 = vld [vmem:[#allocation3 + $0x68] sm:$0xff]
      %v4069 = vld [vmem:[#allocation3 + $0x70] sm:$0xff]
      %v4070 = vld [vmem:[#allocation3 + $0x78] sm:$0xff]
      %v4071 = vld [vmem:[#allocation3 + $0x80] sm:$0xff]
      %v4072 = vld [vmem:[#allocation3 + $0x88] sm:$0xff]
      %v4073 = vld [vmem:[#allocation3 + $0x90] sm:$0xff]
      %v4074 = vld [vmem:[#allocation3 + $0x98] sm:$0xff]
      %v4075 = vld [vmem:[#allocation3 + $0xa0] sm:$0xff]
      %v4076 = vld [vmem:[#allocation3 + $0xa8] sm:$0xff]
      %v4077 = vld [vmem:[#allocation3 + $0xb0] sm:$0xff]
      %v4078 = vld [vmem:[#allocation3 + $0xb8] sm:$0xff]
      %v4079 = vld [vmem:[#allocation3 + $0xc0] sm:$0xff]
      %v4080 = vld [vmem:[#allocation3 + $0xc8] sm:$0xff]
      %v4081 = vld [vmem:[#allocation3 + $0xd0] sm:$0xff]
      %v4082 = vld [vmem:[#allocation3 + $0xd8] sm:$0xff]
      %v4083 = vld [vmem:[#allocation3 + $0xe0] sm:$0xff]
      %v4084 = vld [vmem:[#allocation3 + $0xe8] sm:$0xff]
      %v4085 = vld [vmem:[#allocation3 + $0xf0] sm:$0xff]
      %v4086 = vld [vmem:[#allocation3 + $0xf8] sm:$0xff]
      %v4088 = vsel %vm1511, %v4055, 0
      %v4091 = vsel %vm1511, %v4056, 0
      %v4094 = vsel %vm1511, %v4057, 0
      %v4097 = vsel %vm1511, %v4058, 0
      %v4100 = vsel %vm1511, %v4059, 0
      %v4103 = vsel %vm1511, %v4060, 0
      %v4106 = vsel %vm1511, %v4061, 0
      %v4109 = vsel %vm1511, %v4062, 0
      %v4112 = vsel %vm1511, %v4063, 0
      %v4115 = vsel %vm1511, %v4064, 0
      %v4118 = vsel %vm1511, %v4065, 0
      %v4121 = vsel %vm1511, %v4066, 0
      %v4124 = vsel %vm1511, %v4067, 0
      %v4127 = vsel %vm1511, %v4068, 0
      %v4130 = vsel %vm1511, %v4069, 0
      %v4133 = vsel %vm1511, %v4070, 0
      %v4136 = vsel %vm1511, %v4071, 0
      %v4139 = vsel %vm1511, %v4072, 0
      %v4142 = vsel %vm1511, %v4073, 0
      %v4145 = vsel %vm1511, %v4074, 0
      %v4148 = vsel %vm1511, %v4075, 0
      %v4151 = vsel %vm1511, %v4076, 0
      %v4154 = vsel %vm1511, %v4077, 0
      %v4157 = vsel %vm1511, %v4078, 0
      %v4160 = vsel %vm1511, %v4079, 0
      %v4163 = vsel %vm1511, %v4080, 0
      %v4166 = vsel %vm1511, %v4081, 0
      %v4169 = vsel %vm1511, %v4082, 0
      %v4172 = vsel %vm1511, %v4083, 0
      %v4175 = vsel %vm1511, %v4084, 0
      %v4178 = vsel %vm1511, %v4085, 0
      %v4181 = vsel %vm1511, %v4086, 0
      %4183 = vmatprep.subr.mxu0 0.0
      %4184 = vmatpush1.msra.mxu0 %v3103
      %4185 = vmatprep.subr.mxu0 0.0
      %4186 = vmatpush1.msra.mxu0 %v3104
      %4187 = vmatprep.subr.mxu0 0.0
      %4188 = vmatpush1.msra.mxu0 %v3105
      %4189 = vmatprep.subr.mxu0 0.0
      %4190 = vmatpush1.msra.mxu0 %v3106
      %4191 = vmatprep.subr.mxu0 0.0
      %4192 = vmatpush1.msra.mxu0 %v3107
      %4193 = vmatprep.subr.mxu0 0.0
      %4194 = vmatpush1.msra.mxu0 %v3108
      %4195 = vmatprep.subr.mxu0 0.0
      %4196 = vmatpush1.msra.mxu0 %v3109
      %4197 = vmatprep.subr.mxu0 0.0
      %4198 = vmatpush1.msra.mxu0 %v3110
      %4199 = vmatprep.subr.mxu0 0.0
      %4200 = vmatpush1.msra.mxu0 %v3111
      %4201 = vmatprep.subr.mxu0 0.0
      %4202 = vmatpush1.msra.mxu0 %v3112
      %4203 = vmatprep.subr.mxu0 0.0
      %4204 = vmatpush1.msra.mxu0 %v3113
      %4205 = vmatprep.subr.mxu0 0.0
      %4206 = vmatpush1.msra.mxu0 %v3114
      %4207 = vmatprep.subr.mxu0 0.0
      %4208 = vmatpush1.msra.mxu0 0.0
      %4209 = vmatprep.subr.mxu0 0.0
      %4210 = vmatpush1.msra.mxu0 0.0
      %4211 = vmatprep.subr.mxu0 0.0
      %4212 = vmatpush1.msra.mxu0 0.0
      %4213 = vmatprep.subr.mxu0 0.0
      %4214 = vmatpush1.msra.mxu0 0.0
      %4215 = vmatprep.subr.mxu0 0.0
      %4216 = vmatpush1.msra.mxu0 0.0
      %4217 = vmatprep.subr.mxu0 0.0
      %4218 = vmatpush1.msra.mxu0 0.0
      %4219 = vmatprep.subr.mxu0 0.0
      %4220 = vmatpush1.msra.mxu0 0.0
      %4221 = vmatprep.subr.mxu0 0.0
      %4222 = vmatpush1.msra.mxu0 0.0
      %4223 = vmatprep.subr.mxu0 0.0
      %4224 = vmatpush1.msra.mxu0 0.0
      %4225 = vmatprep.subr.mxu0 0.0
      %4226 = vmatpush1.msra.mxu0 0.0
      %4227 = vmatprep.subr.mxu0 0.0
      %4228 = vmatpush1.msra.mxu0 0.0
      %4229 = vmatprep.subr.mxu0 0.0
      %4230 = vmatpush1.msra.mxu0 0.0
      %4231 = vmatprep.subr.mxu0 0.0
      %4232 = vmatpush1.msra.mxu0 0.0
      %4233 = vmatprep.subr.mxu0 0.0
      %4234 = vmatpush1.msra.mxu0 0.0
      %4235 = vmatprep.subr.mxu0 0.0
      %4236 = vmatpush1.msra.mxu0 0.0
      %4237 = vmatprep.subr.mxu0 0.0
      %4238 = vmatpush1.msra.mxu0 0.0
      %4239 = vmatprep.subr.mxu0 0.0
      %4240 = vmatpush1.msra.mxu0 0.0
      %4241 = vmatprep.subr.mxu0 0.0
      %4242 = vmatpush1.msra.mxu0 0.0
      %4243 = vmatprep.subr.mxu0 0.0
      %4244 = vmatpush1.msra.mxu0 0.0
      %4245 = vmatprep.subr.mxu0 0.0
      %4246 = vmatpush1.msra.mxu0 0.0
      %4247 = vmatprep.mubr.f32.mxu0 0.0
      %4248 = vmatmul.mubr.f32.gmra.mrb[0].mxu0 %v4088
      %v4249 = vpop.f32.mrb[0].mxu0
      %v4250 = vadd.f32 0.0, %v4249
      %v4251 = vpop.f32.mrb[0].mxu0
      %4252 = vmatprep.mubr.f32.mxu0 0.0
      %4253 = vmatmul.mubr.f32.gmra.mrb[0].mxu0 %v4091
      %v4254 = vpop.f32.mrb[0].mxu0
      %v4255 = vadd.f32 0.0, %v4254
      %v4256 = vpop.f32.mrb[0].mxu0
      %4257 = vmatprep.mubr.f32.mxu0 0.0
      %4258 = vmatmul.mubr.f32.gmra.mrb[0].mxu0 %v4094
      %v4259 = vpop.f32.mrb[0].mxu0
      %v4260 = vadd.f32 0.0, %v4259
      %v4261 = vpop.f32.mrb[0].mxu0
      %4262 = vmatprep.mubr.f32.mxu0 0.0
      %4263 = vmatmul.mubr.f32.gmra.mrb[0].mxu0 %v4097
      %v4264 = vpop.f32.mrb[0].mxu0
      %v4265 = vadd.f32 0.0, %v4264
      %v4266 = vpop.f32.mrb[0].mxu0
      %4267 = vmatprep.mubr.f32.mxu0 0.0
      %4268 = vmatmul.mubr.f32.gmra.mrb[0].mxu0 %v4100
      %v4269 = vpop.f32.mrb[0].mxu0
      %v4270 = vadd.f32 0.0, %v4269
      %v4271 = vpop.f32.mrb[0].mxu0
      %4272 = vmatprep.mubr.f32.mxu0 0.0
      %4273 = vmatmul.mubr.f32.gmra.mrb[0].mxu0 %v4103
      %v4274 = vpop.f32.mrb[0].mxu0
      %v4275 = vadd.f32 0.0, %v4274
      %v4276 = vpop.f32.mrb[0].mxu0
      %4277 = vmatprep.mubr.f32.mxu0 0.0
      %4278 = vmatmul.mubr.f32.gmra.mrb[0].mxu0 %v4106
      %v4279 = vpop.f32.mrb[0].mxu0
      %v4280 = vadd.f32 0.0, %v4279
      %v4281 = vpop.f32.mrb[0].mxu0
      %4282 = vmatprep.mubr.f32.mxu0 0.0
      %4283 = vmatmul.mubr.f32.gmra.mrb[0].mxu0 %v4109
      %v4284 = vpop.f32.mrb[0].mxu0
      %v4285 = vadd.f32 0.0, %v4284
      %v4286 = vpop.f32.mrb[0].mxu0
      %4287 = vmatprep.mubr.f32.mxu0 0.0
      %4288 = vmatmul.mubr.f32.gmra.mrb[0].mxu0 %v4112
      %v4289 = vpop.f32.mrb[0].mxu0
      %v4290 = vadd.f32 0.0, %v4289
      %v4291 = vpop.f32.mrb[0].mxu0
      %4292 = vmatprep.mubr.f32.mxu0 0.0
      %4293 = vmatmul.mubr.f32.gmra.mrb[0].mxu0 %v4115
      %v4294 = vpop.f32.mrb[0].mxu0
      %v4295 = vadd.f32 0.0, %v4294
      %v4296 = vpop.f32.mrb[0].mxu0
      %4297 = vmatprep.mubr.f32.mxu0 0.0
      %4298 = vmatmul.mubr.f32.gmra.mrb[0].mxu0 %v4118
      %v4299 = vpop.f32.mrb[0].mxu0
      %v4300 = vadd.f32 0.0, %v4299
      %v4301 = vpop.f32.mrb[0].mxu0
      %4302 = vmatprep.mubr.f32.mxu0 0.0
      %4303 = vmatmul.mubr.f32.gmra.mrb[0].mxu0 %v4121
      %v4304 = vpop.f32.mrb[0].mxu0
      %v4305 = vadd.f32 0.0, %v4304
      %v4306 = vpop.f32.mrb[0].mxu0
      %4307 = vmatprep.mubr.f32.mxu0 0.0
      %4308 = vmatmul.mubr.f32.gmra.mrb[0].mxu0 %v4124
      %v4309 = vpop.f32.mrb[0].mxu0
      %v4310 = vadd.f32 0.0, %v4309
      %v4311 = vpop.f32.mrb[0].mxu0
      %4312 = vmatprep.mubr.f32.mxu0 0.0
      %4313 = vmatmul.mubr.f32.gmra.mrb[0].mxu0 %v4127
      %v4314 = vpop.f32.mrb[0].mxu0
      %v4315 = vadd.f32 0.0, %v4314
      %v4316 = vpop.f32.mrb[0].mxu0
      %4317 = vmatprep.mubr.f32.mxu0 0.0
      %4318 = vmatmul.mubr.f32.gmra.mrb[0].mxu0 %v4130
      %v4319 = vpop.f32.mrb[0].mxu0
      %v4320 = vadd.f32 0.0, %v4319
      %v4321 = vpop.f32.mrb[0].mxu0
      %4322 = vmatprep.mubr.f32.mxu0 0.0
      %4323 = vmatmul.mubr.f32.gmra.mrb[0].mxu0 %v4133
      %v4324 = vpop.f32.mrb[0].mxu0
      %v4325 = vadd.f32 0.0, %v4324
      %v4326 = vpop.f32.mrb[0].mxu0
      %4327 = vmatprep.mubr.f32.mxu0 0.0
      %4328 = vmatmul.mubr.f32.gmra.mrb[0].mxu0 %v4136
      %v4329 = vpop.f32.mrb[0].mxu0
      %v4330 = vadd.f32 0.0, %v4329
      %v4331 = vpop.f32.mrb[0].mxu0
      %4332 = vmatprep.mubr.f32.mxu0 0.0
      %4333 = vmatmul.mubr.f32.gmra.mrb[0].mxu0 %v4139
      %v4334 = vpop.f32.mrb[0].mxu0
      %v4335 = vadd.f32 0.0, %v4334
      %v4336 = vpop.f32.mrb[0].mxu0
      %4337 = vmatprep.mubr.f32.mxu0 0.0
      %4338 = vmatmul.mubr.f32.gmra.mrb[0].mxu0 %v4142
      %v4339 = vpop.f32.mrb[0].mxu0
      %v4340 = vadd.f32 0.0, %v4339
      %v4341 = vpop.f32.mrb[0].mxu0
      %4342 = vmatprep.mubr.f32.mxu0 0.0
      %4343 = vmatmul.mubr.f32.gmra.mrb[0].mxu0 %v4145
      %v4344 = vpop.f32.mrb[0].mxu0
      %v4345 = vadd.f32 0.0, %v4344
      %v4346 = vpop.f32.mrb[0].mxu0
      %4347 = vmatprep.mubr.f32.mxu0 0.0
      %4348 = vmatmul.mubr.f32.gmra.mrb[0].mxu0 %v4148
      %v4349 = vpop.f32.mrb[0].mxu0
      %v4350 = vadd.f32 0.0, %v4349
      %v4351 = vpop.f32.mrb[0].mxu0
      %4352 = vmatprep.mubr.f32.mxu0 0.0
      %4353 = vmatmul.mubr.f32.gmra.mrb[0].mxu0 %v4151
      %v4354 = vpop.f32.mrb[0].mxu0
      %v4355 = vadd.f32 0.0, %v4354
      %v4356 = vpop.f32.mrb[0].mxu0
      %4357 = vmatprep.mubr.f32.mxu0 0.0
      %4358 = vmatmul.mubr.f32.gmra.mrb[0].mxu0 %v4154
      %v4359 = vpop.f32.mrb[0].mxu0
      %v4360 = vadd.f32 0.0, %v4359
      %v4361 = vpop.f32.mrb[0].mxu0
      %4362 = vmatprep.mubr.f32.mxu0 0.0
      %4363 = vmatmul.mubr.f32.gmra.mrb[0].mxu0 %v4157
      %v4364 = vpop.f32.mrb[0].mxu0
      %v4365 = vadd.f32 0.0, %v4364
      %v4366 = vpop.f32.mrb[0].mxu0
      %4367 = vmatprep.mubr.f32.mxu0 0.0
      %4368 = vmatmul.mubr.f32.gmra.mrb[0].mxu0 %v4160
      %v4369 = vpop.f32.mrb[0].mxu0
      %v4370 = vadd.f32 0.0, %v4369
      %v4371 = vpop.f32.mrb[0].mxu0
      %4372 = vmatprep.mubr.f32.mxu0 0.0
      %4373 = vmatmul.mubr.f32.gmra.mrb[0].mxu0 %v4163
      %v4374 = vpop.f32.mrb[0].mxu0
      %v4375 = vadd.f32 0.0, %v4374
      %v4376 = vpop.f32.mrb[0].mxu0
      %4377 = vmatprep.mubr.f32.mxu0 0.0
      %4378 = vmatmul.mubr.f32.gmra.mrb[0].mxu0 %v4166
      %v4379 = vpop.f32.mrb[0].mxu0
      %v4380 = vadd.f32 0.0, %v4379
      %v4381 = vpop.f32.mrb[0].mxu0
      %4382 = vmatprep.mubr.f32.mxu0 0.0
      %4383 = vmatmul.mubr.f32.gmra.mrb[0].mxu0 %v4169
      %v4384 = vpop.f32.mrb[0].mxu0
      %v4385 = vadd.f32 0.0, %v4384
      %v4386 = vpop.f32.mrb[0].mxu0
      %4387 = vmatprep.mubr.f32.mxu0 0.0
      %4388 = vmatmul.mubr.f32.gmra.mrb[0].mxu0 %v4172
      %v4389 = vpop.f32.mrb[0].mxu0
      %v4390 = vadd.f32 0.0, %v4389
      %v4391 = vpop.f32.mrb[0].mxu0
      %4392 = vmatprep.mubr.f32.mxu0 0.0
      %4393 = vmatmul.mubr.f32.gmra.mrb[0].mxu0 %v4175
      %v4394 = vpop.f32.mrb[0].mxu0
      %v4395 = vadd.f32 0.0, %v4394
      %v4396 = vpop.f32.mrb[0].mxu0
      %4397 = vmatprep.mubr.f32.mxu0 0.0
      %4398 = vmatmul.mubr.f32.gmra.mrb[0].mxu0 %v4178
      %v4399 = vpop.f32.mrb[0].mxu0
      %v4400 = vadd.f32 0.0, %v4399
      %v4401 = vpop.f32.mrb[0].mxu0
      %4402 = vmatprep.mubr.f32.mxu0 0.0
      %4403 = vmatmul.mubr.f32.gmra.mrb[0].mxu0 %v4181
      %v4404 = vpop.f32.mrb[0].mxu0
      %v4405 = vadd.f32 0.0, %v4404
      %v4406 = vpop.f32.mrb[0].mxu0
      %4407 = vdwg.mxu0
      %v4409 = vsel %vm1511, %v3575, 0
      %v4412 = vsel %vm1511, %v3576, 0
      %v4415 = vsel %vm1511, %v3577, 0
      %v4418 = vsel %vm1511, %v3578, 0
      %v4421 = vsel %vm1511, %v3579, 0
      %v4424 = vsel %vm1511, %v3580, 0
      %v4427 = vsel %vm1511, %v3581, 0
      %v4430 = vsel %vm1511, %v3582, 0
      %v4433 = vsel %vm1511, %v3583, 0
      %v4436 = vsel %vm1511, %v3584, 0
      %v4439 = vsel %vm1511, %v3585, 0
      %v4442 = vsel %vm1511, %v3586, 0
      %v4445 = vsel %vm1511, %v3587, 0
      %v4448 = vsel %vm1511, %v3588, 0
      %v4451 = vsel %vm1511, %v3589, 0
      %v4454 = vsel %vm1511, %v3590, 0
      %v4457 = vsel %vm1511, %v3591, 0
      %v4460 = vsel %vm1511, %v3592, 0
      %v4463 = vsel %vm1511, %v3593, 0
      %v4466 = vsel %vm1511, %v3594, 0
      %v4469 = vsel %vm1511, %v3595, 0
      %v4472 = vsel %vm1511, %v3596, 0
      %v4475 = vsel %vm1511, %v3597, 0
      %v4478 = vsel %vm1511, %v3598, 0
      %v4481 = vsel %vm1511, %v3599, 0
      %v4484 = vsel %vm1511, %v3600, 0
      %v4487 = vsel %vm1511, %v3601, 0
      %v4490 = vsel %vm1511, %v3602, 0
      %v4493 = vsel %vm1511, %v3603, 0
      %v4496 = vsel %vm1511, %v3604, 0
      %v4499 = vsel %vm1511, %v3605, 0
      %v4502 = vsel %vm1511, %v3606, 0
      %4504 = vmatprep.subr.mxu0 0.0
      %4505 = vmatpush1.msra.mxu0 %v3091
      %4506 = vmatprep.subr.mxu0 0.0
      %4507 = vmatpush1.msra.mxu0 %v3092
      %4508 = vmatprep.subr.mxu0 0.0
      %4509 = vmatpush1.msra.mxu0 %v3093
      %4510 = vmatprep.subr.mxu0 0.0
      %4511 = vmatpush1.msra.mxu0 %v3094
      %4512 = vmatprep.subr.mxu0 0.0
      %4513 = vmatpush1.msra.mxu0 %v3095
      %4514 = vmatprep.subr.mxu0 0.0
      %4515 = vmatpush1.msra.mxu0 %v3096
      %4516 = vmatprep.subr.mxu0 0.0
      %4517 = vmatpush1.msra.mxu0 %v3097
      %4518 = vmatprep.subr.mxu0 0.0
      %4519 = vmatpush1.msra.mxu0 %v3098
      %4520 = vmatprep.subr.mxu0 0.0
      %4521 = vmatpush1.msra.mxu0 %v3099
      %4522 = vmatprep.subr.mxu0 0.0
      %4523 = vmatpush1.msra.mxu0 %v3100
      %4524 = vmatprep.subr.mxu0 0.0
      %4525 = vmatpush1.msra.mxu0 %v3101
      %4526 = vmatprep.subr.mxu0 0.0
      %4527 = vmatpush1.msra.mxu0 %v3102
      %4528 = vmatprep.subr.mxu0 0.0
      %4529 = vmatpush1.msra.mxu0 0.0
      %4530 = vmatprep.subr.mxu0 0.0
      %4531 = vmatpush1.msra.mxu0 0.0
      %4532 = vmatprep.subr.mxu0 0.0
      %4533 = vmatpush1.msra.mxu0 0.0
      %4534 = vmatprep.subr.mxu0 0.0
      %4535 = vmatpush1.msra.mxu0 0.0
      %4536 = vmatprep.subr.mxu0 0.0
      %4537 = vmatpush1.msra.mxu0 0.0
      %4538 = vmatprep.subr.mxu0 0.0
      %4539 = vmatpush1.msra.mxu0 0.0
      %4540 = vmatprep.subr.mxu0 0.0
      %4541 = vmatpush1.msra.mxu0 0.0
      %4542 = vmatprep.subr.mxu0 0.0
      %4543 = vmatpush1.msra.mxu0 0.0
      %4544 = vmatprep.subr.mxu0 0.0
      %4545 = vmatpush1.msra.mxu0 0.0
      %4546 = vmatprep.subr.mxu0 0.0
      %4547 = vmatpush1.msra.mxu0 0.0
      %4548 = vmatprep.subr.mxu0 0.0
      %4549 = vmatpush1.msra.mxu0 0.0
      %4550 = vmatprep.subr.mxu0 0.0
      %4551 = vmatpush1.msra.mxu0 0.0
      %4552 = vmatprep.subr.mxu0 0.0
      %4553 = vmatpush1.msra.mxu0 0.0
      %4554 = vmatprep.subr.mxu0 0.0
      %4555 = vmatpush1.msra.mxu0 0.0
      %4556 = vmatprep.subr.mxu0 0.0
      %4557 = vmatpush1.msra.mxu0 0.0
      %4558 = vmatprep.subr.mxu0 0.0
      %4559 = vmatpush1.msra.mxu0 0.0
      %4560 = vmatprep.subr.mxu0 0.0
      %4561 = vmatpush1.msra.mxu0 0.0
      %4562 = vmatprep.subr.mxu0 0.0
      %4563 = vmatpush1.msra.mxu0 0.0
      %4564 = vmatprep.subr.mxu0 0.0
      %4565 = vmatpush1.msra.mxu0 0.0
      %4566 = vmatprep.subr.mxu0 0.0
      %4567 = vmatpush1.msra.mxu0 0.0
      %4568 = vmatprep.mubr.f32.mxu0 0.0
      %4569 = vmatmul.mubr.f32.gmra.mrb[0].mxu0 %v4409
      %v4570 = vpop.f32.mrb[0].mxu0
      %v4571 = vadd.f32 %v4250, %v4570
      %v4572 = vpop.f32.mrb[0].mxu0
      %4573 = vmatprep.mubr.f32.mxu0 0.0
      %4574 = vmatmul.mubr.f32.gmra.mrb[0].mxu0 %v4412
      %v4575 = vpop.f32.mrb[0].mxu0
      %v4576 = vadd.f32 %v4255, %v4575
      %v4577 = vpop.f32.mrb[0].mxu0
      %4578 = vmatprep.mubr.f32.mxu0 0.0
      %4579 = vmatmul.mubr.f32.gmra.mrb[0].mxu0 %v4415
      %v4580 = vpop.f32.mrb[0].mxu0
      %v4581 = vadd.f32 %v4260, %v4580
      %v4582 = vpop.f32.mrb[0].mxu0
      %4583 = vmatprep.mubr.f32.mxu0 0.0
      %4584 = vmatmul.mubr.f32.gmra.mrb[0].mxu0 %v4418
      %v4585 = vpop.f32.mrb[0].mxu0
      %v4586 = vadd.f32 %v4265, %v4585
      %v4587 = vpop.f32.mrb[0].mxu0
      %4588 = vmatprep.mubr.f32.mxu0 0.0
      %4589 = vmatmul.mubr.f32.gmra.mrb[0].mxu0 %v4421
      %v4590 = vpop.f32.mrb[0].mxu0
      %v4591 = vadd.f32 %v4270, %v4590
      %v4592 = vpop.f32.mrb[0].mxu0
      %4593 = vmatprep.mubr.f32.mxu0 0.0
      %4594 = vmatmul.mubr.f32.gmra.mrb[0].mxu0 %v4424
      %v4595 = vpop.f32.mrb[0].mxu0
      %v4596 = vadd.f32 %v4275, %v4595
      %v4597 = vpop.f32.mrb[0].mxu0
      %4598 = vmatprep.mubr.f32.mxu0 0.0
      %4599 = vmatmul.mubr.f32.gmra.mrb[0].mxu0 %v4427
      %v4600 = vpop.f32.mrb[0].mxu0
      %v4601 = vadd.f32 %v4280, %v4600
      %v4602 = vpop.f32.mrb[0].mxu0
      %4603 = vmatprep.mubr.f32.mxu0 0.0
      %4604 = vmatmul.mubr.f32.gmra.mrb[0].mxu0 %v4430
      %v4605 = vpop.f32.mrb[0].mxu0
      %v4606 = vadd.f32 %v4285, %v4605
      %v4607 = vpop.f32.mrb[0].mxu0
      %4608 = vmatprep.mubr.f32.mxu0 0.0
      %4609 = vmatmul.mubr.f32.gmra.mrb[0].mxu0 %v4433
      %v4610 = vpop.f32.mrb[0].mxu0
      %v4611 = vadd.f32 %v4290, %v4610
      %v4612 = vpop.f32.mrb[0].mxu0
      %4613 = vmatprep.mubr.f32.mxu0 0.0
      %4614 = vmatmul.mubr.f32.gmra.mrb[0].mxu0 %v4436
      %v4615 = vpop.f32.mrb[0].mxu0
      %v4616 = vadd.f32 %v4295, %v4615
      %v4617 = vpop.f32.mrb[0].mxu0
      %4618 = vmatprep.mubr.f32.mxu0 0.0
      %4619 = vmatmul.mubr.f32.gmra.mrb[0].mxu0 %v4439
      %v4620 = vpop.f32.mrb[0].mxu0
      %v4621 = vadd.f32 %v4300, %v4620
      %v4622 = vpop.f32.mrb[0].mxu0
      %4623 = vmatprep.mubr.f32.mxu0 0.0
      %4624 = vmatmul.mubr.f32.gmra.mrb[0].mxu0 %v4442
      %v4625 = vpop.f32.mrb[0].mxu0
      %v4626 = vadd.f32 %v4305, %v4625
      %v4627 = vpop.f32.mrb[0].mxu0
      %4628 = vmatprep.mubr.f32.mxu0 0.0
      %4629 = vmatmul.mubr.f32.gmra.mrb[0].mxu0 %v4445
      %v4630 = vpop.f32.mrb[0].mxu0
      %v4631 = vadd.f32 %v4310, %v4630
      %v4632 = vpop.f32.mrb[0].mxu0
      %4633 = vmatprep.mubr.f32.mxu0 0.0
      %4634 = vmatmul.mubr.f32.gmra.mrb[0].mxu0 %v4448
      %v4635 = vpop.f32.mrb[0].mxu0
      %v4636 = vadd.f32 %v4315, %v4635
      %v4637 = vpop.f32.mrb[0].mxu0
      %4638 = vmatprep.mubr.f32.mxu0 0.0
      %4639 = vmatmul.mubr.f32.gmra.mrb[0].mxu0 %v4451
      %v4640 = vpop.f32.mrb[0].mxu0
      %v4641 = vadd.f32 %v4320, %v4640
      %v4642 = vpop.f32.mrb[0].mxu0
      %4643 = vmatprep.mubr.f32.mxu0 0.0
      %4644 = vmatmul.mubr.f32.gmra.mrb[0].mxu0 %v4454
      %v4645 = vpop.f32.mrb[0].mxu0
      %v4646 = vadd.f32 %v4325, %v4645
      %v4647 = vpop.f32.mrb[0].mxu0
      %4648 = vmatprep.mubr.f32.mxu0 0.0
      %4649 = vmatmul.mubr.f32.gmra.mrb[0].mxu0 %v4457
      %v4650 = vpop.f32.mrb[0].mxu0
      %v4651 = vadd.f32 %v4330, %v4650
      %v4652 = vpop.f32.mrb[0].mxu0
      %4653 = vmatprep.mubr.f32.mxu0 0.0
      %4654 = vmatmul.mubr.f32.gmra.mrb[0].mxu0 %v4460
      %v4655 = vpop.f32.mrb[0].mxu0
      %v4656 = vadd.f32 %v4335, %v4655
      %v4657 = vpop.f32.mrb[0].mxu0
      %4658 = vmatprep.mubr.f32.mxu0 0.0
      %4659 = vmatmul.mubr.f32.gmra.mrb[0].mxu0 %v4463
      %v4660 = vpop.f32.mrb[0].mxu0
      %v4661 = vadd.f32 %v4340, %v4660
      %v4662 = vpop.f32.mrb[0].mxu0
      %4663 = vmatprep.mubr.f32.mxu0 0.0
      %4664 = vmatmul.mubr.f32.gmra.mrb[0].mxu0 %v4466
      %v4665 = vpop.f32.mrb[0].mxu0
      %v4666 = vadd.f32 %v4345, %v4665
      %v4667 = vpop.f32.mrb[0].mxu0
      %4668 = vmatprep.mubr.f32.mxu0 0.0
      %4669 = vmatmul.mubr.f32.gmra.mrb[0].mxu0 %v4469
      %v4670 = vpop.f32.mrb[0].mxu0
      %v4671 = vadd.f32 %v4350, %v4670
      %v4672 = vpop.f32.mrb[0].mxu0
      %4673 = vmatprep.mubr.f32.mxu0 0.0
      %4674 = vmatmul.mubr.f32.gmra.mrb[0].mxu0 %v4472
      %v4675 = vpop.f32.mrb[0].mxu0
      %v4676 = vadd.f32 %v4355, %v4675
      %v4677 = vpop.f32.mrb[0].mxu0
      %4678 = vmatprep.mubr.f32.mxu0 0.0
      %4679 = vmatmul.mubr.f32.gmra.mrb[0].mxu0 %v4475
      %v4680 = vpop.f32.mrb[0].mxu0
      %v4681 = vadd.f32 %v4360, %v4680
      %v4682 = vpop.f32.mrb[0].mxu0
      %4683 = vmatprep.mubr.f32.mxu0 0.0
      %4684 = vmatmul.mubr.f32.gmra.mrb[0].mxu0 %v4478
      %v4685 = vpop.f32.mrb[0].mxu0
      %v4686 = vadd.f32 %v4365, %v4685
      %v4687 = vpop.f32.mrb[0].mxu0
      %4688 = vmatprep.mubr.f32.mxu0 0.0
      %4689 = vmatmul.mubr.f32.gmra.mrb[0].mxu0 %v4481
      %v4690 = vpop.f32.mrb[0].mxu0
      %v4691 = vadd.f32 %v4370, %v4690
      %v4692 = vpop.f32.mrb[0].mxu0
      %4693 = vmatprep.mubr.f32.mxu0 0.0
      %4694 = vmatmul.mubr.f32.gmra.mrb[0].mxu0 %v4484
      %v4695 = vpop.f32.mrb[0].mxu0
      %v4696 = vadd.f32 %v4375, %v4695
      %v4697 = vpop.f32.mrb[0].mxu0
      %4698 = vmatprep.mubr.f32.mxu0 0.0
      %4699 = vmatmul.mubr.f32.gmra.mrb[0].mxu0 %v4487
      %v4700 = vpop.f32.mrb[0].mxu0
      %v4701 = vadd.f32 %v4380, %v4700
      %v4702 = vpop.f32.mrb[0].mxu0
      %4703 = vmatprep.mubr.f32.mxu0 0.0
      %4704 = vmatmul.mubr.f32.gmra.mrb[0].mxu0 %v4490
      %v4705 = vpop.f32.mrb[0].mxu0
      %v4706 = vadd.f32 %v4385, %v4705
      %v4707 = vpop.f32.mrb[0].mxu0
      %4708 = vmatprep.mubr.f32.mxu0 0.0
      %4709 = vmatmul.mubr.f32.gmra.mrb[0].mxu0 %v4493
      %v4710 = vpop.f32.mrb[0].mxu0
      %v4711 = vadd.f32 %v4390, %v4710
      %v4712 = vpop.f32.mrb[0].mxu0
      %4713 = vmatprep.mubr.f32.mxu0 0.0
      %4714 = vmatmul.mubr.f32.gmra.mrb[0].mxu0 %v4496
      %v4715 = vpop.f32.mrb[0].mxu0
      %v4716 = vadd.f32 %v4395, %v4715
      %v4717 = vpop.f32.mrb[0].mxu0
      %4718 = vmatprep.mubr.f32.mxu0 0.0
      %4719 = vmatmul.mubr.f32.gmra.mrb[0].mxu0 %v4499
      %v4720 = vpop.f32.mrb[0].mxu0
      %v4721 = vadd.f32 %v4400, %v4720
      %v4722 = vpop.f32.mrb[0].mxu0
      %4723 = vmatprep.mubr.f32.mxu0 0.0
      %4724 = vmatmul.mubr.f32.gmra.mrb[0].mxu0 %v4502
      %v4725 = vpop.f32.mrb[0].mxu0
      %v4726 = vadd.f32 %v4405, %v4725
      %v4727 = vpop.f32.mrb[0].mxu0
      %4728 = vdwg.mxu0
      %v4729 = vld [vmem:[%s2154 + $0x7] sm:$0xff]
      %v4730 = vld [vmem:[%s2154 + $0xf] sm:$0xff]
      %v4731 = vld [vmem:[%s2154 + $0x27] sm:$0xff]
      %v4732 = vld [vmem:[%s2154 + $0x2f] sm:$0xff]
      %v4733 = vld [vmem:[%s2154 + $0x47] sm:$0xff]
      %v4734 = vld [vmem:[%s2154 + $0x4f] sm:$0xff]
      %v4735 = vld [vmem:[%s2154 + $0x67] sm:$0xff]
      %v4736 = vld [vmem:[%s2154 + $0x6f] sm:$0xff]
      %v4737 = vld [vmem:[%s2154 + $0x87] sm:$0xff]
      %v4738 = vld [vmem:[%s2154 + $0x8f] sm:$0xff]
      %v4739 = vld [vmem:[%s2154 + $0xa7] sm:$0xff]
      %v4740 = vld [vmem:[%s2154 + $0xaf] sm:$0xff]
      %v4741 = vld [vmem:[%s2154 + $0xc7] sm:$0xff]
      %v4742 = vld [vmem:[%s2154 + $0xcf] sm:$0xff]
      %v4743 = vld [vmem:[%s2154 + $0xe7] sm:$0xff]
      %v4744 = vld [vmem:[%s2154 + $0xef] sm:$0xff]
      %v4745 = vld [vmem:[%s2154 + $0x107] sm:$0xff]
      %v4746 = vld [vmem:[%s2154 + $0x10f] sm:$0xff]
      %v4747 = vld [vmem:[%s2154 + $0x127] sm:$0xff]
      %v4748 = vld [vmem:[%s2154 + $0x12f] sm:$0xff]
      %v4749 = vld [vmem:[%s2154 + $0x147] sm:$0xff]
      %v4750 = vld [vmem:[%s2154 + $0x14f] sm:$0xff]
      %v4751 = vld [vmem:[%s2154 + $0x167] sm:$0xff]
      %v4752 = vld [vmem:[%s2154 + $0x16f] sm:$0xff]
      %v4753 = vld [vmem:[%s2154 + $0x187] sm:$0xff]
      %v4754 = vld [vmem:[%s2154 + $0x18f] sm:$0xff]
      %v4755 = vld [vmem:[%s2154 + $0x1a7] sm:$0xff]
      %v4756 = vld [vmem:[%s2154 + $0x1af] sm:$0xff]
      %v4757 = vld [vmem:[%s2154 + $0x1c7] sm:$0xff]
      %v4758 = vld [vmem:[%s2154 + $0x1cf] sm:$0xff]
      %v4759 = vld [vmem:[%s2154 + $0x1e7] sm:$0xff]
      %v4760 = vld [vmem:[%s2154 + $0x1ef] sm:$0xff]
      %4761 = vst.msk [vmem:[#allocation3] sm:$0xff] %vm480, %v4729
      %4762 = vst.msk [vmem:[#allocation3 + $0x8] sm:$0xff] %vm480, %v4730
      %4763 = vst.msk [vmem:[#allocation3 + $0x10] sm:$0xff] %vm480, %v4731
      %4764 = vst.msk [vmem:[#allocation3 + $0x18] sm:$0xff] %vm480, %v4732
      %4765 = vst.msk [vmem:[#allocation3 + $0x20] sm:$0xff] %vm480, %v4733
      %4766 = vst.msk [vmem:[#allocation3 + $0x28] sm:$0xff] %vm480, %v4734
      %4767 = vst.msk [vmem:[#allocation3 + $0x30] sm:$0xff] %vm480, %v4735
      %4768 = vst.msk [vmem:[#allocation3 + $0x38] sm:$0xff] %vm480, %v4736
      %4769 = vst.msk [vmem:[#allocation3 + $0x40] sm:$0xff] %vm480, %v4737
      %4770 = vst.msk [vmem:[#allocation3 + $0x48] sm:$0xff] %vm480, %v4738
      %4771 = vst.msk [vmem:[#allocation3 + $0x50] sm:$0xff] %vm480, %v4739
      %4772 = vst.msk [vmem:[#allocation3 + $0x58] sm:$0xff] %vm480, %v4740
      %4773 = vst.msk [vmem:[#allocation3 + $0x60] sm:$0xff] %vm480, %v4741
      %4774 = vst.msk [vmem:[#allocation3 + $0x68] sm:$0xff] %vm480, %v4742
      %4775 = vst.msk [vmem:[#allocation3 + $0x70] sm:$0xff] %vm480, %v4743
      %4776 = vst.msk [vmem:[#allocation3 + $0x78] sm:$0xff] %vm480, %v4744
      %4777 = vst.msk [vmem:[#allocation3 + $0x80] sm:$0xff] %vm480, %v4745
      %4778 = vst.msk [vmem:[#allocation3 + $0x88] sm:$0xff] %vm480, %v4746
      %4779 = vst.msk [vmem:[#allocation3 + $0x90] sm:$0xff] %vm480, %v4747
      %4780 = vst.msk [vmem:[#allocation3 + $0x98] sm:$0xff] %vm480, %v4748
      %4781 = vst.msk [vmem:[#allocation3 + $0xa0] sm:$0xff] %vm480, %v4749
      %4782 = vst.msk [vmem:[#allocation3 + $0xa8] sm:$0xff] %vm480, %v4750
      %4783 = vst.msk [vmem:[#allocation3 + $0xb0] sm:$0xff] %vm480, %v4751
      %4784 = vst.msk [vmem:[#allocation3 + $0xb8] sm:$0xff] %vm480, %v4752
      %4785 = vst.msk [vmem:[#allocation3 + $0xc0] sm:$0xff] %vm480, %v4753
      %4786 = vst.msk [vmem:[#allocation3 + $0xc8] sm:$0xff] %vm480, %v4754
      %4787 = vst.msk [vmem:[#allocation3 + $0xd0] sm:$0xff] %vm480, %v4755
      %4788 = vst.msk [vmem:[#allocation3 + $0xd8] sm:$0xff] %vm480, %v4756
      %4789 = vst.msk [vmem:[#allocation3 + $0xe0] sm:$0xff] %vm480, %v4757
      %4790 = vst.msk [vmem:[#allocation3 + $0xe8] sm:$0xff] %vm480, %v4758
      %4791 = vst.msk [vmem:[#allocation3 + $0xf0] sm:$0xff] %vm480, %v4759
      %4792 = vst.msk [vmem:[#allocation3 + $0xf8] sm:$0xff] %vm480, %v4760
      %v4793 = vld [vmem:[%s2154 + $0x8] sm:$0xff]
      %v4794 = vld [vmem:[%s2154 + $0x10] sm:$0xff]
      %v4795 = vld [vmem:[%s2154 + $0x28] sm:$0xff]
      %v4796 = vld [vmem:[%s2154 + $0x30] sm:$0xff]
      %v4797 = vld [vmem:[%s2154 + $0x48] sm:$0xff]
      %v4798 = vld [vmem:[%s2154 + $0x50] sm:$0xff]
      %v4799 = vld [vmem:[%s2154 + $0x68] sm:$0xff]
      %v4800 = vld [vmem:[%s2154 + $0x70] sm:$0xff]
      %v4801 = vld [vmem:[%s2154 + $0x88] sm:$0xff]
      %v4802 = vld [vmem:[%s2154 + $0x90] sm:$0xff]
      %v4803 = vld [vmem:[%s2154 + $0xa8] sm:$0xff]
      %v4804 = vld [vmem:[%s2154 + $0xb0] sm:$0xff]
      %v4805 = vld [vmem:[%s2154 + $0xc8] sm:$0xff]
      %v4806 = vld [vmem:[%s2154 + $0xd0] sm:$0xff]
      %v4807 = vld [vmem:[%s2154 + $0xe8] sm:$0xff]
      %v4808 = vld [vmem:[%s2154 + $0xf0] sm:$0xff]
      %v4809 = vld [vmem:[%s2154 + $0x108] sm:$0xff]
      %v4810 = vld [vmem:[%s2154 + $0x110] sm:$0xff]
      %v4811 = vld [vmem:[%s2154 + $0x128] sm:$0xff]
      %v4812 = vld [vmem:[%s2154 + $0x130] sm:$0xff]
      %v4813 = vld [vmem:[%s2154 + $0x148] sm:$0xff]
      %v4814 = vld [vmem:[%s2154 + $0x150] sm:$0xff]
      %v4815 = vld [vmem:[%s2154 + $0x168] sm:$0xff]
      %v4816 = vld [vmem:[%s2154 + $0x170] sm:$0xff]
      %v4817 = vld [vmem:[%s2154 + $0x188] sm:$0xff]
      %v4818 = vld [vmem:[%s2154 + $0x190] sm:$0xff]
      %v4819 = vld [vmem:[%s2154 + $0x1a8] sm:$0xff]
      %v4820 = vld [vmem:[%s2154 + $0x1b0] sm:$0xff]
      %v4821 = vld [vmem:[%s2154 + $0x1c8] sm:$0xff]
      %v4822 = vld [vmem:[%s2154 + $0x1d0] sm:$0xff]
      %v4823 = vld [vmem:[%s2154 + $0x1e8] sm:$0xff]
      %v4824 = vld [vmem:[%s2154 + $0x1f0] sm:$0xff]
      %4857 = vrot.lane.b32.xlu0 %v4793, 32
      %v4858 = vpop.permute.xlu0 %4857
      %4859 = vrot.lane.b32.xlu0 %v4794, 32
      %v4860 = vpop.permute.xlu0 %4859
      %4861 = vrot.lane.b32.xlu0 %v4795, 32
      %v4862 = vpop.permute.xlu0 %4861
      %4863 = vrot.lane.b32.xlu0 %v4796, 32
      %v4864 = vpop.permute.xlu0 %4863
      %4865 = vrot.lane.b32.xlu0 %v4797, 32
      %v4866 = vpop.permute.xlu0 %4865
      %4867 = vrot.lane.b32.xlu0 %v4798, 32
      %v4868 = vpop.permute.xlu0 %4867
      %4869 = vrot.lane.b32.xlu0 %v4799, 32
      %v4870 = vpop.permute.xlu0 %4869
      %4871 = vrot.lane.b32.xlu0 %v4800, 32
      %v4872 = vpop.permute.xlu0 %4871
      %4873 = vrot.lane.b32.xlu0 %v4801, 32
      %v4874 = vpop.permute.xlu0 %4873
      %4875 = vrot.lane.b32.xlu0 %v4802, 32
      %v4876 = vpop.permute.xlu0 %4875
      %4877 = vrot.lane.b32.xlu0 %v4803, 32
      %v4878 = vpop.permute.xlu0 %4877
      %4879 = vrot.lane.b32.xlu0 %v4804, 32
      %v4880 = vpop.permute.xlu0 %4879
      %4881 = vrot.lane.b32.xlu0 %v4805, 32
      %v4882 = vpop.permute.xlu0 %4881
      %4883 = vrot.lane.b32.xlu0 %v4806, 32
      %v4884 = vpop.permute.xlu0 %4883
      %4885 = vrot.lane.b32.xlu0 %v4807, 32
      %v4886 = vpop.permute.xlu0 %4885
      %4887 = vrot.lane.b32.xlu0 %v4808, 32
      %v4888 = vpop.permute.xlu0 %4887
      %4889 = vrot.lane.b32.xlu0 %v4809, 32
      %v4890 = vpop.permute.xlu0 %4889
      %4891 = vrot.lane.b32.xlu0 %v4810, 32
      %v4892 = vpop.permute.xlu0 %4891
      %4893 = vrot.lane.b32.xlu0 %v4811, 32
      %v4894 = vpop.permute.xlu0 %4893
      %4895 = vrot.lane.b32.xlu0 %v4812, 32
      %v4896 = vpop.permute.xlu0 %4895
      %4897 = vrot.lane.b32.xlu0 %v4813, 32
      %v4898 = vpop.permute.xlu0 %4897
      %4899 = vrot.lane.b32.xlu0 %v4814, 32
      %v4900 = vpop.permute.xlu0 %4899
      %4901 = vrot.lane.b32.xlu0 %v4815, 32
      %v4902 = vpop.permute.xlu0 %4901
      %4903 = vrot.lane.b32.xlu0 %v4816, 32
      %v4904 = vpop.permute.xlu0 %4903
      %4905 = vrot.lane.b32.xlu0 %v4817, 32
      %v4906 = vpop.permute.xlu0 %4905
      %4907 = vrot.lane.b32.xlu0 %v4818, 32
      %v4908 = vpop.permute.xlu0 %4907
      %4909 = vrot.lane.b32.xlu0 %v4819, 32
      %v4910 = vpop.permute.xlu0 %4909
      %4911 = vrot.lane.b32.xlu0 %v4820, 32
      %v4912 = vpop.permute.xlu0 %4911
      %4913 = vrot.lane.b32.xlu0 %v4821, 32
      %v4914 = vpop.permute.xlu0 %4913
      %4915 = vrot.lane.b32.xlu0 %v4822, 32
      %v4916 = vpop.permute.xlu0 %4915
      %4917 = vrot.lane.b32.xlu0 %v4823, 32
      %v4918 = vpop.permute.xlu0 %4917
      %4919 = vrot.lane.b32.xlu0 %v4824, 32
      %v4920 = vpop.permute.xlu0 %4919
      %4953 = vst.msk [vmem:[#allocation3] sm:$0xff] %vm773, %v4858
      %4954 = vst.msk [vmem:[#allocation3 + $0x8] sm:$0xff] %vm773, %v4860
      %4955 = vst.msk [vmem:[#allocation3 + $0x10] sm:$0xff] %vm773, %v4862
      %4956 = vst.msk [vmem:[#allocation3 + $0x18] sm:$0xff] %vm773, %v4864
      %4957 = vst.msk [vmem:[#allocation3 + $0x20] sm:$0xff] %vm773, %v4866
      %4958 = vst.msk [vmem:[#allocation3 + $0x28] sm:$0xff] %vm773, %v4868
      %4959 = vst.msk [vmem:[#allocation3 + $0x30] sm:$0xff] %vm773, %v4870
      %4960 = vst.msk [vmem:[#allocation3 + $0x38] sm:$0xff] %vm773, %v4872
      %4961 = vst.msk [vmem:[#allocation3 + $0x40] sm:$0xff] %vm773, %v4874
      %4962 = vst.msk [vmem:[#allocation3 + $0x48] sm:$0xff] %vm773, %v4876
      %4963 = vst.msk [vmem:[#allocation3 + $0x50] sm:$0xff] %vm773, %v4878
      %4964 = vst.msk [vmem:[#allocation3 + $0x58] sm:$0xff] %vm773, %v4880
      %4965 = vst.msk [vmem:[#allocation3 + $0x60] sm:$0xff] %vm773, %v4882
      %4966 = vst.msk [vmem:[#allocation3 + $0x68] sm:$0xff] %vm773, %v4884
      %4967 = vst.msk [vmem:[#allocation3 + $0x70] sm:$0xff] %vm773, %v4886
      %4968 = vst.msk [vmem:[#allocation3 + $0x78] sm:$0xff] %vm773, %v4888
      %4969 = vst.msk [vmem:[#allocation3 + $0x80] sm:$0xff] %vm773, %v4890
      %4970 = vst.msk [vmem:[#allocation3 + $0x88] sm:$0xff] %vm773, %v4892
      %4971 = vst.msk [vmem:[#allocation3 + $0x90] sm:$0xff] %vm773, %v4894
      %4972 = vst.msk [vmem:[#allocation3 + $0x98] sm:$0xff] %vm773, %v4896
      %4973 = vst.msk [vmem:[#allocation3 + $0xa0] sm:$0xff] %vm773, %v4898
      %4974 = vst.msk [vmem:[#allocation3 + $0xa8] sm:$0xff] %vm773, %v4900
      %4975 = vst.msk [vmem:[#allocation3 + $0xb0] sm:$0xff] %vm773, %v4902
      %4976 = vst.msk [vmem:[#allocation3 + $0xb8] sm:$0xff] %vm773, %v4904
      %4977 = vst.msk [vmem:[#allocation3 + $0xc0] sm:$0xff] %vm773, %v4906
      %4978 = vst.msk [vmem:[#allocation3 + $0xc8] sm:$0xff] %vm773, %v4908
      %4979 = vst.msk [vmem:[#allocation3 + $0xd0] sm:$0xff] %vm773, %v4910
      %4980 = vst.msk [vmem:[#allocation3 + $0xd8] sm:$0xff] %vm773, %v4912
      %4981 = vst.msk [vmem:[#allocation3 + $0xe0] sm:$0xff] %vm773, %v4914
      %4982 = vst.msk [vmem:[#allocation3 + $0xe8] sm:$0xff] %vm773, %v4916
      %4983 = vst.msk [vmem:[#allocation3 + $0xf0] sm:$0xff] %vm773, %v4918
      %4984 = vst.msk [vmem:[#allocation3 + $0xf8] sm:$0xff] %vm773, %v4920
      %v4985 = vld [vmem:[%s2154 + $0x9] sm:$0xff]
      %v4986 = vld [vmem:[%s2154 + $0x11] sm:$0xff]
      %v4987 = vld [vmem:[%s2154 + $0x29] sm:$0xff]
      %v4988 = vld [vmem:[%s2154 + $0x31] sm:$0xff]
      %v4989 = vld [vmem:[%s2154 + $0x49] sm:$0xff]
      %v4990 = vld [vmem:[%s2154 + $0x51] sm:$0xff]
      %v4991 = vld [vmem:[%s2154 + $0x69] sm:$0xff]
      %v4992 = vld [vmem:[%s2154 + $0x71] sm:$0xff]
      %v4993 = vld [vmem:[%s2154 + $0x89] sm:$0xff]
      %v4994 = vld [vmem:[%s2154 + $0x91] sm:$0xff]
      %v4995 = vld [vmem:[%s2154 + $0xa9] sm:$0xff]
      %v4996 = vld [vmem:[%s2154 + $0xb1] sm:$0xff]
      %v4997 = vld [vmem:[%s2154 + $0xc9] sm:$0xff]
      %v4998 = vld [vmem:[%s2154 + $0xd1] sm:$0xff]
      %v4999 = vld [vmem:[%s2154 + $0xe9] sm:$0xff]
      %v5000 = vld [vmem:[%s2154 + $0xf1] sm:$0xff]
      %v5001 = vld [vmem:[%s2154 + $0x109] sm:$0xff]
      %v5002 = vld [vmem:[%s2154 + $0x111] sm:$0xff]
      %v5003 = vld [vmem:[%s2154 + $0x129] sm:$0xff]
      %v5004 = vld [vmem:[%s2154 + $0x131] sm:$0xff]
      %v5005 = vld [vmem:[%s2154 + $0x149] sm:$0xff]
      %v5006 = vld [vmem:[%s2154 + $0x151] sm:$0xff]
      %v5007 = vld [vmem:[%s2154 + $0x169] sm:$0xff]
      %v5008 = vld [vmem:[%s2154 + $0x171] sm:$0xff]
      %v5009 = vld [vmem:[%s2154 + $0x189] sm:$0xff]
      %v5010 = vld [vmem:[%s2154 + $0x191] sm:$0xff]
      %v5011 = vld [vmem:[%s2154 + $0x1a9] sm:$0xff]
      %v5012 = vld [vmem:[%s2154 + $0x1b1] sm:$0xff]
      %v5013 = vld [vmem:[%s2154 + $0x1c9] sm:$0xff]
      %v5014 = vld [vmem:[%s2154 + $0x1d1] sm:$0xff]
      %v5015 = vld [vmem:[%s2154 + $0x1e9] sm:$0xff]
      %v5016 = vld [vmem:[%s2154 + $0x1f1] sm:$0xff]
      %5049 = vrot.lane.b32.xlu0 %v4985, 64
      %v5050 = vpop.permute.xlu0 %5049
      %5051 = vrot.lane.b32.xlu0 %v4986, 64
      %v5052 = vpop.permute.xlu0 %5051
      %5053 = vrot.lane.b32.xlu0 %v4987, 64
      %v5054 = vpop.permute.xlu0 %5053
      %5055 = vrot.lane.b32.xlu0 %v4988, 64
      %v5056 = vpop.permute.xlu0 %5055
      %5057 = vrot.lane.b32.xlu0 %v4989, 64
      %v5058 = vpop.permute.xlu0 %5057
      %5059 = vrot.lane.b32.xlu0 %v4990, 64
      %v5060 = vpop.permute.xlu0 %5059
      %5061 = vrot.lane.b32.xlu0 %v4991, 64
      %v5062 = vpop.permute.xlu0 %5061
      %5063 = vrot.lane.b32.xlu0 %v4992, 64
      %v5064 = vpop.permute.xlu0 %5063
      %5065 = vrot.lane.b32.xlu0 %v4993, 64
      %v5066 = vpop.permute.xlu0 %5065
      %5067 = vrot.lane.b32.xlu0 %v4994, 64
      %v5068 = vpop.permute.xlu0 %5067
      %5069 = vrot.lane.b32.xlu0 %v4995, 64
      %v5070 = vpop.permute.xlu0 %5069
      %5071 = vrot.lane.b32.xlu0 %v4996, 64
      %v5072 = vpop.permute.xlu0 %5071
      %5073 = vrot.lane.b32.xlu0 %v4997, 64
      %v5074 = vpop.permute.xlu0 %5073
      %5075 = vrot.lane.b32.xlu0 %v4998, 64
      %v5076 = vpop.permute.xlu0 %5075
      %5077 = vrot.lane.b32.xlu0 %v4999, 64
      %v5078 = vpop.permute.xlu0 %5077
      %5079 = vrot.lane.b32.xlu0 %v5000, 64
      %v5080 = vpop.permute.xlu0 %5079
      %5081 = vrot.lane.b32.xlu0 %v5001, 64
      %v5082 = vpop.permute.xlu0 %5081
      %5083 = vrot.lane.b32.xlu0 %v5002, 64
      %v5084 = vpop.permute.xlu0 %5083
      %5085 = vrot.lane.b32.xlu0 %v5003, 64
      %v5086 = vpop.permute.xlu0 %5085
      %5087 = vrot.lane.b32.xlu0 %v5004, 64
      %v5088 = vpop.permute.xlu0 %5087
      %5089 = vrot.lane.b32.xlu0 %v5005, 64
      %v5090 = vpop.permute.xlu0 %5089
      %5091 = vrot.lane.b32.xlu0 %v5006, 64
      %v5092 = vpop.permute.xlu0 %5091
      %5093 = vrot.lane.b32.xlu0 %v5007, 64
      %v5094 = vpop.permute.xlu0 %5093
      %5095 = vrot.lane.b32.xlu0 %v5008, 64
      %v5096 = vpop.permute.xlu0 %5095
      %5097 = vrot.lane.b32.xlu0 %v5009, 64
      %v5098 = vpop.permute.xlu0 %5097
      %5099 = vrot.lane.b32.xlu0 %v5010, 64
      %v5100 = vpop.permute.xlu0 %5099
      %5101 = vrot.lane.b32.xlu0 %v5011, 64
      %v5102 = vpop.permute.xlu0 %5101
      %5103 = vrot.lane.b32.xlu0 %v5012, 64
      %v5104 = vpop.permute.xlu0 %5103
      %5105 = vrot.lane.b32.xlu0 %v5013, 64
      %v5106 = vpop.permute.xlu0 %5105
      %5107 = vrot.lane.b32.xlu0 %v5014, 64
      %v5108 = vpop.permute.xlu0 %5107
      %5109 = vrot.lane.b32.xlu0 %v5015, 64
      %v5110 = vpop.permute.xlu0 %5109
      %5111 = vrot.lane.b32.xlu0 %v5016, 64
      %v5112 = vpop.permute.xlu0 %5111
      %5145 = vst.msk [vmem:[#allocation3] sm:$0xff] %vm966, %v5050
      %5146 = vst.msk [vmem:[#allocation3 + $0x8] sm:$0xff] %vm966, %v5052
      %5147 = vst.msk [vmem:[#allocation3 + $0x10] sm:$0xff] %vm966, %v5054
      %5148 = vst.msk [vmem:[#allocation3 + $0x18] sm:$0xff] %vm966, %v5056
      %5149 = vst.msk [vmem:[#allocation3 + $0x20] sm:$0xff] %vm966, %v5058
      %5150 = vst.msk [vmem:[#allocation3 + $0x28] sm:$0xff] %vm966, %v5060
      %5151 = vst.msk [vmem:[#allocation3 + $0x30] sm:$0xff] %vm966, %v5062
      %5152 = vst.msk [vmem:[#allocation3 + $0x38] sm:$0xff] %vm966, %v5064
      %5153 = vst.msk [vmem:[#allocation3 + $0x40] sm:$0xff] %vm966, %v5066
      %5154 = vst.msk [vmem:[#allocation3 + $0x48] sm:$0xff] %vm966, %v5068
      %5155 = vst.msk [vmem:[#allocation3 + $0x50] sm:$0xff] %vm966, %v5070
      %5156 = vst.msk [vmem:[#allocation3 + $0x58] sm:$0xff] %vm966, %v5072
      %5157 = vst.msk [vmem:[#allocation3 + $0x60] sm:$0xff] %vm966, %v5074
      %5158 = vst.msk [vmem:[#allocation3 + $0x68] sm:$0xff] %vm966, %v5076
      %5159 = vst.msk [vmem:[#allocation3 + $0x70] sm:$0xff] %vm966, %v5078
      %5160 = vst.msk [vmem:[#allocation3 + $0x78] sm:$0xff] %vm966, %v5080
      %5161 = vst.msk [vmem:[#allocation3 + $0x80] sm:$0xff] %vm966, %v5082
      %5162 = vst.msk [vmem:[#allocation3 + $0x88] sm:$0xff] %vm966, %v5084
      %5163 = vst.msk [vmem:[#allocation3 + $0x90] sm:$0xff] %vm966, %v5086
      %5164 = vst.msk [vmem:[#allocation3 + $0x98] sm:$0xff] %vm966, %v5088
      %5165 = vst.msk [vmem:[#allocation3 + $0xa0] sm:$0xff] %vm966, %v5090
      %5166 = vst.msk [vmem:[#allocation3 + $0xa8] sm:$0xff] %vm966, %v5092
      %5167 = vst.msk [vmem:[#allocation3 + $0xb0] sm:$0xff] %vm966, %v5094
      %5168 = vst.msk [vmem:[#allocation3 + $0xb8] sm:$0xff] %vm966, %v5096
      %5169 = vst.msk [vmem:[#allocation3 + $0xc0] sm:$0xff] %vm966, %v5098
      %5170 = vst.msk [vmem:[#allocation3 + $0xc8] sm:$0xff] %vm966, %v5100
      %5171 = vst.msk [vmem:[#allocation3 + $0xd0] sm:$0xff] %vm966, %v5102
      %5172 = vst.msk [vmem:[#allocation3 + $0xd8] sm:$0xff] %vm966, %v5104
      %5173 = vst.msk [vmem:[#allocation3 + $0xe0] sm:$0xff] %vm966, %v5106
      %5174 = vst.msk [vmem:[#allocation3 + $0xe8] sm:$0xff] %vm966, %v5108
      %5175 = vst.msk [vmem:[#allocation3 + $0xf0] sm:$0xff] %vm966, %v5110
      %5176 = vst.msk [vmem:[#allocation3 + $0xf8] sm:$0xff] %vm966, %v5112
      %v5177 = vld [vmem:[#allocation3] sm:$0xff]
      %v5178 = vld [vmem:[#allocation3 + $0x8] sm:$0xff]
      %v5179 = vld [vmem:[#allocation3 + $0x10] sm:$0xff]
      %v5180 = vld [vmem:[#allocation3 + $0x18] sm:$0xff]
      %v5181 = vld [vmem:[#allocation3 + $0x20] sm:$0xff]
      %v5182 = vld [vmem:[#allocation3 + $0x28] sm:$0xff]
      %v5183 = vld [vmem:[#allocation3 + $0x30] sm:$0xff]
      %v5184 = vld [vmem:[#allocation3 + $0x38] sm:$0xff]
      %v5185 = vld [vmem:[#allocation3 + $0x40] sm:$0xff]
      %v5186 = vld [vmem:[#allocation3 + $0x48] sm:$0xff]
      %v5187 = vld [vmem:[#allocation3 + $0x50] sm:$0xff]
      %v5188 = vld [vmem:[#allocation3 + $0x58] sm:$0xff]
      %v5189 = vld [vmem:[#allocation3 + $0x60] sm:$0xff]
      %v5190 = vld [vmem:[#allocation3 + $0x68] sm:$0xff]
      %v5191 = vld [vmem:[#allocation3 + $0x70] sm:$0xff]
      %v5192 = vld [vmem:[#allocation3 + $0x78] sm:$0xff]
      %v5193 = vld [vmem:[#allocation3 + $0x80] sm:$0xff]
      %v5194 = vld [vmem:[#allocation3 + $0x88] sm:$0xff]
      %v5195 = vld [vmem:[#allocation3 + $0x90] sm:$0xff]
      %v5196 = vld [vmem:[#allocation3 + $0x98] sm:$0xff]
      %v5197 = vld [vmem:[#allocation3 + $0xa0] sm:$0xff]
      %v5198 = vld [vmem:[#allocation3 + $0xa8] sm:$0xff]
      %v5199 = vld [vmem:[#allocation3 + $0xb0] sm:$0xff]
      %v5200 = vld [vmem:[#allocation3 + $0xb8] sm:$0xff]
      %v5201 = vld [vmem:[#allocation3 + $0xc0] sm:$0xff]
      %v5202 = vld [vmem:[#allocation3 + $0xc8] sm:$0xff]
      %v5203 = vld [vmem:[#allocation3 + $0xd0] sm:$0xff]
      %v5204 = vld [vmem:[#allocation3 + $0xd8] sm:$0xff]
      %v5205 = vld [vmem:[#allocation3 + $0xe0] sm:$0xff]
      %v5206 = vld [vmem:[#allocation3 + $0xe8] sm:$0xff]
      %v5207 = vld [vmem:[#allocation3 + $0xf0] sm:$0xff]
      %v5208 = vld [vmem:[#allocation3 + $0xf8] sm:$0xff]
      %v5210 = vsel %vm1511, %v5177, 0
      %v5213 = vsel %vm1511, %v5178, 0
      %v5216 = vsel %vm1511, %v5179, 0
      %v5219 = vsel %vm1511, %v5180, 0
      %v5222 = vsel %vm1511, %v5181, 0
      %v5225 = vsel %vm1511, %v5182, 0
      %v5228 = vsel %vm1511, %v5183, 0
      %v5231 = vsel %vm1511, %v5184, 0
      %v5234 = vsel %vm1511, %v5185, 0
      %v5237 = vsel %vm1511, %v5186, 0
      %v5240 = vsel %vm1511, %v5187, 0
      %v5243 = vsel %vm1511, %v5188, 0
      %v5246 = vsel %vm1511, %v5189, 0
      %v5249 = vsel %vm1511, %v5190, 0
      %v5252 = vsel %vm1511, %v5191, 0
      %v5255 = vsel %vm1511, %v5192, 0
      %v5258 = vsel %vm1511, %v5193, 0
      %v5261 = vsel %vm1511, %v5194, 0
      %v5264 = vsel %vm1511, %v5195, 0
      %v5267 = vsel %vm1511, %v5196, 0
      %v5270 = vsel %vm1511, %v5197, 0
      %v5273 = vsel %vm1511, %v5198, 0
      %v5276 = vsel %vm1511, %v5199, 0
      %v5279 = vsel %vm1511, %v5200, 0
      %v5282 = vsel %vm1511, %v5201, 0
      %v5285 = vsel %vm1511, %v5202, 0
      %v5288 = vsel %vm1511, %v5203, 0
      %v5291 = vsel %vm1511, %v5204, 0
      %v5294 = vsel %vm1511, %v5205, 0
      %v5297 = vsel %vm1511, %v5206, 0
      %v5300 = vsel %vm1511, %v5207, 0
      %v5303 = vsel %vm1511, %v5208, 0
      %5305 = vmatprep.subr.mxu0 0.0
      %5306 = vmatpush1.msra.mxu0 %v3115
      %5307 = vmatprep.subr.mxu0 0.0
      %5308 = vmatpush1.msra.mxu0 %v3116
      %5309 = vmatprep.subr.mxu0 0.0
      %5310 = vmatpush1.msra.mxu0 %v3117
      %5311 = vmatprep.subr.mxu0 0.0
      %5312 = vmatpush1.msra.mxu0 %v3118
      %5313 = vmatprep.subr.mxu0 0.0
      %5314 = vmatpush1.msra.mxu0 %v3119
      %5315 = vmatprep.subr.mxu0 0.0
      %5316 = vmatpush1.msra.mxu0 %v3120
      %5317 = vmatprep.subr.mxu0 0.0
      %5318 = vmatpush1.msra.mxu0 %v3121
      %5319 = vmatprep.subr.mxu0 0.0
      %5320 = vmatpush1.msra.mxu0 %v3122
      %5321 = vmatprep.subr.mxu0 0.0
      %5322 = vmatpush1.msra.mxu0 %v3123
      %5323 = vmatprep.subr.mxu0 0.0
      %5324 = vmatpush1.msra.mxu0 %v3124
      %5325 = vmatprep.subr.mxu0 0.0
      %5326 = vmatpush1.msra.mxu0 %v3125
      %5327 = vmatprep.subr.mxu0 0.0
      %5328 = vmatpush1.msra.mxu0 %v3126
      %5329 = vmatprep.subr.mxu0 0.0
      %5330 = vmatpush1.msra.mxu0 0.0
      %5331 = vmatprep.subr.mxu0 0.0
      %5332 = vmatpush1.msra.mxu0 0.0
      %5333 = vmatprep.subr.mxu0 0.0
      %5334 = vmatpush1.msra.mxu0 0.0
      %5335 = vmatprep.subr.mxu0 0.0
      %5336 = vmatpush1.msra.mxu0 0.0
      %5337 = vmatprep.subr.mxu0 0.0
      %5338 = vmatpush1.msra.mxu0 0.0
      %5339 = vmatprep.subr.mxu0 0.0
      %5340 = vmatpush1.msra.mxu0 0.0
      %5341 = vmatprep.subr.mxu0 0.0
      %5342 = vmatpush1.msra.mxu0 0.0
      %5343 = vmatprep.subr.mxu0 0.0
      %5344 = vmatpush1.msra.mxu0 0.0
      %5345 = vmatprep.subr.mxu0 0.0
      %5346 = vmatpush1.msra.mxu0 0.0
      %5347 = vmatprep.subr.mxu0 0.0
      %5348 = vmatpush1.msra.mxu0 0.0
      %5349 = vmatprep.subr.mxu0 0.0
      %5350 = vmatpush1.msra.mxu0 0.0
      %5351 = vmatprep.subr.mxu0 0.0
      %5352 = vmatpush1.msra.mxu0 0.0
      %5353 = vmatprep.subr.mxu0 0.0
      %5354 = vmatpush1.msra.mxu0 0.0
      %5355 = vmatprep.subr.mxu0 0.0
      %5356 = vmatpush1.msra.mxu0 0.0
      %5357 = vmatprep.subr.mxu0 0.0
      %5358 = vmatpush1.msra.mxu0 0.0
      %5359 = vmatprep.subr.mxu0 0.0
      %5360 = vmatpush1.msra.mxu0 0.0
      %5361 = vmatprep.subr.mxu0 0.0
      %5362 = vmatpush1.msra.mxu0 0.0
      %5363 = vmatprep.subr.mxu0 0.0
      %5364 = vmatpush1.msra.mxu0 0.0
      %5365 = vmatprep.subr.mxu0 0.0
      %5366 = vmatpush1.msra.mxu0 0.0
      %5367 = vmatprep.subr.mxu0 0.0
      %5368 = vmatpush1.msra.mxu0 0.0
      %5369 = vmatprep.mubr.f32.mxu0 0.0
      %5370 = vmatmul.mubr.f32.gmra.mrb[0].mxu0 %v5210
      %v5371 = vpop.f32.mrb[0].mxu0
      %v5372 = vadd.f32 0.0, %v5371
      %v5373 = vpop.f32.mrb[0].mxu0
      %5374 = vmatprep.mubr.f32.mxu0 0.0
      %5375 = vmatmul.mubr.f32.gmra.mrb[0].mxu0 %v5213
      %v5376 = vpop.f32.mrb[0].mxu0
      %v5377 = vadd.f32 0.0, %v5376
      %v5378 = vpop.f32.mrb[0].mxu0
      %5379 = vmatprep.mubr.f32.mxu0 0.0
      %5380 = vmatmul.mubr.f32.gmra.mrb[0].mxu0 %v5216
      %v5381 = vpop.f32.mrb[0].mxu0
      %v5382 = vadd.f32 0.0, %v5381
      %v5383 = vpop.f32.mrb[0].mxu0
      %5384 = vmatprep.mubr.f32.mxu0 0.0
      %5385 = vmatmul.mubr.f32.gmra.mrb[0].mxu0 %v5219
      %v5386 = vpop.f32.mrb[0].mxu0
      %v5387 = vadd.f32 0.0, %v5386
      %v5388 = vpop.f32.mrb[0].mxu0
      %5389 = vmatprep.mubr.f32.mxu0 0.0
      %5390 = vmatmul.mubr.f32.gmra.mrb[0].mxu0 %v5222
      %v5391 = vpop.f32.mrb[0].mxu0
      %v5392 = vadd.f32 0.0, %v5391
      %v5393 = vpop.f32.mrb[0].mxu0
      %5394 = vmatprep.mubr.f32.mxu0 0.0
      %5395 = vmatmul.mubr.f32.gmra.mrb[0].mxu0 %v5225
      %v5396 = vpop.f32.mrb[0].mxu0
      %v5397 = vadd.f32 0.0, %v5396
      %v5398 = vpop.f32.mrb[0].mxu0
      %5399 = vmatprep.mubr.f32.mxu0 0.0
      %5400 = vmatmul.mubr.f32.gmra.mrb[0].mxu0 %v5228
      %v5401 = vpop.f32.mrb[0].mxu0
      %v5402 = vadd.f32 0.0, %v5401
      %v5403 = vpop.f32.mrb[0].mxu0
      %5404 = vmatprep.mubr.f32.mxu0 0.0
      %5405 = vmatmul.mubr.f32.gmra.mrb[0].mxu0 %v5231
      %v5406 = vpop.f32.mrb[0].mxu0
      %v5407 = vadd.f32 0.0, %v5406
      %v5408 = vpop.f32.mrb[0].mxu0
      %5409 = vmatprep.mubr.f32.mxu0 0.0
      %5410 = vmatmul.mubr.f32.gmra.mrb[0].mxu0 %v5234
      %v5411 = vpop.f32.mrb[0].mxu0
      %v5412 = vadd.f32 0.0, %v5411
      %v5413 = vpop.f32.mrb[0].mxu0
      %5414 = vmatprep.mubr.f32.mxu0 0.0
      %5415 = vmatmul.mubr.f32.gmra.mrb[0].mxu0 %v5237
      %v5416 = vpop.f32.mrb[0].mxu0
      %v5417 = vadd.f32 0.0, %v5416
      %v5418 = vpop.f32.mrb[0].mxu0
      %5419 = vmatprep.mubr.f32.mxu0 0.0
      %5420 = vmatmul.mubr.f32.gmra.mrb[0].mxu0 %v5240
      %v5421 = vpop.f32.mrb[0].mxu0
      %v5422 = vadd.f32 0.0, %v5421
      %v5423 = vpop.f32.mrb[0].mxu0
      %5424 = vmatprep.mubr.f32.mxu0 0.0
      %5425 = vmatmul.mubr.f32.gmra.mrb[0].mxu0 %v5243
      %v5426 = vpop.f32.mrb[0].mxu0
      %v5427 = vadd.f32 0.0, %v5426
      %v5428 = vpop.f32.mrb[0].mxu0
      %5429 = vmatprep.mubr.f32.mxu0 0.0
      %5430 = vmatmul.mubr.f32.gmra.mrb[0].mxu0 %v5246
      %v5431 = vpop.f32.mrb[0].mxu0
      %v5432 = vadd.f32 0.0, %v5431
      %v5433 = vpop.f32.mrb[0].mxu0
      %5434 = vmatprep.mubr.f32.mxu0 0.0
      %5435 = vmatmul.mubr.f32.gmra.mrb[0].mxu0 %v5249
      %v5436 = vpop.f32.mrb[0].mxu0
      %v5437 = vadd.f32 0.0, %v5436
      %v5438 = vpop.f32.mrb[0].mxu0
      %5439 = vmatprep.mubr.f32.mxu0 0.0
      %5440 = vmatmul.mubr.f32.gmra.mrb[0].mxu0 %v5252
      %v5441 = vpop.f32.mrb[0].mxu0
      %v5442 = vadd.f32 0.0, %v5441
      %v5443 = vpop.f32.mrb[0].mxu0
      %5444 = vmatprep.mubr.f32.mxu0 0.0
      %5445 = vmatmul.mubr.f32.gmra.mrb[0].mxu0 %v5255
      %v5446 = vpop.f32.mrb[0].mxu0
      %v5447 = vadd.f32 0.0, %v5446
      %v5448 = vpop.f32.mrb[0].mxu0
      %5449 = vmatprep.mubr.f32.mxu0 0.0
      %5450 = vmatmul.mubr.f32.gmra.mrb[0].mxu0 %v5258
      %v5451 = vpop.f32.mrb[0].mxu0
      %v5452 = vadd.f32 0.0, %v5451
      %v5453 = vpop.f32.mrb[0].mxu0
      %5454 = vmatprep.mubr.f32.mxu0 0.0
      %5455 = vmatmul.mubr.f32.gmra.mrb[0].mxu0 %v5261
      %v5456 = vpop.f32.mrb[0].mxu0
      %v5457 = vadd.f32 0.0, %v5456
      %v5458 = vpop.f32.mrb[0].mxu0
      %5459 = vmatprep.mubr.f32.mxu0 0.0
      %5460 = vmatmul.mubr.f32.gmra.mrb[0].mxu0 %v5264
      %v5461 = vpop.f32.mrb[0].mxu0
      %v5462 = vadd.f32 0.0, %v5461
      %v5463 = vpop.f32.mrb[0].mxu0
      %5464 = vmatprep.mubr.f32.mxu0 0.0
      %5465 = vmatmul.mubr.f32.gmra.mrb[0].mxu0 %v5267
      %v5466 = vpop.f32.mrb[0].mxu0
      %v5467 = vadd.f32 0.0, %v5466
      %v5468 = vpop.f32.mrb[0].mxu0
      %5469 = vmatprep.mubr.f32.mxu0 0.0
      %5470 = vmatmul.mubr.f32.gmra.mrb[0].mxu0 %v5270
      %v5471 = vpop.f32.mrb[0].mxu0
      %v5472 = vadd.f32 0.0, %v5471
      %v5473 = vpop.f32.mrb[0].mxu0
      %5474 = vmatprep.mubr.f32.mxu0 0.0
      %5475 = vmatmul.mubr.f32.gmra.mrb[0].mxu0 %v5273
      %v5476 = vpop.f32.mrb[0].mxu0
      %v5477 = vadd.f32 0.0, %v5476
      %v5478 = vpop.f32.mrb[0].mxu0
      %5479 = vmatprep.mubr.f32.mxu0 0.0
      %5480 = vmatmul.mubr.f32.gmra.mrb[0].mxu0 %v5276
      %v5481 = vpop.f32.mrb[0].mxu0
      %v5482 = vadd.f32 0.0, %v5481
      %v5483 = vpop.f32.mrb[0].mxu0
      %5484 = vmatprep.mubr.f32.mxu0 0.0
      %5485 = vmatmul.mubr.f32.gmra.mrb[0].mxu0 %v5279
      %v5486 = vpop.f32.mrb[0].mxu0
      %v5487 = vadd.f32 0.0, %v5486
      %v5488 = vpop.f32.mrb[0].mxu0
      %5489 = vmatprep.mubr.f32.mxu0 0.0
      %5490 = vmatmul.mubr.f32.gmra.mrb[0].mxu0 %v5282
      %v5491 = vpop.f32.mrb[0].mxu0
      %v5492 = vadd.f32 0.0, %v5491
      %v5493 = vpop.f32.mrb[0].mxu0
      %5494 = vmatprep.mubr.f32.mxu0 0.0
      %5495 = vmatmul.mubr.f32.gmra.mrb[0].mxu0 %v5285
      %v5496 = vpop.f32.mrb[0].mxu0
      %v5497 = vadd.f32 0.0, %v5496
      %v5498 = vpop.f32.mrb[0].mxu0
      %5499 = vmatprep.mubr.f32.mxu0 0.0
      %5500 = vmatmul.mubr.f32.gmra.mrb[0].mxu0 %v5288
      %v5501 = vpop.f32.mrb[0].mxu0
      %v5502 = vadd.f32 0.0, %v5501
      %v5503 = vpop.f32.mrb[0].mxu0
      %5504 = vmatprep.mubr.f32.mxu0 0.0
      %5505 = vmatmul.mubr.f32.gmra.mrb[0].mxu0 %v5291
      %v5506 = vpop.f32.mrb[0].mxu0
      %v5507 = vadd.f32 0.0, %v5506
      %v5508 = vpop.f32.mrb[0].mxu0
      %5509 = vmatprep.mubr.f32.mxu0 0.0
      %5510 = vmatmul.mubr.f32.gmra.mrb[0].mxu0 %v5294
      %v5511 = vpop.f32.mrb[0].mxu0
      %v5512 = vadd.f32 0.0, %v5511
      %v5513 = vpop.f32.mrb[0].mxu0
      %5514 = vmatprep.mubr.f32.mxu0 0.0
      %5515 = vmatmul.mubr.f32.gmra.mrb[0].mxu0 %v5297
      %v5516 = vpop.f32.mrb[0].mxu0
      %v5517 = vadd.f32 0.0, %v5516
      %v5518 = vpop.f32.mrb[0].mxu0
      %5519 = vmatprep.mubr.f32.mxu0 0.0
      %5520 = vmatmul.mubr.f32.gmra.mrb[0].mxu0 %v5300
      %v5521 = vpop.f32.mrb[0].mxu0
      %v5522 = vadd.f32 0.0, %v5521
      %v5523 = vpop.f32.mrb[0].mxu0
      %5524 = vmatprep.mubr.f32.mxu0 0.0
      %5525 = vmatmul.mubr.f32.gmra.mrb[0].mxu0 %v5303
      %v5526 = vpop.f32.mrb[0].mxu0
      %v5527 = vadd.f32 0.0, %v5526
      %v5528 = vpop.f32.mrb[0].mxu0
      %5529 = vdwg.mxu0
      %v5530 = vadd.f32 %v4571, %v5372
      %v5531 = vadd.f32 %v4576, %v5377
      %v5532 = vadd.f32 %v4581, %v5382
      %v5533 = vadd.f32 %v4586, %v5387
      %v5534 = vadd.f32 %v4591, %v5392
      %v5535 = vadd.f32 %v4596, %v5397
      %v5536 = vadd.f32 %v4601, %v5402
      %v5537 = vadd.f32 %v4606, %v5407
      %v5538 = vadd.f32 %v4611, %v5412
      %v5539 = vadd.f32 %v4616, %v5417
      %v5540 = vadd.f32 %v4621, %v5422
      %v5541 = vadd.f32 %v4626, %v5427
      %v5542 = vadd.f32 %v4631, %v5432
      %v5543 = vadd.f32 %v4636, %v5437
      %v5544 = vadd.f32 %v4641, %v5442
      %v5545 = vadd.f32 %v4646, %v5447
      %v5546 = vadd.f32 %v4651, %v5452
      %v5547 = vadd.f32 %v4656, %v5457
      %v5548 = vadd.f32 %v4661, %v5462
      %v5549 = vadd.f32 %v4666, %v5467
      %v5550 = vadd.f32 %v4671, %v5472
      %v5551 = vadd.f32 %v4676, %v5477
      %v5552 = vadd.f32 %v4681, %v5482
      %v5553 = vadd.f32 %v4686, %v5487
      %v5554 = vadd.f32 %v4691, %v5492
      %v5555 = vadd.f32 %v4696, %v5497
      %v5556 = vadd.f32 %v4701, %v5502
      %v5557 = vadd.f32 %v4706, %v5507
      %v5558 = vadd.f32 %v4711, %v5512
      %v5559 = vadd.f32 %v4716, %v5517
      %v5560 = vadd.f32 %v4721, %v5522
      %v5561 = vadd.f32 %v4726, %v5527
      %v5562 = vld [vmem:[%s299] sm:$0x1]
      %v5564 = vlaneseq
      %v5565 = vshrl.u32 %v5564, 7
      %v5566 = vsub.s32 0, %v5565
      %v5567 = vrot.slane %v5562, %v5566
      %v5569 = vadd.f32 %v5530, %v5567
      %v5570 = vadd.f32 %v5531, %v5567
      %v5571 = vadd.f32 %v5532, %v5567
      %v5572 = vadd.f32 %v5533, %v5567
      %v5573 = vadd.f32 %v5534, %v5567
      %v5574 = vadd.f32 %v5535, %v5567
      %v5575 = vadd.f32 %v5536, %v5567
      %v5576 = vadd.f32 %v5537, %v5567
      %v5577 = vadd.f32 %v5538, %v5567
      %v5578 = vadd.f32 %v5539, %v5567
      %v5579 = vadd.f32 %v5540, %v5567
      %v5580 = vadd.f32 %v5541, %v5567
      %v5581 = vadd.f32 %v5542, %v5567
      %v5582 = vadd.f32 %v5543, %v5567
      %v5583 = vadd.f32 %v5544, %v5567
      %v5584 = vadd.f32 %v5545, %v5567
      %v5585 = vadd.f32 %v5546, %v5567
      %v5586 = vadd.f32 %v5547, %v5567
      %v5587 = vadd.f32 %v5548, %v5567
      %v5588 = vadd.f32 %v5549, %v5567
      %v5589 = vadd.f32 %v5550, %v5567
      %v5590 = vadd.f32 %v5551, %v5567
      %v5591 = vadd.f32 %v5552, %v5567
      %v5592 = vadd.f32 %v5553, %v5567
      %v5593 = vadd.f32 %v5554, %v5567
      %v5594 = vadd.f32 %v5555, %v5567
      %v5595 = vadd.f32 %v5556, %v5567
      %v5596 = vadd.f32 %v5557, %v5567
      %v5597 = vadd.f32 %v5558, %v5567
      %v5598 = vadd.f32 %v5559, %v5567
      %v5599 = vadd.f32 %v5560, %v5567
      %v5600 = vadd.f32 %v5561, %v5567
      %v5601 = vld [vmem:[#allocation4] sm:$0xff]
      %v5602 = vld [vmem:[#allocation4 + $0x8] sm:$0xff]
      %v5603 = vld [vmem:[#allocation4 + $0x10] sm:$0xff]
      %v5604 = vld [vmem:[#allocation4 + $0x18] sm:$0xff]
      %v5605 = vld [vmem:[#allocation4 + $0x20] sm:$0xff]
      %v5606 = vld [vmem:[#allocation4 + $0x28] sm:$0xff]
      %v5607 = vld [vmem:[#allocation4 + $0x30] sm:$0xff]
      %v5608 = vld [vmem:[#allocation4 + $0x38] sm:$0xff]
      %v5609 = vld [vmem:[#allocation4 + $0x40] sm:$0xff]
      %v5610 = vld [vmem:[#allocation4 + $0x48] sm:$0xff]
      %v5611 = vld [vmem:[#allocation4 + $0x50] sm:$0xff]
      %v5612 = vld [vmem:[#allocation4 + $0x58] sm:$0xff]
      %v5613 = vld [vmem:[#allocation4 + $0x60] sm:$0xff]
      %v5614 = vld [vmem:[#allocation4 + $0x68] sm:$0xff]
      %v5615 = vld [vmem:[#allocation4 + $0x70] sm:$0xff]
      %v5616 = vld [vmem:[#allocation4 + $0x78] sm:$0xff]
      %v5617 = vld [vmem:[#allocation4 + $0x80] sm:$0xff]
      %v5618 = vld [vmem:[#allocation4 + $0x88] sm:$0xff]
      %v5619 = vld [vmem:[#allocation4 + $0x90] sm:$0xff]
      %v5620 = vld [vmem:[#allocation4 + $0x98] sm:$0xff]
      %v5621 = vld [vmem:[#allocation4 + $0xa0] sm:$0xff]
      %v5622 = vld [vmem:[#allocation4 + $0xa8] sm:$0xff]
      %v5623 = vld [vmem:[#allocation4 + $0xb0] sm:$0xff]
      %v5624 = vld [vmem:[#allocation4 + $0xb8] sm:$0xff]
      %v5625 = vld [vmem:[#allocation4 + $0xc0] sm:$0xff]
      %v5626 = vld [vmem:[#allocation4 + $0xc8] sm:$0xff]
      %v5627 = vld [vmem:[#allocation4 + $0xd0] sm:$0xff]
      %v5628 = vld [vmem:[#allocation4 + $0xd8] sm:$0xff]
      %v5629 = vld [vmem:[#allocation4 + $0xe0] sm:$0xff]
      %v5630 = vld [vmem:[#allocation4 + $0xe8] sm:$0xff]
      %v5631 = vld [vmem:[#allocation4 + $0xf0] sm:$0xff]
      %v5632 = vld [vmem:[#allocation4 + $0xf8] sm:$0xff]
      %v5633 = vadd.f32 %v5569, %v5601
      %v5634 = vadd.f32 %v5570, %v5602
      %v5635 = vadd.f32 %v5571, %v5603
      %v5636 = vadd.f32 %v5572, %v5604
      %v5637 = vadd.f32 %v5573, %v5605
      %v5638 = vadd.f32 %v5574, %v5606
      %v5639 = vadd.f32 %v5575, %v5607
      %v5640 = vadd.f32 %v5576, %v5608
      %v5641 = vadd.f32 %v5577, %v5609
      %v5642 = vadd.f32 %v5578, %v5610
      %v5643 = vadd.f32 %v5579, %v5611
      %v5644 = vadd.f32 %v5580, %v5612
      %v5645 = vadd.f32 %v5581, %v5613
      %v5646 = vadd.f32 %v5582, %v5614
      %v5647 = vadd.f32 %v5583, %v5615
      %v5648 = vadd.f32 %v5584, %v5616
      %v5649 = vadd.f32 %v5585, %v5617
      %v5650 = vadd.f32 %v5586, %v5618
      %v5651 = vadd.f32 %v5587, %v5619
      %v5652 = vadd.f32 %v5588, %v5620
      %v5653 = vadd.f32 %v5589, %v5621
      %v5654 = vadd.f32 %v5590, %v5622
      %v5655 = vadd.f32 %v5591, %v5623
      %v5656 = vadd.f32 %v5592, %v5624
      %v5657 = vadd.f32 %v5593, %v5625
      %v5658 = vadd.f32 %v5594, %v5626
      %v5659 = vadd.f32 %v5595, %v5627
      %v5660 = vadd.f32 %v5596, %v5628
      %v5661 = vadd.f32 %v5597, %v5629
      %v5662 = vadd.f32 %v5598, %v5630
      %v5663 = vadd.f32 %v5599, %v5631
      %v5664 = vadd.f32 %v5600, %v5632
      %5665 = vst.msk [vmem:[#allocation4] sm:$0xff] %vm480, %v5633
      %5666 = vst.msk [vmem:[#allocation4 + $0x8] sm:$0xff] %vm480, %v5634
      %5667 = vst.msk [vmem:[#allocation4 + $0x10] sm:$0xff] %vm480, %v5635
      %5668 = vst.msk [vmem:[#allocation4 + $0x18] sm:$0xff] %vm480, %v5636
      %5669 = vst.msk [vmem:[#allocation4 + $0x20] sm:$0xff] %vm480, %v5637
      %5670 = vst.msk [vmem:[#allocation4 + $0x28] sm:$0xff] %vm480, %v5638
      %5671 = vst.msk [vmem:[#allocation4 + $0x30] sm:$0xff] %vm480, %v5639
      %5672 = vst.msk [vmem:[#allocation4 + $0x38] sm:$0xff] %vm480, %v5640
      %5673 = vst.msk [vmem:[#allocation4 + $0x40] sm:$0xff] %vm480, %v5641
      %5674 = vst.msk [vmem:[#allocation4 + $0x48] sm:$0xff] %vm480, %v5642
      %5675 = vst.msk [vmem:[#allocation4 + $0x50] sm:$0xff] %vm480, %v5643
      %5676 = vst.msk [vmem:[#allocation4 + $0x58] sm:$0xff] %vm480, %v5644
      %5677 = vst.msk [vmem:[#allocation4 + $0x60] sm:$0xff] %vm480, %v5645
      %5678 = vst.msk [vmem:[#allocation4 + $0x68] sm:$0xff] %vm480, %v5646
      %5679 = vst.msk [vmem:[#allocation4 + $0x70] sm:$0xff] %vm480, %v5647
      %5680 = vst.msk [vmem:[#allocation4 + $0x78] sm:$0xff] %vm480, %v5648
      %5681 = vst.msk [vmem:[#allocation4 + $0x80] sm:$0xff] %vm480, %v5649
      %5682 = vst.msk [vmem:[#allocation4 + $0x88] sm:$0xff] %vm480, %v5650
      %5683 = vst.msk [vmem:[#allocation4 + $0x90] sm:$0xff] %vm480, %v5651
      %5684 = vst.msk [vmem:[#allocation4 + $0x98] sm:$0xff] %vm480, %v5652
      %5685 = vst.msk [vmem:[#allocation4 + $0xa0] sm:$0xff] %vm480, %v5653
      %5686 = vst.msk [vmem:[#allocation4 + $0xa8] sm:$0xff] %vm480, %v5654
      %5687 = vst.msk [vmem:[#allocation4 + $0xb0] sm:$0xff] %vm480, %v5655
      %5688 = vst.msk [vmem:[#allocation4 + $0xb8] sm:$0xff] %vm480, %v5656
      %5689 = vst.msk [vmem:[#allocation4 + $0xc0] sm:$0xff] %vm480, %v5657
      %5690 = vst.msk [vmem:[#allocation4 + $0xc8] sm:$0xff] %vm480, %v5658
      %5691 = vst.msk [vmem:[#allocation4 + $0xd0] sm:$0xff] %vm480, %v5659
      %5692 = vst.msk [vmem:[#allocation4 + $0xd8] sm:$0xff] %vm480, %v5660
      %5693 = vst.msk [vmem:[#allocation4 + $0xe0] sm:$0xff] %vm480, %v5661
      %5694 = vst.msk [vmem:[#allocation4 + $0xe8] sm:$0xff] %vm480, %v5662
      %5695 = vst.msk [vmem:[#allocation4 + $0xf0] sm:$0xff] %vm480, %v5663
      %5696 = vst.msk [vmem:[#allocation4 + $0xf8] sm:$0xff] %vm480, %v5664
      %p5697 = scmp.eq.s32.totalorder %s21, 2
      // Predicated region
      $region45: #{conv_residual_blocks_forward.1} parent=39 // pred_check
        %p5698 = pneg %p5697
      $region46: #{conv_residual_blocks_forward.1} parent=39 // pred_check_branch
        %5700 = sbr.rel (%p5698) target = $region48
      $region47: #{conv_residual_blocks_forward.1} parent=39 // pred_region
        %5701 = vst.msk [vmem:[%s304] sm:$0xff] %vm480, %v5633
        %5702 = vst.msk [vmem:[%s304 + $0x8] sm:$0xff] %vm480, %v5634
        %5703 = vst.msk [vmem:[%s304 + $0x10] sm:$0xff] %vm480, %v5635
        %5704 = vst.msk [vmem:[%s304 + $0x18] sm:$0xff] %vm480, %v5636
        %5705 = vst.msk [vmem:[%s304 + $0x20] sm:$0xff] %vm480, %v5637
        %5706 = vst.msk [vmem:[%s304 + $0x28] sm:$0xff] %vm480, %v5638
        %5707 = vst.msk [vmem:[%s304 + $0x30] sm:$0xff] %vm480, %v5639
        %5708 = vst.msk [vmem:[%s304 + $0x38] sm:$0xff] %vm480, %v5640
        %5709 = vst.msk [vmem:[%s304 + $0x40] sm:$0xff] %vm480, %v5641
        %5710 = vst.msk [vmem:[%s304 + $0x48] sm:$0xff] %vm480, %v5642
        %5711 = vst.msk [vmem:[%s304 + $0x50] sm:$0xff] %vm480, %v5643
        %5712 = vst.msk [vmem:[%s304 + $0x58] sm:$0xff] %vm480, %v5644
        %5713 = vst.msk [vmem:[%s304 + $0x60] sm:$0xff] %vm480, %v5645
        %5714 = vst.msk [vmem:[%s304 + $0x68] sm:$0xff] %vm480, %v5646
        %5715 = vst.msk [vmem:[%s304 + $0x70] sm:$0xff] %vm480, %v5647
        %5716 = vst.msk [vmem:[%s304 + $0x78] sm:$0xff] %vm480, %v5648
        %5717 = vst.msk [vmem:[%s304 + $0x80] sm:$0xff] %vm480, %v5649
        %5718 = vst.msk [vmem:[%s304 + $0x88] sm:$0xff] %vm480, %v5650
        %5719 = vst.msk [vmem:[%s304 + $0x90] sm:$0xff] %vm480, %v5651
        %5720 = vst.msk [vmem:[%s304 + $0x98] sm:$0xff] %vm480, %v5652
        %5721 = vst.msk [vmem:[%s304 + $0xa0] sm:$0xff] %vm480, %v5653
        %5722 = vst.msk [vmem:[%s304 + $0xa8] sm:$0xff] %vm480, %v5654
        %5723 = vst.msk [vmem:[%s304 + $0xb0] sm:$0xff] %vm480, %v5655
        %5724 = vst.msk [vmem:[%s304 + $0xb8] sm:$0xff] %vm480, %v5656
        %5725 = vst.msk [vmem:[%s304 + $0xc0] sm:$0xff] %vm480, %v5657
        %5726 = vst.msk [vmem:[%s304 + $0xc8] sm:$0xff] %vm480, %v5658
        %5727 = vst.msk [vmem:[%s304 + $0xd0] sm:$0xff] %vm480, %v5659
        %5728 = vst.msk [vmem:[%s304 + $0xd8] sm:$0xff] %vm480, %v5660
        %5729 = vst.msk [vmem:[%s304 + $0xe0] sm:$0xff] %vm480, %v5661
        %5730 = vst.msk [vmem:[%s304 + $0xe8] sm:$0xff] %vm480, %v5662
        %5731 = vst.msk [vmem:[%s304 + $0xf0] sm:$0xff] %vm480, %v5663
        %5732 = vst.msk [vmem:[%s304 + $0xf8] sm:$0xff] %vm480, %v5664
      $region48: #{conv_residual_blocks_forward.1} parent=39 // pred_fallthru
        _
      %p5733 = scmp.lt.s32.totalorder %s20, 1
      %s5734 = scalar_select %p5733, %s20, 1
      %s5735 = smul.addr %s5734, 32
      %s5736 = smul.addr %s5735, 8
      %s5737 = scalar_lea.vmem %s5, %s5736
      // Predicated region
      $region49: #{conv_residual_blocks_forward.1} parent=39 // pred_check
        %p5738 = pneg %p176
      $region50: #{conv_residual_blocks_forward.1} parent=39 // pred_check_branch
        %5740 = sbr.rel (%p5738) target = $region52
      $region51: #{conv_residual_blocks_forward.1} parent=39 // pred_region
        _
      $region52: #{conv_residual_blocks_forward.1} parent=39 // pred_fallthru
        _
    $region40: #{conv_residual_blocks_forward.1} parent=5 // pred_fallthru
      _
    %p5741 = scmp.le.s32.totalorder 2, %s11
    // Predicated region
    $region53: #{conv_residual_blocks_forward.1} parent=5 // pred_check
      %p5742 = pneg %p5741
    $region54: #{conv_residual_blocks_forward.1} parent=5 // pred_check_branch
      %5744 = sbr.rel (%p5742) target = $region56
    $region55: #{conv_residual_blocks_forward.1} parent=5 // pred_region
      %s5745 = ssub.s32 %s11, 2
      // Predicated region
      $region57: #{conv_residual_blocks_forward.1} parent=55 // pred_check
        %p5746 = pneg %p182
      $region58: #{conv_residual_blocks_forward.1} parent=55 // pred_check_branch
        %5748 = sbr.rel (%p5746) target = $region60
      $region59: #{conv_residual_blocks_forward.1} parent=55 // pred_region
        %p5749 = scmp.lt.s32.totalorder %s22, 1
        %s5750 = scalar_select %p5749, %s22, 1
        %s5751 = smul.addr %s5750, 32
        %s5752 = smul.addr %s5751, 8
        %s5753 = scalar_lea.vmem %s5, %s5752
      $region60: #{conv_residual_blocks_forward.1} parent=55 // pred_fallthru
        _
    $region56: #{conv_residual_blocks_forward.1} parent=5 // pred_fallthru
      _
  $region6: #{conv_residual_blocks_forward.1} parent=0 // loop_footer
    %s15 = sadd.s32 1, %s11
  $region7: #{conv_residual_blocks_forward.1} parent=0 // loop_footer_branch
    %10 = sbr.rel target = $region3
  $region8: #{conv_residual_blocks_forward.1} parent=0 // loop_exit
    _

</llo_original>
